<compile_context>
chip_gen: v7x
topology: tpu7x:2x2x1
jax: 0.10.0
libtpu: 0.0.40
codegen_flags: <defaults>
</compile_context>

<pallas_src>
import jax
import jax.numpy as jnp
from jax import lax
from jax.experimental import pallas as pl
from jax.experimental.pallas import tpu as pltpu


# ---------------------------------------------------------------------------
# Pallas kernel: full Discriminator forward (both GRUs + linear head).
# ---------------------------------------------------------------------------
def _disc_kernel(ques_ref, answ_ref, h0_ref,
                 qWi_ref, qWh_ref, qb_ref,
                 aWit_ref, aWib_ref, aWh_ref, ab_ref,
                 l1_w_ref, l1_b_ref, l2_w_ref, l2_b_ref,
                 out_ref,
                 gq_ref, ga_ref):
    """Shapes (Bp = sublane-padded batch, gates ordered r, z, n):
      ques_ref : (Tq*Bp, V)   time-major question, rows flattened as (t, b)
      answ_ref : (Ta*Bp, V)
      h0_ref   : (Bp, V)
      qWi/qWh/aWit/aWib/aWh : (3, V, V) per-gate weights (pre-transposed)
      qb/ab    : (4, 1, V)   [b_ir+b_hr, b_iz+b_hz, b_in, b_hn]
      l1_w     : (V, V//2), l1_b : (1, V//2)
      l2_w     : (1, V//2), l2_b : (1, 1)
      out_ref  : (Bp, 1)
      gq_ref   : (3, Tq*Bp, V) scratch - precomputed input-gate projections
      ga_ref   : (3, Ta*Bp, V) scratch
    """
    Bp, V = h0_ref.shape
    Tq = ques_ref.shape[0] // Bp
    Ta = answ_ref.shape[0] // Bp
    f32 = jnp.float32

    # ---- hoisted input projections: one big MXU matmul per gate, biases folded
    # once (off the serial critical path).
    ques = ques_ref[...]
    gq_ref[0] = jnp.dot(ques, qWi_ref[0], preferred_element_type=f32) + qb_ref[0]
    gq_ref[1] = jnp.dot(ques, qWi_ref[1], preferred_element_type=f32) + qb_ref[1]
    gq_ref[2] = jnp.dot(ques, qWi_ref[2], preferred_element_type=f32) + qb_ref[2]

    answ = answ_ref[...]
    ga_ref[0] = jnp.dot(answ, aWit_ref[0], preferred_element_type=f32)
    ga_ref[1] = jnp.dot(answ, aWit_ref[1], preferred_element_type=f32)
    ga_ref[2] = jnp.dot(answ, aWit_ref[2], preferred_element_type=f32)

    # ---- q_gru serial recurrence (only h @ W_hh per step), fully unrolled.
    qWh_r = qWh_ref[0]
    qWh_z = qWh_ref[1]
    qWh_n = qWh_ref[2]
    qb_hn = jnp.broadcast_to(qb_ref[3], (Bp, V))   # hoisted (no per-iter bcast)

    h = h0_ref[...]
    for t in range(Tq):
        s = t * Bp                                  # multiple of 8: tile-aligned
        gi_r = gq_ref[0, s:s + Bp, :]
        gi_z = gq_ref[1, s:s + Bp, :]
        gi_n = gq_ref[2, s:s + Bp, :]
        gh_r = jnp.dot(h, qWh_r, preferred_element_type=f32)
        gh_z = jnp.dot(h, qWh_z, preferred_element_type=f32)
        gh_n = jnp.dot(h, qWh_n, preferred_element_type=f32)
        r = jax.nn.sigmoid(gi_r + gh_r)
        z = jax.nn.sigmoid(gi_z + gh_z)
        n = jnp.tanh(gi_n + r * (gh_n + qb_hn))
        h = (1.0 - z) * n + z * h
    hq = h                                          # q_gru output[-1]

    # ---- a_gru over cat([answ_t, hq]): the hq part of the input projection is
    # time-invariant -> computed once here (concat == sum of partial matmuls).
    c_r = jnp.dot(hq, aWib_ref[0], preferred_element_type=f32) + ab_ref[0]
    c_z = jnp.dot(hq, aWib_ref[1], preferred_element_type=f32) + ab_ref[1]
    c_n = jnp.dot(hq, aWib_ref[2], preferred_element_type=f32) + ab_ref[2]

    aWh_r = aWh_ref[0]
    aWh_z = aWh_ref[1]
    aWh_n = aWh_ref[2]
    ab_hn = jnp.broadcast_to(ab_ref[3], (Bp, V))

    h = h0_ref[...]
    for t in range(Ta):
        s = t * Bp
        gi_r = ga_ref[0, s:s + Bp, :] + c_r
        gi_z = ga_ref[1, s:s + Bp, :] + c_z
        gi_n = ga_ref[2, s:s + Bp, :] + c_n
        gh_r = jnp.dot(h, aWh_r, preferred_element_type=f32)
        gh_z = jnp.dot(h, aWh_z, preferred_element_type=f32)
        gh_n = jnp.dot(h, aWh_n, preferred_element_type=f32)
        r = jax.nn.sigmoid(gi_r + gh_r)
        z = jax.nn.sigmoid(gi_z + gh_z)
        n = jnp.tanh(gi_n + r * (gh_n + ab_hn))
        h = (1.0 - z) * n + z * h
    ha = h                                          # a_gru output[-1]

    # ---- linear head: Linear(V, V//2) on the MXU, then (V//2 -> 1) as a VPU
    # multiply + lane reduction (no 1-lane-wide MXU matmul).
    y = jnp.dot(ha, l1_w_ref[...], preferred_element_type=f32) + l1_b_ref[...]
    out_ref[...] = jnp.sum(y * l2_w_ref[...], axis=-1, keepdims=True) + l2_b_ref[...]


# ---------------------------------------------------------------------------
# Wrapper: layout plumbing (per-gate splits, batch padding) happens here.
# ---------------------------------------------------------------------------
@jax.jit
def discriminator_forward(ques, answ, hidden, params):
    """ques: (Tq, B, V), answ: (Ta, B, V), hidden: (1, B, V) -> (B, 1)."""
    Tq, B, V = ques.shape
    Ta = answ.shape[0]
    H2 = V // 2
    Bp = ((B + 7) // 8) * 8                 # pad batch to a full sublane tile

    def pad_b(x):                            # (T, B, V) -> (T, Bp, V)
        return jnp.pad(x, ((0, 0), (0, Bp - B), (0, 0)))

    ques2d = pad_b(ques).reshape(Tq * Bp, V)
    answ2d = pad_b(answ).reshape(Ta * Bp, V)
    h0 = jnp.pad(hidden[0], ((0, Bp - B), (0, 0)))

    def split_gates(w):                      # (in, 3V) -> (3, in, V), gates r,z,n
        return jnp.stack([w[:, :V], w[:, V:2 * V], w[:, 2 * V:]], axis=0)

    def gate_biases(bih, bhh):               # -> (4,1,V): [r ih+hh, z ih+hh, n ih, n hh]
        return jnp.stack([bih[:, :V] + bhh[:, :V],
                          bih[:, V:2 * V] + bhh[:, V:2 * V],
                          bih[:, 2 * V:],
                          bhh[:, 2 * V:]], axis=0)

    qWi = split_gates(params["q_wih_t"])              # (3, V, V)
    qWh = split_gates(params["q_whh_t"])              # (3, V, V)
    qb = gate_biases(params["q_bih"], params["q_bhh"])

    aWi = split_gates(params["a_wih_t"])              # (3, 2V, V)
    aWit = aWi[:, :V, :]                              # acts on answ timesteps
    aWib = aWi[:, V:, :]                              # acts on the question vector
    aWh = split_gates(params["a_whh_t"])
    ab = gate_biases(params["a_bih"], params["a_bhh"])

    l2_w_row = params["l2_w_t"].reshape(1, H2)

    inputs = (ques2d, answ2d, h0,
              qWi, qWh, qb,
              aWit, aWib, aWh, ab,
              params["l1_w_t"], params["l1_b"], l2_w_row, params["l2_b"])

    vmem = pl.BlockSpec(memory_space=pltpu.MemorySpace.VMEM)
    out = pl.pallas_call(
        _disc_kernel,
        out_shape=jax.ShapeDtypeStruct((Bp, 1), jnp.float32),
        in_specs=[vmem] * len(inputs),
        out_specs=vmem,
        scratch_shapes=[pltpu.VMEM((3, Tq * Bp, V), jnp.float32),
                        pltpu.VMEM((3, Ta * Bp, V), jnp.float32)],
    )(*inputs)
    return out[:B]


# ---------------------------------------------------------------------------
# Deterministic parameter init (PyTorch-style uniform(-1/sqrt(H), 1/sqrt(H)))
# ---------------------------------------------------------------------------
def init_params(key, vec_size):
    V = vec_size
    H2 = V // 2
    bound = 1.0 / jnp.sqrt(jnp.float32(V))
    bound2 = 1.0 / jnp.sqrt(jnp.float32(H2))
    ks = jax.random.split(key, 12)

    def u(k, shape, b):
        return jax.random.uniform(k, shape, jnp.float32, minval=-b, maxval=b)

    return {
        # q_gru: input V -> hidden V ; weights stored transposed (in_dim, 3V)
        "q_wih_t": u(ks[0], (V, 3 * V), bound),
        "q_whh_t": u(ks[1], (V, 3 * V), bound),
        "q_bih":   u(ks[2], (1, 3 * V), bound),
        "q_bhh":   u(ks[3], (1, 3 * V), bound),
        # a_gru: input 2V -> hidden V
        "a_wih_t": u(ks[4], (2 * V, 3 * V), bound),
        "a_whh_t": u(ks[5], (V, 3 * V), bound),
        "a_bih":   u(ks[6], (1, 3 * V), bound),
        "a_bhh":   u(ks[7], (1, 3 * V), bound),
        # linear head
        "l1_w_t":  u(ks[8], (V, H2), bound),
        "l1_b":    u(ks[9], (1, H2), bound),
        "l2_w_t":  u(ks[10], (H2, 1), bound2),
        "l2_b":    u(ks[11], (1, 1), bound2),
    }


# ---------------------------------------------------------------------------
# Pure-JAX reference (for correctness check)
# ---------------------------------------------------------------------------
def ref_forward(ques, answ, hidden, p):
    h0 = hidden[0]
    V = h0.shape[1]

    def run_gru(xs, h, wih_t, whh_t, bih, bhh):
        def step(h, x):
            gi = x @ wih_t + bih
            gh = h @ whh_t + bhh
            r = jax.nn.sigmoid(gi[:, :V] + gh[:, :V])
            z = jax.nn.sigmoid(gi[:, V:2 * V] + gh[:, V:2 * V])
            n = jnp.tanh(gi[:, 2 * V:] + r * gh[:, 2 * V:])
            h_new = (1.0 - z) * n + z * h
            return h_new, h_new
        h_last, _ = lax.scan(step, h, xs)
        return h_last

    hq = run_gru(ques, h0, p["q_wih_t"], p["q_whh_t"], p["q_bih"], p["q_bhh"])
    ques_rep = jnp.broadcast_to(hq[None], (answ.shape[0],) + hq.shape)
    cat = jnp.concatenate([answ, ques_rep], axis=2)
    ha = run_gru(cat, h0, p["a_wih_t"], p["a_whh_t"], p["a_bih"], p["a_bhh"])
    y = ha @ p["l1_w_t"] + p["l1_b"]
    y = y @ p["l2_w_t"] + p["l2_b"]
    return y


if __name__ == "__main__":
    VEC_SIZE = 32
    BATCH = 2
    SEQ_Q = 8
    SEQ_A = 8

    key = jax.random.PRNGKey(0)
    k_p, k_q, k_a, k_h = jax.random.split(key, 4)

    params = init_params(k_p, VEC_SIZE)
    ques = jax.random.normal(k_q, (SEQ_Q, BATCH, VEC_SIZE), jnp.float32)
    answ = jax.random.normal(k_a, (SEQ_A, BATCH, VEC_SIZE), jnp.float32)
    hidden = jax.random.normal(k_h, (1, BATCH, VEC_SIZE), jnp.float32)

    out = discriminator_forward(ques, answ, hidden, params)
    out = jax.block_until_ready(out)

    ref = jax.block_until_ready(ref_forward(ques, answ, hidden, params))
    assert out.shape == (BATCH, 1)
    assert jnp.allclose(out, ref, atol=1e-4, rtol=1e-4), (out, ref)

    print("KERNEL_OK")
</pallas_src>

<mosaic_0001>
module attributes {stable_mosaic.version = 11 : i64} {
  func.func @_disc_kernel(%arg0: memref<64x32xf32, #tpu.memory_space<vmem>>, %arg1: memref<64x32xf32, #tpu.memory_space<vmem>>, %arg2: memref<8x32xf32, #tpu.memory_space<vmem>>, %arg3: memref<3x32x32xf32, #tpu.memory_space<vmem>>, %arg4: memref<3x32x32xf32, #tpu.memory_space<vmem>>, %arg5: memref<4x1x32xf32, #tpu.memory_space<vmem>>, %arg6: memref<3x32x32xf32, #tpu.memory_space<vmem>>, %arg7: memref<3x32x32xf32, #tpu.memory_space<vmem>>, %arg8: memref<3x32x32xf32, #tpu.memory_space<vmem>>, %arg9: memref<4x1x32xf32, #tpu.memory_space<vmem>>, %arg10: memref<32x16xf32, #tpu.memory_space<vmem>>, %arg11: memref<1x16xf32, #tpu.memory_space<vmem>>, %arg12: memref<1x16xf32, #tpu.memory_space<vmem>>, %arg13: memref<1x1xf32, #tpu.memory_space<vmem>>, %arg14: memref<8x1xf32, #tpu.memory_space<vmem>>, %arg15: memref<3x64x32xf32, #tpu.memory_space<vmem>>, %arg16: memref<3x64x32xf32, #tpu.memory_space<vmem>>) attributes {dimension_semantics = [], scalar_prefetch = 0 : i64, scratch_operands = 2 : i64, tpu.core_type = #tpu.core_type<tc>} {
    %c0 = arith.constant 0 : index
    %c0_0 = arith.constant 0 : index
    %0 = vector.load %arg0[%c0, %c0_0] : memref<64x32xf32, #tpu.memory_space<vmem>>, vector<64x32xf32>
    %c0_1 = arith.constant 0 : index
    %c0_2 = arith.constant 0 : index
    %c0_3 = arith.constant 0 : index
    %1 = vector.load %arg3[%c0_1, %c0_2, %c0_3] : memref<3x32x32xf32, #tpu.memory_space<vmem>>, vector<1x32x32xf32>
    %2 = vector.shape_cast %1 : vector<1x32x32xf32> to vector<32x32xf32>
    %cst = arith.constant dense<0.000000e+00> : vector<64x32xf32>
    %3 = tpu.matmul %0, %2, %cst {dimension_numbers = #tpu.dot_dimension_numbers<[1], [0], [0], [1], [0, 0, 1, 1], [], []>} : vector<64x32xf32>, vector<32x32xf32>, vector<64x32xf32> -> vector<64x32xf32>
    %c0_4 = arith.constant 0 : index
    %c0_5 = arith.constant 0 : index
    %c0_6 = arith.constant 0 : index
    %4 = vector.load %arg5[%c0_4, %c0_5, %c0_6] : memref<4x1x32xf32, #tpu.memory_space<vmem>>, vector<1x1x32xf32>
    %5 = vector.shape_cast %4 : vector<1x1x32xf32> to vector<1x32xf32>
    %6 = vector.broadcast %5 : vector<1x32xf32> to vector<64x32xf32>
    %7 = arith.addf %3, %6 : vector<64x32xf32>
    %c0_7 = arith.constant 0 : index
    %c0_8 = arith.constant 0 : index
    %c0_9 = arith.constant 0 : index
    %8 = vector.load %arg15[%c0_7, %c0_8, %c0_9] : memref<3x64x32xf32, #tpu.memory_space<vmem>>, vector<1x64x32xf32>
    %9 = vector.shape_cast %8 : vector<1x64x32xf32> to vector<64x32xf32>
    %10 = vector.shape_cast %7 : vector<64x32xf32> to vector<1x64x32xf32>
    tpu.vector_store %arg15[%c0_7, %c0_8, %c0_9], %10 {strides = array<i32>} : memref<3x64x32xf32, #tpu.memory_space<vmem>>, vector<1x64x32xf32>,
    %c1 = arith.constant 1 : index
    %c0_10 = arith.constant 0 : index
    %c0_11 = arith.constant 0 : index
    %11 = vector.load %arg3[%c1, %c0_10, %c0_11] : memref<3x32x32xf32, #tpu.memory_space<vmem>>, vector<1x32x32xf32>
    %12 = vector.shape_cast %11 : vector<1x32x32xf32> to vector<32x32xf32>
    %cst_12 = arith.constant dense<0.000000e+00> : vector<64x32xf32>
    %13 = tpu.matmul %0, %12, %cst_12 {dimension_numbers = #tpu.dot_dimension_numbers<[1], [0], [0], [1], [0, 0, 1, 1], [], []>} : vector<64x32xf32>, vector<32x32xf32>, vector<64x32xf32> -> vector<64x32xf32>
    %c1_13 = arith.constant 1 : index
    %c0_14 = arith.constant 0 : index
    %c0_15 = arith.constant 0 : index
    %14 = vector.load %arg5[%c1_13, %c0_14, %c0_15] : memref<4x1x32xf32, #tpu.memory_space<vmem>>, vector<1x1x32xf32>
    %15 = vector.shape_cast %14 : vector<1x1x32xf32> to vector<1x32xf32>
    %16 = vector.broadcast %15 : vector<1x32xf32> to vector<64x32xf32>
    %17 = arith.addf %13, %16 : vector<64x32xf32>
    %c1_16 = arith.constant 1 : index
    %c0_17 = arith.constant 0 : index
    %c0_18 = arith.constant 0 : index
    %18 = vector.load %arg15[%c1_16, %c0_17, %c0_18] : memref<3x64x32xf32, #tpu.memory_space<vmem>>, vector<1x64x32xf32>
    %19 = vector.shape_cast %18 : vector<1x64x32xf32> to vector<64x32xf32>
    %20 = vector.shape_cast %17 : vector<64x32xf32> to vector<1x64x32xf32>
    tpu.vector_store %arg15[%c1_16, %c0_17, %c0_18], %20 {strides = array<i32>} : memref<3x64x32xf32, #tpu.memory_space<vmem>>, vector<1x64x32xf32>,
    %c2 = arith.constant 2 : index
    %c0_19 = arith.constant 0 : index
    %c0_20 = arith.constant 0 : index
    %21 = vector.load %arg3[%c2, %c0_19, %c0_20] : memref<3x32x32xf32, #tpu.memory_space<vmem>>, vector<1x32x32xf32>
    %22 = vector.shape_cast %21 : vector<1x32x32xf32> to vector<32x32xf32>
    %cst_21 = arith.constant dense<0.000000e+00> : vector<64x32xf32>
    %23 = tpu.matmul %0, %22, %cst_21 {dimension_numbers = #tpu.dot_dimension_numbers<[1], [0], [0], [1], [0, 0, 1, 1], [], []>} : vector<64x32xf32>, vector<32x32xf32>, vector<64x32xf32> -> vector<64x32xf32>
    %c2_22 = arith.constant 2 : index
    %c0_23 = arith.constant 0 : index
    %c0_24 = arith.constant 0 : index
    %24 = vector.load %arg5[%c2_22, %c0_23, %c0_24] : memref<4x1x32xf32, #tpu.memory_space<vmem>>, vector<1x1x32xf32>
    %25 = vector.shape_cast %24 : vector<1x1x32xf32> to vector<1x32xf32>
    %26 = vector.broadcast %25 : vector<1x32xf32> to vector<64x32xf32>
    %27 = arith.addf %23, %26 : vector<64x32xf32>
    %c2_25 = arith.constant 2 : index
    %c0_26 = arith.constant 0 : index
    %c0_27 = arith.constant 0 : index
    %28 = vector.load %arg15[%c2_25, %c0_26, %c0_27] : memref<3x64x32xf32, #tpu.memory_space<vmem>>, vector<1x64x32xf32>
    %29 = vector.shape_cast %28 : vector<1x64x32xf32> to vector<64x32xf32>
    %30 = vector.shape_cast %27 : vector<64x32xf32> to vector<1x64x32xf32>
    tpu.vector_store %arg15[%c2_25, %c0_26, %c0_27], %30 {strides = array<i32>} : memref<3x64x32xf32, #tpu.memory_space<vmem>>, vector<1x64x32xf32>,
    %c0_28 = arith.constant 0 : index
    %c0_29 = arith.constant 0 : index
    %31 = vector.load %arg1[%c0_28, %c0_29] : memref<64x32xf32, #tpu.memory_space<vmem>>, vector<64x32xf32>
    %c0_30 = arith.constant 0 : index
    %c0_31 = arith.constant 0 : index
    %c0_32 = arith.constant 0 : index
    %32 = vector.load %arg6[%c0_30, %c0_31, %c0_32] : memref<3x32x32xf32, #tpu.memory_space<vmem>>, vector<1x32x32xf32>
    %33 = vector.shape_cast %32 : vector<1x32x32xf32> to vector<32x32xf32>
    %cst_33 = arith.constant dense<0.000000e+00> : vector<64x32xf32>
    %34 = tpu.matmul %31, %33, %cst_33 {dimension_numbers = #tpu.dot_dimension_numbers<[1], [0], [0], [1], [0, 0, 1, 1], [], []>} : vector<64x32xf32>, vector<32x32xf32>, vector<64x32xf32> -> vector<64x32xf32>
    %c0_34 = arith.constant 0 : index
    %c0_35 = arith.constant 0 : index
    %c0_36 = arith.constant 0 : index
    %35 = vector.load %arg16[%c0_34, %c0_35, %c0_36] : memref<3x64x32xf32, #tpu.memory_space<vmem>>, vector<1x64x32xf32>
    %36 = vector.shape_cast %35 : vector<1x64x32xf32> to vector<64x32xf32>
    %37 = vector.shape_cast %34 : vector<64x32xf32> to vector<1x64x32xf32>
    tpu.vector_store %arg16[%c0_34, %c0_35, %c0_36], %37 {strides = array<i32>} : memref<3x64x32xf32, #tpu.memory_space<vmem>>, vector<1x64x32xf32>,
    %c1_37 = arith.constant 1 : index
    %c0_38 = arith.constant 0 : index
    %c0_39 = arith.constant 0 : index
    %38 = vector.load %arg6[%c1_37, %c0_38, %c0_39] : memref<3x32x32xf32, #tpu.memory_space<vmem>>, vector<1x32x32xf32>
    %39 = vector.shape_cast %38 : vector<1x32x32xf32> to vector<32x32xf32>
    %cst_40 = arith.constant dense<0.000000e+00> : vector<64x32xf32>
    %40 = tpu.matmul %31, %39, %cst_40 {dimension_numbers = #tpu.dot_dimension_numbers<[1], [0], [0], [1], [0, 0, 1, 1], [], []>} : vector<64x32xf32>, vector<32x32xf32>, vector<64x32xf32> -> vector<64x32xf32>
    %c1_41 = arith.constant 1 : index
    %c0_42 = arith.constant 0 : index
    %c0_43 = arith.constant 0 : index
    %41 = vector.load %arg16[%c1_41, %c0_42, %c0_43] : memref<3x64x32xf32, #tpu.memory_space<vmem>>, vector<1x64x32xf32>
    %42 = vector.shape_cast %41 : vector<1x64x32xf32> to vector<64x32xf32>
    %43 = vector.shape_cast %40 : vector<64x32xf32> to vector<1x64x32xf32>
    tpu.vector_store %arg16[%c1_41, %c0_42, %c0_43], %43 {strides = array<i32>} : memref<3x64x32xf32, #tpu.memory_space<vmem>>, vector<1x64x32xf32>,
    %c2_44 = arith.constant 2 : index
    %c0_45 = arith.constant 0 : index
    %c0_46 = arith.constant 0 : index
    %44 = vector.load %arg6[%c2_44, %c0_45, %c0_46] : memref<3x32x32xf32, #tpu.memory_space<vmem>>, vector<1x32x32xf32>
    %45 = vector.shape_cast %44 : vector<1x32x32xf32> to vector<32x32xf32>
    %cst_47 = arith.constant dense<0.000000e+00> : vector<64x32xf32>
    %46 = tpu.matmul %31, %45, %cst_47 {dimension_numbers = #tpu.dot_dimension_numbers<[1], [0], [0], [1], [0, 0, 1, 1], [], []>} : vector<64x32xf32>, vector<32x32xf32>, vector<64x32xf32> -> vector<64x32xf32>
    %c2_48 = arith.constant 2 : index
    %c0_49 = arith.constant 0 : index
    %c0_50 = arith.constant 0 : index
    %47 = vector.load %arg16[%c2_48, %c0_49, %c0_50] : memref<3x64x32xf32, #tpu.memory_space<vmem>>, vector<1x64x32xf32>
    %48 = vector.shape_cast %47 : vector<1x64x32xf32> to vector<64x32xf32>
    %49 = vector.shape_cast %46 : vector<64x32xf32> to vector<1x64x32xf32>
    tpu.vector_store %arg16[%c2_48, %c0_49, %c0_50], %49 {strides = array<i32>} : memref<3x64x32xf32, #tpu.memory_space<vmem>>, vector<1x64x32xf32>,
    %c0_51 = arith.constant 0 : index
    %c0_52 = arith.constant 0 : index
    %c0_53 = arith.constant 0 : index
    %50 = vector.load %arg4[%c0_51, %c0_52, %c0_53] : memref<3x32x32xf32, #tpu.memory_space<vmem>>, vector<1x32x32xf32>
    %51 = vector.shape_cast %50 : vector<1x32x32xf32> to vector<32x32xf32>
    %c1_54 = arith.constant 1 : index
    %c0_55 = arith.constant 0 : index
    %c0_56 = arith.constant 0 : index
    %52 = vector.load %arg4[%c1_54, %c0_55, %c0_56] : memref<3x32x32xf32, #tpu.memory_space<vmem>>, vector<1x32x32xf32>
    %53 = vector.shape_cast %52 : vector<1x32x32xf32> to vector<32x32xf32>
    %c2_57 = arith.constant 2 : index
    %c0_58 = arith.constant 0 : index
    %c0_59 = arith.constant 0 : index
    %54 = vector.load %arg4[%c2_57, %c0_58, %c0_59] : memref<3x32x32xf32, #tpu.memory_space<vmem>>, vector<1x32x32xf32>
    %55 = vector.shape_cast %54 : vector<1x32x32xf32> to vector<32x32xf32>
    %c3 = arith.constant 3 : index
    %c0_60 = arith.constant 0 : index
    %c0_61 = arith.constant 0 : index
    %56 = vector.load %arg5[%c3, %c0_60, %c0_61] : memref<4x1x32xf32, #tpu.memory_space<vmem>>, vector<1x1x32xf32>
    %57 = vector.shape_cast %56 : vector<1x1x32xf32> to vector<1x32xf32>
    %58 = vector.shape_cast %57 : vector<1x32xf32> to vector<1x32xf32>
    %59 = vector.broadcast %58 : vector<1x32xf32> to vector<8x32xf32>
    %c0_62 = arith.constant 0 : index
    %c0_63 = arith.constant 0 : index
    %60 = vector.load %arg2[%c0_62, %c0_63] : memref<8x32xf32, #tpu.memory_space<vmem>>, vector<8x32xf32>
    %c0_64 = arith.constant 0 : index
    %c0_65 = arith.constant 0 : index
    %c0_66 = arith.constant 0 : index
    %61 = vector.load %arg15[%c0_64, %c0_65, %c0_66] : memref<3x64x32xf32, #tpu.memory_space<vmem>>, vector<1x8x32xf32>
    %62 = vector.shape_cast %61 : vector<1x8x32xf32> to vector<8x32xf32>
    %c1_67 = arith.constant 1 : index
    %c0_68 = arith.constant 0 : index
    %c0_69 = arith.constant 0 : index
    %63 = vector.load %arg15[%c1_67, %c0_68, %c0_69] : memref<3x64x32xf32, #tpu.memory_space<vmem>>, vector<1x8x32xf32>
    %64 = vector.shape_cast %63 : vector<1x8x32xf32> to vector<8x32xf32>
    %c2_70 = arith.constant 2 : index
    %c0_71 = arith.constant 0 : index
    %c0_72 = arith.constant 0 : index
    %65 = vector.load %arg15[%c2_70, %c0_71, %c0_72] : memref<3x64x32xf32, #tpu.memory_space<vmem>>, vector<1x8x32xf32>
    %66 = vector.shape_cast %65 : vector<1x8x32xf32> to vector<8x32xf32>
    %cst_73 = arith.constant dense<0.000000e+00> : vector<8x32xf32>
    %67 = tpu.matmul %60, %51, %cst_73 {dimension_numbers = #tpu.dot_dimension_numbers<[1], [0], [0], [1], [0, 0, 1, 1], [], []>} : vector<8x32xf32>, vector<32x32xf32>, vector<8x32xf32> -> vector<8x32xf32>
    %cst_74 = arith.constant dense<0.000000e+00> : vector<8x32xf32>
    %68 = tpu.matmul %60, %53, %cst_74 {dimension_numbers = #tpu.dot_dimension_numbers<[1], [0], [0], [1], [0, 0, 1, 1], [], []>} : vector<8x32xf32>, vector<32x32xf32>, vector<8x32xf32> -> vector<8x32xf32>
    %cst_75 = arith.constant dense<0.000000e+00> : vector<8x32xf32>
    %69 = tpu.matmul %60, %55, %cst_75 {dimension_numbers = #tpu.dot_dimension_numbers<[1], [0], [0], [1], [0, 0, 1, 1], [], []>} : vector<8x32xf32>, vector<32x32xf32>, vector<8x32xf32> -> vector<8x32xf32>
    %70 = arith.addf %62, %67 : vector<8x32xf32>
    %71 = arith.negf %70 : vector<8x32xf32>
    %72 = math.exp %71 : vector<8x32xf32>
    %cst_76 = arith.constant 1.000000e+00 : f32
    %73 = vector.broadcast %cst_76 : f32 to vector<8x32xf32>
    %74 = arith.addf %73, %72 : vector<8x32xf32>
    %75 = arith.divf %73, %74 : vector<8x32xf32>
    %76 = arith.addf %64, %68 : vector<8x32xf32>
    %77 = arith.negf %76 : vector<8x32xf32>
    %78 = math.exp %77 : vector<8x32xf32>
    %cst_77 = arith.constant 1.000000e+00 : f32
    %79 = vector.broadcast %cst_77 : f32 to vector<8x32xf32>
    %80 = arith.addf %79, %78 : vector<8x32xf32>
    %81 = arith.divf %79, %80 : vector<8x32xf32>
    %82 = arith.addf %69, %59 : vector<8x32xf32>
    %83 = arith.mulf %75, %82 : vector<8x32xf32>
    %84 = arith.addf %66, %83 : vector<8x32xf32>
    %85 = math.tanh %84 : vector<8x32xf32>
    %cst_78 = arith.constant 1.000000e+00 : f32
    %86 = vector.broadcast %cst_78 : f32 to vector<8x32xf32>
    %87 = arith.subf %86, %81 : vector<8x32xf32>
    %88 = arith.mulf %87, %85 : vector<8x32xf32>
    %89 = arith.mulf %81, %60 : vector<8x32xf32>
    %90 = arith.addf %88, %89 : vector<8x32xf32>
    %c0_79 = arith.constant 0 : index
    %c8 = arith.constant 8 : index
    %c0_80 = arith.constant 0 : index
    %91 = vector.load %arg15[%c0_79, %c8, %c0_80] : memref<3x64x32xf32, #tpu.memory_space<vmem>>, vector<1x8x32xf32>
    %92 = vector.shape_cast %91 : vector<1x8x32xf32> to vector<8x32xf32>
    %c1_81 = arith.constant 1 : index
    %c8_82 = arith.constant 8 : index
    %c0_83 = arith.constant 0 : index
    %93 = vector.load %arg15[%c1_81, %c8_82, %c0_83] : memref<3x64x32xf32, #tpu.memory_space<vmem>>, vector<1x8x32xf32>
    %94 = vector.shape_cast %93 : vector<1x8x32xf32> to vector<8x32xf32>
    %c2_84 = arith.constant 2 : index
    %c8_85 = arith.constant 8 : index
    %c0_86 = arith.constant 0 : index
    %95 = vector.load %arg15[%c2_84, %c8_85, %c0_86] : memref<3x64x32xf32, #tpu.memory_space<vmem>>, vector<1x8x32xf32>
    %96 = vector.shape_cast %95 : vector<1x8x32xf32> to vector<8x32xf32>
    %cst_87 = arith.constant dense<0.000000e+00> : vector<8x32xf32>
    %97 = tpu.matmul %90, %51, %cst_87 {dimension_numbers = #tpu.dot_dimension_numbers<[1], [0], [0], [1], [0, 0, 1, 1], [], []>} : vector<8x32xf32>, vector<32x32xf32>, vector<8x32xf32> -> vector<8x32xf32>
    %cst_88 = arith.constant dense<0.000000e+00> : vector<8x32xf32>
    %98 = tpu.matmul %90, %53, %cst_88 {dimension_numbers = #tpu.dot_dimension_numbers<[1], [0], [0], [1], [0, 0, 1, 1], [], []>} : vector<8x32xf32>, vector<32x32xf32>, vector<8x32xf32> -> vector<8x32xf32>
    %cst_89 = arith.constant dense<0.000000e+00> : vector<8x32xf32>
    %99 = tpu.matmul %90, %55, %cst_89 {dimension_numbers = #tpu.dot_dimension_numbers<[1], [0], [0], [1], [0, 0, 1, 1], [], []>} : vector<8x32xf32>, vector<32x32xf32>, vector<8x32xf32> -> vector<8x32xf32>
    %100 = arith.addf %92, %97 : vector<8x32xf32>
    %101 = arith.negf %100 : vector<8x32xf32>
    %102 = math.exp %101 : vector<8x32xf32>
    %cst_90 = arith.constant 1.000000e+00 : f32
    %103 = vector.broadcast %cst_90 : f32 to vector<8x32xf32>
    %104 = arith.addf %103, %102 : vector<8x32xf32>
    %105 = arith.divf %103, %104 : vector<8x32xf32>
    %106 = arith.addf %94, %98 : vector<8x32xf32>
    %107 = arith.negf %106 : vector<8x32xf32>
    %108 = math.exp %107 : vector<8x32xf32>
    %cst_91 = arith.constant 1.000000e+00 : f32
    %109 = vector.broadcast %cst_91 : f32 to vector<8x32xf32>
    %110 = arith.addf %109, %108 : vector<8x32xf32>
    %111 = arith.divf %109, %110 : vector<8x32xf32>
    %112 = arith.addf %99, %59 : vector<8x32xf32>
    %113 = arith.mulf %105, %112 : vector<8x32xf32>
    %114 = arith.addf %96, %113 : vector<8x32xf32>
    %115 = math.tanh %114 : vector<8x32xf32>
    %cst_92 = arith.constant 1.000000e+00 : f32
    %116 = vector.broadcast %cst_92 : f32 to vector<8x32xf32>
    %117 = arith.subf %116, %111 : vector<8x32xf32>
    %118 = arith.mulf %117, %115 : vector<8x32xf32>
    %119 = arith.mulf %111, %90 : vector<8x32xf32>
    %120 = arith.addf %118, %119 : vector<8x32xf32>
    %c0_93 = arith.constant 0 : index
    %c16 = arith.constant 16 : index
    %c0_94 = arith.constant 0 : index
    %121 = vector.load %arg15[%c0_93, %c16, %c0_94] : memref<3x64x32xf32, #tpu.memory_space<vmem>>, vector<1x8x32xf32>
    %122 = vector.shape_cast %121 : vector<1x8x32xf32> to vector<8x32xf32>
    %c1_95 = arith.constant 1 : index
    %c16_96 = arith.constant 16 : index
    %c0_97 = arith.constant 0 : index
    %123 = vector.load %arg15[%c1_95, %c16_96, %c0_97] : memref<3x64x32xf32, #tpu.memory_space<vmem>>, vector<1x8x32xf32>
    %124 = vector.shape_cast %123 : vector<1x8x32xf32> to vector<8x32xf32>
    %c2_98 = arith.constant 2 : index
    %c16_99 = arith.constant 16 : index
    %c0_100 = arith.constant 0 : index
    %125 = vector.load %arg15[%c2_98, %c16_99, %c0_100] : memref<3x64x32xf32, #tpu.memory_space<vmem>>, vector<1x8x32xf32>
    %126 = vector.shape_cast %125 : vector<1x8x32xf32> to vector<8x32xf32>
    %cst_101 = arith.constant dense<0.000000e+00> : vector<8x32xf32>
    %127 = tpu.matmul %120, %51, %cst_101 {dimension_numbers = #tpu.dot_dimension_numbers<[1], [0], [0], [1], [0, 0, 1, 1], [], []>} : vector<8x32xf32>, vector<32x32xf32>, vector<8x32xf32> -> vector<8x32xf32>
    %cst_102 = arith.constant dense<0.000000e+00> : vector<8x32xf32>
    %128 = tpu.matmul %120, %53, %cst_102 {dimension_numbers = #tpu.dot_dimension_numbers<[1], [0], [0], [1], [0, 0, 1, 1], [], []>} : vector<8x32xf32>, vector<32x32xf32>, vector<8x32xf32> -> vector<8x32xf32>
    %cst_103 = arith.constant dense<0.000000e+00> : vector<8x32xf32>
    %129 = tpu.matmul %120, %55, %cst_103 {dimension_numbers = #tpu.dot_dimension_numbers<[1], [0], [0], [1], [0, 0, 1, 1], [], []>} : vector<8x32xf32>, vector<32x32xf32>, vector<8x32xf32> -> vector<8x32xf32>
    %130 = arith.addf %122, %127 : vector<8x32xf32>
    %131 = arith.negf %130 : vector<8x32xf32>
    %132 = math.exp %131 : vector<8x32xf32>
    %cst_104 = arith.constant 1.000000e+00 : f32
    %133 = vector.broadcast %cst_104 : f32 to vector<8x32xf32>
    %134 = arith.addf %133, %132 : vector<8x32xf32>
    %135 = arith.divf %133, %134 : vector<8x32xf32>
    %136 = arith.addf %124, %128 : vector<8x32xf32>
    %137 = arith.negf %136 : vector<8x32xf32>
    %138 = math.exp %137 : vector<8x32xf32>
    %cst_105 = arith.constant 1.000000e+00 : f32
    %139 = vector.broadcast %cst_105 : f32 to vector<8x32xf32>
    %140 = arith.addf %139, %138 : vector<8x32xf32>
    %141 = arith.divf %139, %140 : vector<8x32xf32>
    %142 = arith.addf %129, %59 : vector<8x32xf32>
    %143 = arith.mulf %135, %142 : vector<8x32xf32>
    %144 = arith.addf %126, %143 : vector<8x32xf32>
    %145 = math.tanh %144 : vector<8x32xf32>
    %cst_106 = arith.constant 1.000000e+00 : f32
    %146 = vector.broadcast %cst_106 : f32 to vector<8x32xf32>
    %147 = arith.subf %146, %141 : vector<8x32xf32>
    %148 = arith.mulf %147, %145 : vector<8x32xf32>
    %149 = arith.mulf %141, %120 : vector<8x32xf32>
    %150 = arith.addf %148, %149 : vector<8x32xf32>
    %c0_107 = arith.constant 0 : index
    %c24 = arith.constant 24 : index
    %c0_108 = arith.constant 0 : index
    %151 = vector.load %arg15[%c0_107, %c24, %c0_108] : memref<3x64x32xf32, #tpu.memory_space<vmem>>, vector<1x8x32xf32>
    %152 = vector.shape_cast %151 : vector<1x8x32xf32> to vector<8x32xf32>
    %c1_109 = arith.constant 1 : index
    %c24_110 = arith.constant 24 : index
    %c0_111 = arith.constant 0 : index
    %153 = vector.load %arg15[%c1_109, %c24_110, %c0_111] : memref<3x64x32xf32, #tpu.memory_space<vmem>>, vector<1x8x32xf32>
    %154 = vector.shape_cast %153 : vector<1x8x32xf32> to vector<8x32xf32>
    %c2_112 = arith.constant 2 : index
    %c24_113 = arith.constant 24 : index
    %c0_114 = arith.constant 0 : index
    %155 = vector.load %arg15[%c2_112, %c24_113, %c0_114] : memref<3x64x32xf32, #tpu.memory_space<vmem>>, vector<1x8x32xf32>
    %156 = vector.shape_cast %155 : vector<1x8x32xf32> to vector<8x32xf32>
    %cst_115 = arith.constant dense<0.000000e+00> : vector<8x32xf32>
    %157 = tpu.matmul %150, %51, %cst_115 {dimension_numbers = #tpu.dot_dimension_numbers<[1], [0], [0], [1], [0, 0, 1, 1], [], []>} : vector<8x32xf32>, vector<32x32xf32>, vector<8x32xf32> -> vector<8x32xf32>
    %cst_116 = arith.constant dense<0.000000e+00> : vector<8x32xf32>
    %158 = tpu.matmul %150, %53, %cst_116 {dimension_numbers = #tpu.dot_dimension_numbers<[1], [0], [0], [1], [0, 0, 1, 1], [], []>} : vector<8x32xf32>, vector<32x32xf32>, vector<8x32xf32> -> vector<8x32xf32>
    %cst_117 = arith.constant dense<0.000000e+00> : vector<8x32xf32>
    %159 = tpu.matmul %150, %55, %cst_117 {dimension_numbers = #tpu.dot_dimension_numbers<[1], [0], [0], [1], [0, 0, 1, 1], [], []>} : vector<8x32xf32>, vector<32x32xf32>, vector<8x32xf32> -> vector<8x32xf32>
    %160 = arith.addf %152, %157 : vector<8x32xf32>
    %161 = arith.negf %160 : vector<8x32xf32>
    %162 = math.exp %161 : vector<8x32xf32>
    %cst_118 = arith.constant 1.000000e+00 : f32
    %163 = vector.broadcast %cst_118 : f32 to vector<8x32xf32>
    %164 = arith.addf %163, %162 : vector<8x32xf32>
    %165 = arith.divf %163, %164 : vector<8x32xf32>
    %166 = arith.addf %154, %158 : vector<8x32xf32>
    %167 = arith.negf %166 : vector<8x32xf32>
    %168 = math.exp %167 : vector<8x32xf32>
    %cst_119 = arith.constant 1.000000e+00 : f32
    %169 = vector.broadcast %cst_119 : f32 to vector<8x32xf32>
    %170 = arith.addf %169, %168 : vector<8x32xf32>
    %171 = arith.divf %169, %170 : vector<8x32xf32>
    %172 = arith.addf %159, %59 : vector<8x32xf32>
    %173 = arith.mulf %165, %172 : vector<8x32xf32>
    %174 = arith.addf %156, %173 : vector<8x32xf32>
    %175 = math.tanh %174 : vector<8x32xf32>
    %cst_120 = arith.constant 1.000000e+00 : f32
    %176 = vector.broadcast %cst_120 : f32 to vector<8x32xf32>
    %177 = arith.subf %176, %171 : vector<8x32xf32>
    %178 = arith.mulf %177, %175 : vector<8x32xf32>
    %179 = arith.mulf %171, %150 : vector<8x32xf32>
    %180 = arith.addf %178, %179 : vector<8x32xf32>
    %c0_121 = arith.constant 0 : index
    %c32 = arith.constant 32 : index
    %c0_122 = arith.constant 0 : index
    %181 = vector.load %arg15[%c0_121, %c32, %c0_122] : memref<3x64x32xf32, #tpu.memory_space<vmem>>, vector<1x8x32xf32>
    %182 = vector.shape_cast %181 : vector<1x8x32xf32> to vector<8x32xf32>
    %c1_123 = arith.constant 1 : index
    %c32_124 = arith.constant 32 : index
    %c0_125 = arith.constant 0 : index
    %183 = vector.load %arg15[%c1_123, %c32_124, %c0_125] : memref<3x64x32xf32, #tpu.memory_space<vmem>>, vector<1x8x32xf32>
    %184 = vector.shape_cast %183 : vector<1x8x32xf32> to vector<8x32xf32>
    %c2_126 = arith.constant 2 : index
    %c32_127 = arith.constant 32 : index
    %c0_128 = arith.constant 0 : index
    %185 = vector.load %arg15[%c2_126, %c32_127, %c0_128] : memref<3x64x32xf32, #tpu.memory_space<vmem>>, vector<1x8x32xf32>
    %186 = vector.shape_cast %185 : vector<1x8x32xf32> to vector<8x32xf32>
    %cst_129 = arith.constant dense<0.000000e+00> : vector<8x32xf32>
    %187 = tpu.matmul %180, %51, %cst_129 {dimension_numbers = #tpu.dot_dimension_numbers<[1], [0], [0], [1], [0, 0, 1, 1], [], []>} : vector<8x32xf32>, vector<32x32xf32>, vector<8x32xf32> -> vector<8x32xf32>
    %cst_130 = arith.constant dense<0.000000e+00> : vector<8x32xf32>
    %188 = tpu.matmul %180, %53, %cst_130 {dimension_numbers = #tpu.dot_dimension_numbers<[1], [0], [0], [1], [0, 0, 1, 1], [], []>} : vector<8x32xf32>, vector<32x32xf32>, vector<8x32xf32> -> vector<8x32xf32>
    %cst_131 = arith.constant dense<0.000000e+00> : vector<8x32xf32>
    %189 = tpu.matmul %180, %55, %cst_131 {dimension_numbers = #tpu.dot_dimension_numbers<[1], [0], [0], [1], [0, 0, 1, 1], [], []>} : vector<8x32xf32>, vector<32x32xf32>, vector<8x32xf32> -> vector<8x32xf32>
    %190 = arith.addf %182, %187 : vector<8x32xf32>
    %191 = arith.negf %190 : vector<8x32xf32>
    %192 = math.exp %191 : vector<8x32xf32>
    %cst_132 = arith.constant 1.000000e+00 : f32
    %193 = vector.broadcast %cst_132 : f32 to vector<8x32xf32>
    %194 = arith.addf %193, %192 : vector<8x32xf32>
    %195 = arith.divf %193, %194 : vector<8x32xf32>
    %196 = arith.addf %184, %188 : vector<8x32xf32>
    %197 = arith.negf %196 : vector<8x32xf32>
    %198 = math.exp %197 : vector<8x32xf32>
    %cst_133 = arith.constant 1.000000e+00 : f32
    %199 = vector.broadcast %cst_133 : f32 to vector<8x32xf32>
    %200 = arith.addf %199, %198 : vector<8x32xf32>
    %201 = arith.divf %199, %200 : vector<8x32xf32>
    %202 = arith.addf %189, %59 : vector<8x32xf32>
    %203 = arith.mulf %195, %202 : vector<8x32xf32>
    %204 = arith.addf %186, %203 : vector<8x32xf32>
    %205 = math.tanh %204 : vector<8x32xf32>
    %cst_134 = arith.constant 1.000000e+00 : f32
    %206 = vector.broadcast %cst_134 : f32 to vector<8x32xf32>
    %207 = arith.subf %206, %201 : vector<8x32xf32>
    %208 = arith.mulf %207, %205 : vector<8x32xf32>
    %209 = arith.mulf %201, %180 : vector<8x32xf32>
    %210 = arith.addf %208, %209 : vector<8x32xf32>
    %c0_135 = arith.constant 0 : index
    %c40 = arith.constant 40 : index
    %c0_136 = arith.constant 0 : index
    %211 = vector.load %arg15[%c0_135, %c40, %c0_136] : memref<3x64x32xf32, #tpu.memory_space<vmem>>, vector<1x8x32xf32>
    %212 = vector.shape_cast %211 : vector<1x8x32xf32> to vector<8x32xf32>
    %c1_137 = arith.constant 1 : index
    %c40_138 = arith.constant 40 : index
    %c0_139 = arith.constant 0 : index
    %213 = vector.load %arg15[%c1_137, %c40_138, %c0_139] : memref<3x64x32xf32, #tpu.memory_space<vmem>>, vector<1x8x32xf32>
    %214 = vector.shape_cast %213 : vector<1x8x32xf32> to vector<8x32xf32>
    %c2_140 = arith.constant 2 : index
    %c40_141 = arith.constant 40 : index
    %c0_142 = arith.constant 0 : index
    %215 = vector.load %arg15[%c2_140, %c40_141, %c0_142] : memref<3x64x32xf32, #tpu.memory_space<vmem>>, vector<1x8x32xf32>
    %216 = vector.shape_cast %215 : vector<1x8x32xf32> to vector<8x32xf32>
    %cst_143 = arith.constant dense<0.000000e+00> : vector<8x32xf32>
    %217 = tpu.matmul %210, %51, %cst_143 {dimension_numbers = #tpu.dot_dimension_numbers<[1], [0], [0], [1], [0, 0, 1, 1], [], []>} : vector<8x32xf32>, vector<32x32xf32>, vector<8x32xf32> -> vector<8x32xf32>
    %cst_144 = arith.constant dense<0.000000e+00> : vector<8x32xf32>
    %218 = tpu.matmul %210, %53, %cst_144 {dimension_numbers = #tpu.dot_dimension_numbers<[1], [0], [0], [1], [0, 0, 1, 1], [], []>} : vector<8x32xf32>, vector<32x32xf32>, vector<8x32xf32> -> vector<8x32xf32>
    %cst_145 = arith.constant dense<0.000000e+00> : vector<8x32xf32>
    %219 = tpu.matmul %210, %55, %cst_145 {dimension_numbers = #tpu.dot_dimension_numbers<[1], [0], [0], [1], [0, 0, 1, 1], [], []>} : vector<8x32xf32>, vector<32x32xf32>, vector<8x32xf32> -> vector<8x32xf32>
    %220 = arith.addf %212, %217 : vector<8x32xf32>
    %221 = arith.negf %220 : vector<8x32xf32>
    %222 = math.exp %221 : vector<8x32xf32>
    %cst_146 = arith.constant 1.000000e+00 : f32
    %223 = vector.broadcast %cst_146 : f32 to vector<8x32xf32>
    %224 = arith.addf %223, %222 : vector<8x32xf32>
    %225 = arith.divf %223, %224 : vector<8x32xf32>
    %226 = arith.addf %214, %218 : vector<8x32xf32>
    %227 = arith.negf %226 : vector<8x32xf32>
    %228 = math.exp %227 : vector<8x32xf32>
    %cst_147 = arith.constant 1.000000e+00 : f32
    %229 = vector.broadcast %cst_147 : f32 to vector<8x32xf32>
    %230 = arith.addf %229, %228 : vector<8x32xf32>
    %231 = arith.divf %229, %230 : vector<8x32xf32>
    %232 = arith.addf %219, %59 : vector<8x32xf32>
    %233 = arith.mulf %225, %232 : vector<8x32xf32>
    %234 = arith.addf %216, %233 : vector<8x32xf32>
    %235 = math.tanh %234 : vector<8x32xf32>
    %cst_148 = arith.constant 1.000000e+00 : f32
    %236 = vector.broadcast %cst_148 : f32 to vector<8x32xf32>
    %237 = arith.subf %236, %231 : vector<8x32xf32>
    %238 = arith.mulf %237, %235 : vector<8x32xf32>
    %239 = arith.mulf %231, %210 : vector<8x32xf32>
    %240 = arith.addf %238, %239 : vector<8x32xf32>
    %c0_149 = arith.constant 0 : index
    %c48 = arith.constant 48 : index
    %c0_150 = arith.constant 0 : index
    %241 = vector.load %arg15[%c0_149, %c48, %c0_150] : memref<3x64x32xf32, #tpu.memory_space<vmem>>, vector<1x8x32xf32>
    %242 = vector.shape_cast %241 : vector<1x8x32xf32> to vector<8x32xf32>
    %c1_151 = arith.constant 1 : index
    %c48_152 = arith.constant 48 : index
    %c0_153 = arith.constant 0 : index
    %243 = vector.load %arg15[%c1_151, %c48_152, %c0_153] : memref<3x64x32xf32, #tpu.memory_space<vmem>>, vector<1x8x32xf32>
    %244 = vector.shape_cast %243 : vector<1x8x32xf32> to vector<8x32xf32>
    %c2_154 = arith.constant 2 : index
    %c48_155 = arith.constant 48 : index
    %c0_156 = arith.constant 0 : index
    %245 = vector.load %arg15[%c2_154, %c48_155, %c0_156] : memref<3x64x32xf32, #tpu.memory_space<vmem>>, vector<1x8x32xf32>
    %246 = vector.shape_cast %245 : vector<1x8x32xf32> to vector<8x32xf32>
    %cst_157 = arith.constant dense<0.000000e+00> : vector<8x32xf32>
    %247 = tpu.matmul %240, %51, %cst_157 {dimension_numbers = #tpu.dot_dimension_numbers<[1], [0], [0], [1], [0, 0, 1, 1], [], []>} : vector<8x32xf32>, vector<32x32xf32>, vector<8x32xf32> -> vector<8x32xf32>
    %cst_158 = arith.constant dense<0.000000e+00> : vector<8x32xf32>
    %248 = tpu.matmul %240, %53, %cst_158 {dimension_numbers = #tpu.dot_dimension_numbers<[1], [0], [0], [1], [0, 0, 1, 1], [], []>} : vector<8x32xf32>, vector<32x32xf32>, vector<8x32xf32> -> vector<8x32xf32>
    %cst_159 = arith.constant dense<0.000000e+00> : vector<8x32xf32>
    %249 = tpu.matmul %240, %55, %cst_159 {dimension_numbers = #tpu.dot_dimension_numbers<[1], [0], [0], [1], [0, 0, 1, 1], [], []>} : vector<8x32xf32>, vector<32x32xf32>, vector<8x32xf32> -> vector<8x32xf32>
    %250 = arith.addf %242, %247 : vector<8x32xf32>
    %251 = arith.negf %250 : vector<8x32xf32>
    %252 = math.exp %251 : vector<8x32xf32>
    %cst_160 = arith.constant 1.000000e+00 : f32
    %253 = vector.broadcast %cst_160 : f32 to vector<8x32xf32>
    %254 = arith.addf %253, %252 : vector<8x32xf32>
    %255 = arith.divf %253, %254 : vector<8x32xf32>
    %256 = arith.addf %244, %248 : vector<8x32xf32>
    %257 = arith.negf %256 : vector<8x32xf32>
    %258 = math.exp %257 : vector<8x32xf32>
    %cst_161 = arith.constant 1.000000e+00 : f32
    %259 = vector.broadcast %cst_161 : f32 to vector<8x32xf32>
    %260 = arith.addf %259, %258 : vector<8x32xf32>
    %261 = arith.divf %259, %260 : vector<8x32xf32>
    %262 = arith.addf %249, %59 : vector<8x32xf32>
    %263 = arith.mulf %255, %262 : vector<8x32xf32>
    %264 = arith.addf %246, %263 : vector<8x32xf32>
    %265 = math.tanh %264 : vector<8x32xf32>
    %cst_162 = arith.constant 1.000000e+00 : f32
    %266 = vector.broadcast %cst_162 : f32 to vector<8x32xf32>
    %267 = arith.subf %266, %261 : vector<8x32xf32>
    %268 = arith.mulf %267, %265 : vector<8x32xf32>
    %269 = arith.mulf %261, %240 : vector<8x32xf32>
    %270 = arith.addf %268, %269 : vector<8x32xf32>
    %c0_163 = arith.constant 0 : index
    %c56 = arith.constant 56 : index
    %c0_164 = arith.constant 0 : index
    %271 = vector.load %arg15[%c0_163, %c56, %c0_164] : memref<3x64x32xf32, #tpu.memory_space<vmem>>, vector<1x8x32xf32>
    %272 = vector.shape_cast %271 : vector<1x8x32xf32> to vector<8x32xf32>
    %c1_165 = arith.constant 1 : index
    %c56_166 = arith.constant 56 : index
    %c0_167 = arith.constant 0 : index
    %273 = vector.load %arg15[%c1_165, %c56_166, %c0_167] : memref<3x64x32xf32, #tpu.memory_space<vmem>>, vector<1x8x32xf32>
    %274 = vector.shape_cast %273 : vector<1x8x32xf32> to vector<8x32xf32>
    %c2_168 = arith.constant 2 : index
    %c56_169 = arith.constant 56 : index
    %c0_170 = arith.constant 0 : index
    %275 = vector.load %arg15[%c2_168, %c56_169, %c0_170] : memref<3x64x32xf32, #tpu.memory_space<vmem>>, vector<1x8x32xf32>
    %276 = vector.shape_cast %275 : vector<1x8x32xf32> to vector<8x32xf32>
    %cst_171 = arith.constant dense<0.000000e+00> : vector<8x32xf32>
    %277 = tpu.matmul %270, %51, %cst_171 {dimension_numbers = #tpu.dot_dimension_numbers<[1], [0], [0], [1], [0, 0, 1, 1], [], []>} : vector<8x32xf32>, vector<32x32xf32>, vector<8x32xf32> -> vector<8x32xf32>
    %cst_172 = arith.constant dense<0.000000e+00> : vector<8x32xf32>
    %278 = tpu.matmul %270, %53, %cst_172 {dimension_numbers = #tpu.dot_dimension_numbers<[1], [0], [0], [1], [0, 0, 1, 1], [], []>} : vector<8x32xf32>, vector<32x32xf32>, vector<8x32xf32> -> vector<8x32xf32>
    %cst_173 = arith.constant dense<0.000000e+00> : vector<8x32xf32>
    %279 = tpu.matmul %270, %55, %cst_173 {dimension_numbers = #tpu.dot_dimension_numbers<[1], [0], [0], [1], [0, 0, 1, 1], [], []>} : vector<8x32xf32>, vector<32x32xf32>, vector<8x32xf32> -> vector<8x32xf32>
    %280 = arith.addf %272, %277 : vector<8x32xf32>
    %281 = arith.negf %280 : vector<8x32xf32>
    %282 = math.exp %281 : vector<8x32xf32>
    %cst_174 = arith.constant 1.000000e+00 : f32
    %283 = vector.broadcast %cst_174 : f32 to vector<8x32xf32>
    %284 = arith.addf %283, %282 : vector<8x32xf32>
    %285 = arith.divf %283, %284 : vector<8x32xf32>
    %286 = arith.addf %274, %278 : vector<8x32xf32>
    %287 = arith.negf %286 : vector<8x32xf32>
    %288 = math.exp %287 : vector<8x32xf32>
    %cst_175 = arith.constant 1.000000e+00 : f32
    %289 = vector.broadcast %cst_175 : f32 to vector<8x32xf32>
    %290 = arith.addf %289, %288 : vector<8x32xf32>
    %291 = arith.divf %289, %290 : vector<8x32xf32>
    %292 = arith.addf %279, %59 : vector<8x32xf32>
    %293 = arith.mulf %285, %292 : vector<8x32xf32>
    %294 = arith.addf %276, %293 : vector<8x32xf32>
    %295 = math.tanh %294 : vector<8x32xf32>
    %cst_176 = arith.constant 1.000000e+00 : f32
    %296 = vector.broadcast %cst_176 : f32 to vector<8x32xf32>
    %297 = arith.subf %296, %291 : vector<8x32xf32>
    %298 = arith.mulf %297, %295 : vector<8x32xf32>
    %299 = arith.mulf %291, %270 : vector<8x32xf32>
    %300 = arith.addf %298, %299 : vector<8x32xf32>
    %c0_177 = arith.constant 0 : index
    %c0_178 = arith.constant 0 : index
    %c0_179 = arith.constant 0 : index
    %301 = vector.load %arg7[%c0_177, %c0_178, %c0_179] : memref<3x32x32xf32, #tpu.memory_space<vmem>>, vector<1x32x32xf32>
    %302 = vector.shape_cast %301 : vector<1x32x32xf32> to vector<32x32xf32>
    %cst_180 = arith.constant dense<0.000000e+00> : vector<8x32xf32>
    %303 = tpu.matmul %300, %302, %cst_180 {dimension_numbers = #tpu.dot_dimension_numbers<[1], [0], [0], [1], [0, 0, 1, 1], [], []>} : vector<8x32xf32>, vector<32x32xf32>, vector<8x32xf32> -> vector<8x32xf32>
    %c0_181 = arith.constant 0 : index
    %c0_182 = arith.constant 0 : index
    %c0_183 = arith.constant 0 : index
    %304 = vector.load %arg9[%c0_181, %c0_182, %c0_183] : memref<4x1x32xf32, #tpu.memory_space<vmem>>, vector<1x1x32xf32>
    %305 = vector.shape_cast %304 : vector<1x1x32xf32> to vector<1x32xf32>
    %306 = vector.broadcast %305 : vector<1x32xf32> to vector<8x32xf32>
    %307 = arith.addf %303, %306 : vector<8x32xf32>
    %c1_184 = arith.constant 1 : index
    %c0_185 = arith.constant 0 : index
    %c0_186 = arith.constant 0 : index
    %308 = vector.load %arg7[%c1_184, %c0_185, %c0_186] : memref<3x32x32xf32, #tpu.memory_space<vmem>>, vector<1x32x32xf32>
    %309 = vector.shape_cast %308 : vector<1x32x32xf32> to vector<32x32xf32>
    %cst_187 = arith.constant dense<0.000000e+00> : vector<8x32xf32>
    %310 = tpu.matmul %300, %309, %cst_187 {dimension_numbers = #tpu.dot_dimension_numbers<[1], [0], [0], [1], [0, 0, 1, 1], [], []>} : vector<8x32xf32>, vector<32x32xf32>, vector<8x32xf32> -> vector<8x32xf32>
    %c1_188 = arith.constant 1 : index
    %c0_189 = arith.constant 0 : index
    %c0_190 = arith.constant 0 : index
    %311 = vector.load %arg9[%c1_188, %c0_189, %c0_190] : memref<4x1x32xf32, #tpu.memory_space<vmem>>, vector<1x1x32xf32>
    %312 = vector.shape_cast %311 : vector<1x1x32xf32> to vector<1x32xf32>
    %313 = vector.broadcast %312 : vector<1x32xf32> to vector<8x32xf32>
    %314 = arith.addf %310, %313 : vector<8x32xf32>
    %c2_191 = arith.constant 2 : index
    %c0_192 = arith.constant 0 : index
    %c0_193 = arith.constant 0 : index
    %315 = vector.load %arg7[%c2_191, %c0_192, %c0_193] : memref<3x32x32xf32, #tpu.memory_space<vmem>>, vector<1x32x32xf32>
    %316 = vector.shape_cast %315 : vector<1x32x32xf32> to vector<32x32xf32>
    %cst_194 = arith.constant dense<0.000000e+00> : vector<8x32xf32>
    %317 = tpu.matmul %300, %316, %cst_194 {dimension_numbers = #tpu.dot_dimension_numbers<[1], [0], [0], [1], [0, 0, 1, 1], [], []>} : vector<8x32xf32>, vector<32x32xf32>, vector<8x32xf32> -> vector<8x32xf32>
    %c2_195 = arith.constant 2 : index
    %c0_196 = arith.constant 0 : index
    %c0_197 = arith.constant 0 : index
    %318 = vector.load %arg9[%c2_195, %c0_196, %c0_197] : memref<4x1x32xf32, #tpu.memory_space<vmem>>, vector<1x1x32xf32>
    %319 = vector.shape_cast %318 : vector<1x1x32xf32> to vector<1x32xf32>
    %320 = vector.broadcast %319 : vector<1x32xf32> to vector<8x32xf32>
    %321 = arith.addf %317, %320 : vector<8x32xf32>
    %c0_198 = arith.constant 0 : index
    %c0_199 = arith.constant 0 : index
    %c0_200 = arith.constant 0 : index
    %322 = vector.load %arg8[%c0_198, %c0_199, %c0_200] : memref<3x32x32xf32, #tpu.memory_space<vmem>>, vector<1x32x32xf32>
    %323 = vector.shape_cast %322 : vector<1x32x32xf32> to vector<32x32xf32>
    %c1_201 = arith.constant 1 : index
    %c0_202 = arith.constant 0 : index
    %c0_203 = arith.constant 0 : index
    %324 = vector.load %arg8[%c1_201, %c0_202, %c0_203] : memref<3x32x32xf32, #tpu.memory_space<vmem>>, vector<1x32x32xf32>
    %325 = vector.shape_cast %324 : vector<1x32x32xf32> to vector<32x32xf32>
    %c2_204 = arith.constant 2 : index
    %c0_205 = arith.constant 0 : index
    %c0_206 = arith.constant 0 : index
    %326 = vector.load %arg8[%c2_204, %c0_205, %c0_206] : memref<3x32x32xf32, #tpu.memory_space<vmem>>, vector<1x32x32xf32>
    %327 = vector.shape_cast %326 : vector<1x32x32xf32> to vector<32x32xf32>
    %c3_207 = arith.constant 3 : index
    %c0_208 = arith.constant 0 : index
    %c0_209 = arith.constant 0 : index
    %328 = vector.load %arg9[%c3_207, %c0_208, %c0_209] : memref<4x1x32xf32, #tpu.memory_space<vmem>>, vector<1x1x32xf32>
    %329 = vector.shape_cast %328 : vector<1x1x32xf32> to vector<1x32xf32>
    %330 = vector.shape_cast %329 : vector<1x32xf32> to vector<1x32xf32>
    %331 = vector.broadcast %330 : vector<1x32xf32> to vector<8x32xf32>
    %c0_210 = arith.constant 0 : index
    %c0_211 = arith.constant 0 : index
    %332 = vector.load %arg2[%c0_210, %c0_211] : memref<8x32xf32, #tpu.memory_space<vmem>>, vector<8x32xf32>
    %c0_212 = arith.constant 0 : index
    %c0_213 = arith.constant 0 : index
    %c0_214 = arith.constant 0 : index
    %333 = vector.load %arg16[%c0_212, %c0_213, %c0_214] : memref<3x64x32xf32, #tpu.memory_space<vmem>>, vector<1x8x32xf32>
    %334 = vector.shape_cast %333 : vector<1x8x32xf32> to vector<8x32xf32>
    %335 = arith.addf %334, %307 : vector<8x32xf32>
    %c1_215 = arith.constant 1 : index
    %c0_216 = arith.constant 0 : index
    %c0_217 = arith.constant 0 : index
    %336 = vector.load %arg16[%c1_215, %c0_216, %c0_217] : memref<3x64x32xf32, #tpu.memory_space<vmem>>, vector<1x8x32xf32>
    %337 = vector.shape_cast %336 : vector<1x8x32xf32> to vector<8x32xf32>
    %338 = arith.addf %337, %314 : vector<8x32xf32>
    %c2_218 = arith.constant 2 : index
    %c0_219 = arith.constant 0 : index
    %c0_220 = arith.constant 0 : index
    %339 = vector.load %arg16[%c2_218, %c0_219, %c0_220] : memref<3x64x32xf32, #tpu.memory_space<vmem>>, vector<1x8x32xf32>
    %340 = vector.shape_cast %339 : vector<1x8x32xf32> to vector<8x32xf32>
    %341 = arith.addf %340, %321 : vector<8x32xf32>
    %cst_221 = arith.constant dense<0.000000e+00> : vector<8x32xf32>
    %342 = tpu.matmul %332, %323, %cst_221 {dimension_numbers = #tpu.dot_dimension_numbers<[1], [0], [0], [1], [0, 0, 1, 1], [], []>} : vector<8x32xf32>, vector<32x32xf32>, vector<8x32xf32> -> vector<8x32xf32>
    %cst_222 = arith.constant dense<0.000000e+00> : vector<8x32xf32>
    %343 = tpu.matmul %332, %325, %cst_222 {dimension_numbers = #tpu.dot_dimension_numbers<[1], [0], [0], [1], [0, 0, 1, 1], [], []>} : vector<8x32xf32>, vector<32x32xf32>, vector<8x32xf32> -> vector<8x32xf32>
    %cst_223 = arith.constant dense<0.000000e+00> : vector<8x32xf32>
    %344 = tpu.matmul %332, %327, %cst_223 {dimension_numbers = #tpu.dot_dimension_numbers<[1], [0], [0], [1], [0, 0, 1, 1], [], []>} : vector<8x32xf32>, vector<32x32xf32>, vector<8x32xf32> -> vector<8x32xf32>
    %345 = arith.addf %335, %342 : vector<8x32xf32>
    %346 = arith.negf %345 : vector<8x32xf32>
    %347 = math.exp %346 : vector<8x32xf32>
    %cst_224 = arith.constant 1.000000e+00 : f32
    %348 = vector.broadcast %cst_224 : f32 to vector<8x32xf32>
    %349 = arith.addf %348, %347 : vector<8x32xf32>
    %350 = arith.divf %348, %349 : vector<8x32xf32>
    %351 = arith.addf %338, %343 : vector<8x32xf32>
    %352 = arith.negf %351 : vector<8x32xf32>
    %353 = math.exp %352 : vector<8x32xf32>
    %cst_225 = arith.constant 1.000000e+00 : f32
    %354 = vector.broadcast %cst_225 : f32 to vector<8x32xf32>
    %355 = arith.addf %354, %353 : vector<8x32xf32>
    %356 = arith.divf %354, %355 : vector<8x32xf32>
    %357 = arith.addf %344, %331 : vector<8x32xf32>
    %358 = arith.mulf %350, %357 : vector<8x32xf32>
    %359 = arith.addf %341, %358 : vector<8x32xf32>
    %360 = math.tanh %359 : vector<8x32xf32>
    %cst_226 = arith.constant 1.000000e+00 : f32
    %361 = vector.broadcast %cst_226 : f32 to vector<8x32xf32>
    %362 = arith.subf %361, %356 : vector<8x32xf32>
    %363 = arith.mulf %362, %360 : vector<8x32xf32>
    %364 = arith.mulf %356, %332 : vector<8x32xf32>
    %365 = arith.addf %363, %364 : vector<8x32xf32>
    %c0_227 = arith.constant 0 : index
    %c8_228 = arith.constant 8 : index
    %c0_229 = arith.constant 0 : index
    %366 = vector.load %arg16[%c0_227, %c8_228, %c0_229] : memref<3x64x32xf32, #tpu.memory_space<vmem>>, vector<1x8x32xf32>
    %367 = vector.shape_cast %366 : vector<1x8x32xf32> to vector<8x32xf32>
    %368 = arith.addf %367, %307 : vector<8x32xf32>
    %c1_230 = arith.constant 1 : index
    %c8_231 = arith.constant 8 : index
    %c0_232 = arith.constant 0 : index
    %369 = vector.load %arg16[%c1_230, %c8_231, %c0_232] : memref<3x64x32xf32, #tpu.memory_space<vmem>>, vector<1x8x32xf32>
    %370 = vector.shape_cast %369 : vector<1x8x32xf32> to vector<8x32xf32>
    %371 = arith.addf %370, %314 : vector<8x32xf32>
    %c2_233 = arith.constant 2 : index
    %c8_234 = arith.constant 8 : index
    %c0_235 = arith.constant 0 : index
    %372 = vector.load %arg16[%c2_233, %c8_234, %c0_235] : memref<3x64x32xf32, #tpu.memory_space<vmem>>, vector<1x8x32xf32>
    %373 = vector.shape_cast %372 : vector<1x8x32xf32> to vector<8x32xf32>
    %374 = arith.addf %373, %321 : vector<8x32xf32>
    %cst_236 = arith.constant dense<0.000000e+00> : vector<8x32xf32>
    %375 = tpu.matmul %365, %323, %cst_236 {dimension_numbers = #tpu.dot_dimension_numbers<[1], [0], [0], [1], [0, 0, 1, 1], [], []>} : vector<8x32xf32>, vector<32x32xf32>, vector<8x32xf32> -> vector<8x32xf32>
    %cst_237 = arith.constant dense<0.000000e+00> : vector<8x32xf32>
    %376 = tpu.matmul %365, %325, %cst_237 {dimension_numbers = #tpu.dot_dimension_numbers<[1], [0], [0], [1], [0, 0, 1, 1], [], []>} : vector<8x32xf32>, vector<32x32xf32>, vector<8x32xf32> -> vector<8x32xf32>
    %cst_238 = arith.constant dense<0.000000e+00> : vector<8x32xf32>
    %377 = tpu.matmul %365, %327, %cst_238 {dimension_numbers = #tpu.dot_dimension_numbers<[1], [0], [0], [1], [0, 0, 1, 1], [], []>} : vector<8x32xf32>, vector<32x32xf32>, vector<8x32xf32> -> vector<8x32xf32>
    %378 = arith.addf %368, %375 : vector<8x32xf32>
    %379 = arith.negf %378 : vector<8x32xf32>
    %380 = math.exp %379 : vector<8x32xf32>
    %cst_239 = arith.constant 1.000000e+00 : f32
    %381 = vector.broadcast %cst_239 : f32 to vector<8x32xf32>
    %382 = arith.addf %381, %380 : vector<8x32xf32>
    %383 = arith.divf %381, %382 : vector<8x32xf32>
    %384 = arith.addf %371, %376 : vector<8x32xf32>
    %385 = arith.negf %384 : vector<8x32xf32>
    %386 = math.exp %385 : vector<8x32xf32>
    %cst_240 = arith.constant 1.000000e+00 : f32
    %387 = vector.broadcast %cst_240 : f32 to vector<8x32xf32>
    %388 = arith.addf %387, %386 : vector<8x32xf32>
    %389 = arith.divf %387, %388 : vector<8x32xf32>
    %390 = arith.addf %377, %331 : vector<8x32xf32>
    %391 = arith.mulf %383, %390 : vector<8x32xf32>
    %392 = arith.addf %374, %391 : vector<8x32xf32>
    %393 = math.tanh %392 : vector<8x32xf32>
    %cst_241 = arith.constant 1.000000e+00 : f32
    %394 = vector.broadcast %cst_241 : f32 to vector<8x32xf32>
    %395 = arith.subf %394, %389 : vector<8x32xf32>
    %396 = arith.mulf %395, %393 : vector<8x32xf32>
    %397 = arith.mulf %389, %365 : vector<8x32xf32>
    %398 = arith.addf %396, %397 : vector<8x32xf32>
    %c0_242 = arith.constant 0 : index
    %c16_243 = arith.constant 16 : index
    %c0_244 = arith.constant 0 : index
    %399 = vector.load %arg16[%c0_242, %c16_243, %c0_244] : memref<3x64x32xf32, #tpu.memory_space<vmem>>, vector<1x8x32xf32>
    %400 = vector.shape_cast %399 : vector<1x8x32xf32> to vector<8x32xf32>
    %401 = arith.addf %400, %307 : vector<8x32xf32>
    %c1_245 = arith.constant 1 : index
    %c16_246 = arith.constant 16 : index
    %c0_247 = arith.constant 0 : index
    %402 = vector.load %arg16[%c1_245, %c16_246, %c0_247] : memref<3x64x32xf32, #tpu.memory_space<vmem>>, vector<1x8x32xf32>
    %403 = vector.shape_cast %402 : vector<1x8x32xf32> to vector<8x32xf32>
    %404 = arith.addf %403, %314 : vector<8x32xf32>
    %c2_248 = arith.constant 2 : index
    %c16_249 = arith.constant 16 : index
    %c0_250 = arith.constant 0 : index
    %405 = vector.load %arg16[%c2_248, %c16_249, %c0_250] : memref<3x64x32xf32, #tpu.memory_space<vmem>>, vector<1x8x32xf32>
    %406 = vector.shape_cast %405 : vector<1x8x32xf32> to vector<8x32xf32>
    %407 = arith.addf %406, %321 : vector<8x32xf32>
    %cst_251 = arith.constant dense<0.000000e+00> : vector<8x32xf32>
    %408 = tpu.matmul %398, %323, %cst_251 {dimension_numbers = #tpu.dot_dimension_numbers<[1], [0], [0], [1], [0, 0, 1, 1], [], []>} : vector<8x32xf32>, vector<32x32xf32>, vector<8x32xf32> -> vector<8x32xf32>
    %cst_252 = arith.constant dense<0.000000e+00> : vector<8x32xf32>
    %409 = tpu.matmul %398, %325, %cst_252 {dimension_numbers = #tpu.dot_dimension_numbers<[1], [0], [0], [1], [0, 0, 1, 1], [], []>} : vector<8x32xf32>, vector<32x32xf32>, vector<8x32xf32> -> vector<8x32xf32>
    %cst_253 = arith.constant dense<0.000000e+00> : vector<8x32xf32>
    %410 = tpu.matmul %398, %327, %cst_253 {dimension_numbers = #tpu.dot_dimension_numbers<[1], [0], [0], [1], [0, 0, 1, 1], [], []>} : vector<8x32xf32>, vector<32x32xf32>, vector<8x32xf32> -> vector<8x32xf32>
    %411 = arith.addf %401, %408 : vector<8x32xf32>
    %412 = arith.negf %411 : vector<8x32xf32>
    %413 = math.exp %412 : vector<8x32xf32>
    %cst_254 = arith.constant 1.000000e+00 : f32
    %414 = vector.broadcast %cst_254 : f32 to vector<8x32xf32>
    %415 = arith.addf %414, %413 : vector<8x32xf32>
    %416 = arith.divf %414, %415 : vector<8x32xf32>
    %417 = arith.addf %404, %409 : vector<8x32xf32>
    %418 = arith.negf %417 : vector<8x32xf32>
    %419 = math.exp %418 : vector<8x32xf32>
    %cst_255 = arith.constant 1.000000e+00 : f32
    %420 = vector.broadcast %cst_255 : f32 to vector<8x32xf32>
    %421 = arith.addf %420, %419 : vector<8x32xf32>
    %422 = arith.divf %420, %421 : vector<8x32xf32>
    %423 = arith.addf %410, %331 : vector<8x32xf32>
    %424 = arith.mulf %416, %423 : vector<8x32xf32>
    %425 = arith.addf %407, %424 : vector<8x32xf32>
    %426 = math.tanh %425 : vector<8x32xf32>
    %cst_256 = arith.constant 1.000000e+00 : f32
    %427 = vector.broadcast %cst_256 : f32 to vector<8x32xf32>
    %428 = arith.subf %427, %422 : vector<8x32xf32>
    %429 = arith.mulf %428, %426 : vector<8x32xf32>
    %430 = arith.mulf %422, %398 : vector<8x32xf32>
    %431 = arith.addf %429, %430 : vector<8x32xf32>
    %c0_257 = arith.constant 0 : index
    %c24_258 = arith.constant 24 : index
    %c0_259 = arith.constant 0 : index
    %432 = vector.load %arg16[%c0_257, %c24_258, %c0_259] : memref<3x64x32xf32, #tpu.memory_space<vmem>>, vector<1x8x32xf32>
    %433 = vector.shape_cast %432 : vector<1x8x32xf32> to vector<8x32xf32>
    %434 = arith.addf %433, %307 : vector<8x32xf32>
    %c1_260 = arith.constant 1 : index
    %c24_261 = arith.constant 24 : index
    %c0_262 = arith.constant 0 : index
    %435 = vector.load %arg16[%c1_260, %c24_261, %c0_262] : memref<3x64x32xf32, #tpu.memory_space<vmem>>, vector<1x8x32xf32>
    %436 = vector.shape_cast %435 : vector<1x8x32xf32> to vector<8x32xf32>
    %437 = arith.addf %436, %314 : vector<8x32xf32>
    %c2_263 = arith.constant 2 : index
    %c24_264 = arith.constant 24 : index
    %c0_265 = arith.constant 0 : index
    %438 = vector.load %arg16[%c2_263, %c24_264, %c0_265] : memref<3x64x32xf32, #tpu.memory_space<vmem>>, vector<1x8x32xf32>
    %439 = vector.shape_cast %438 : vector<1x8x32xf32> to vector<8x32xf32>
    %440 = arith.addf %439, %321 : vector<8x32xf32>
    %cst_266 = arith.constant dense<0.000000e+00> : vector<8x32xf32>
    %441 = tpu.matmul %431, %323, %cst_266 {dimension_numbers = #tpu.dot_dimension_numbers<[1], [0], [0], [1], [0, 0, 1, 1], [], []>} : vector<8x32xf32>, vector<32x32xf32>, vector<8x32xf32> -> vector<8x32xf32>
    %cst_267 = arith.constant dense<0.000000e+00> : vector<8x32xf32>
    %442 = tpu.matmul %431, %325, %cst_267 {dimension_numbers = #tpu.dot_dimension_numbers<[1], [0], [0], [1], [0, 0, 1, 1], [], []>} : vector<8x32xf32>, vector<32x32xf32>, vector<8x32xf32> -> vector<8x32xf32>
    %cst_268 = arith.constant dense<0.000000e+00> : vector<8x32xf32>
    %443 = tpu.matmul %431, %327, %cst_268 {dimension_numbers = #tpu.dot_dimension_numbers<[1], [0], [0], [1], [0, 0, 1, 1], [], []>} : vector<8x32xf32>, vector<32x32xf32>, vector<8x32xf32> -> vector<8x32xf32>
    %444 = arith.addf %434, %441 : vector<8x32xf32>
    %445 = arith.negf %444 : vector<8x32xf32>
    %446 = math.exp %445 : vector<8x32xf32>
    %cst_269 = arith.constant 1.000000e+00 : f32
    %447 = vector.broadcast %cst_269 : f32 to vector<8x32xf32>
    %448 = arith.addf %447, %446 : vector<8x32xf32>
    %449 = arith.divf %447, %448 : vector<8x32xf32>
    %450 = arith.addf %437, %442 : vector<8x32xf32>
    %451 = arith.negf %450 : vector<8x32xf32>
    %452 = math.exp %451 : vector<8x32xf32>
    %cst_270 = arith.constant 1.000000e+00 : f32
    %453 = vector.broadcast %cst_270 : f32 to vector<8x32xf32>
    %454 = arith.addf %453, %452 : vector<8x32xf32>
    %455 = arith.divf %453, %454 : vector<8x32xf32>
    %456 = arith.addf %443, %331 : vector<8x32xf32>
    %457 = arith.mulf %449, %456 : vector<8x32xf32>
    %458 = arith.addf %440, %457 : vector<8x32xf32>
    %459 = math.tanh %458 : vector<8x32xf32>
    %cst_271 = arith.constant 1.000000e+00 : f32
    %460 = vector.broadcast %cst_271 : f32 to vector<8x32xf32>
    %461 = arith.subf %460, %455 : vector<8x32xf32>
    %462 = arith.mulf %461, %459 : vector<8x32xf32>
    %463 = arith.mulf %455, %431 : vector<8x32xf32>
    %464 = arith.addf %462, %463 : vector<8x32xf32>
    %c0_272 = arith.constant 0 : index
    %c32_273 = arith.constant 32 : index
    %c0_274 = arith.constant 0 : index
    %465 = vector.load %arg16[%c0_272, %c32_273, %c0_274] : memref<3x64x32xf32, #tpu.memory_space<vmem>>, vector<1x8x32xf32>
    %466 = vector.shape_cast %465 : vector<1x8x32xf32> to vector<8x32xf32>
    %467 = arith.addf %466, %307 : vector<8x32xf32>
    %c1_275 = arith.constant 1 : index
    %c32_276 = arith.constant 32 : index
    %c0_277 = arith.constant 0 : index
    %468 = vector.load %arg16[%c1_275, %c32_276, %c0_277] : memref<3x64x32xf32, #tpu.memory_space<vmem>>, vector<1x8x32xf32>
    %469 = vector.shape_cast %468 : vector<1x8x32xf32> to vector<8x32xf32>
    %470 = arith.addf %469, %314 : vector<8x32xf32>
    %c2_278 = arith.constant 2 : index
    %c32_279 = arith.constant 32 : index
    %c0_280 = arith.constant 0 : index
    %471 = vector.load %arg16[%c2_278, %c32_279, %c0_280] : memref<3x64x32xf32, #tpu.memory_space<vmem>>, vector<1x8x32xf32>
    %472 = vector.shape_cast %471 : vector<1x8x32xf32> to vector<8x32xf32>
    %473 = arith.addf %472, %321 : vector<8x32xf32>
    %cst_281 = arith.constant dense<0.000000e+00> : vector<8x32xf32>
    %474 = tpu.matmul %464, %323, %cst_281 {dimension_numbers = #tpu.dot_dimension_numbers<[1], [0], [0], [1], [0, 0, 1, 1], [], []>} : vector<8x32xf32>, vector<32x32xf32>, vector<8x32xf32> -> vector<8x32xf32>
    %cst_282 = arith.constant dense<0.000000e+00> : vector<8x32xf32>
    %475 = tpu.matmul %464, %325, %cst_282 {dimension_numbers = #tpu.dot_dimension_numbers<[1], [0], [0], [1], [0, 0, 1, 1], [], []>} : vector<8x32xf32>, vector<32x32xf32>, vector<8x32xf32> -> vector<8x32xf32>
    %cst_283 = arith.constant dense<0.000000e+00> : vector<8x32xf32>
    %476 = tpu.matmul %464, %327, %cst_283 {dimension_numbers = #tpu.dot_dimension_numbers<[1], [0], [0], [1], [0, 0, 1, 1], [], []>} : vector<8x32xf32>, vector<32x32xf32>, vector<8x32xf32> -> vector<8x32xf32>
    %477 = arith.addf %467, %474 : vector<8x32xf32>
    %478 = arith.negf %477 : vector<8x32xf32>
    %479 = math.exp %478 : vector<8x32xf32>
    %cst_284 = arith.constant 1.000000e+00 : f32
    %480 = vector.broadcast %cst_284 : f32 to vector<8x32xf32>
    %481 = arith.addf %480, %479 : vector<8x32xf32>
    %482 = arith.divf %480, %481 : vector<8x32xf32>
    %483 = arith.addf %470, %475 : vector<8x32xf32>
    %484 = arith.negf %483 : vector<8x32xf32>
    %485 = math.exp %484 : vector<8x32xf32>
    %cst_285 = arith.constant 1.000000e+00 : f32
    %486 = vector.broadcast %cst_285 : f32 to vector<8x32xf32>
    %487 = arith.addf %486, %485 : vector<8x32xf32>
    %488 = arith.divf %486, %487 : vector<8x32xf32>
    %489 = arith.addf %476, %331 : vector<8x32xf32>
    %490 = arith.mulf %482, %489 : vector<8x32xf32>
    %491 = arith.addf %473, %490 : vector<8x32xf32>
    %492 = math.tanh %491 : vector<8x32xf32>
    %cst_286 = arith.constant 1.000000e+00 : f32
    %493 = vector.broadcast %cst_286 : f32 to vector<8x32xf32>
    %494 = arith.subf %493, %488 : vector<8x32xf32>
    %495 = arith.mulf %494, %492 : vector<8x32xf32>
    %496 = arith.mulf %488, %464 : vector<8x32xf32>
    %497 = arith.addf %495, %496 : vector<8x32xf32>
    %c0_287 = arith.constant 0 : index
    %c40_288 = arith.constant 40 : index
    %c0_289 = arith.constant 0 : index
    %498 = vector.load %arg16[%c0_287, %c40_288, %c0_289] : memref<3x64x32xf32, #tpu.memory_space<vmem>>, vector<1x8x32xf32>
    %499 = vector.shape_cast %498 : vector<1x8x32xf32> to vector<8x32xf32>
    %500 = arith.addf %499, %307 : vector<8x32xf32>
    %c1_290 = arith.constant 1 : index
    %c40_291 = arith.constant 40 : index
    %c0_292 = arith.constant 0 : index
    %501 = vector.load %arg16[%c1_290, %c40_291, %c0_292] : memref<3x64x32xf32, #tpu.memory_space<vmem>>, vector<1x8x32xf32>
    %502 = vector.shape_cast %501 : vector<1x8x32xf32> to vector<8x32xf32>
    %503 = arith.addf %502, %314 : vector<8x32xf32>
    %c2_293 = arith.constant 2 : index
    %c40_294 = arith.constant 40 : index
    %c0_295 = arith.constant 0 : index
    %504 = vector.load %arg16[%c2_293, %c40_294, %c0_295] : memref<3x64x32xf32, #tpu.memory_space<vmem>>, vector<1x8x32xf32>
    %505 = vector.shape_cast %504 : vector<1x8x32xf32> to vector<8x32xf32>
    %506 = arith.addf %505, %321 : vector<8x32xf32>
    %cst_296 = arith.constant dense<0.000000e+00> : vector<8x32xf32>
    %507 = tpu.matmul %497, %323, %cst_296 {dimension_numbers = #tpu.dot_dimension_numbers<[1], [0], [0], [1], [0, 0, 1, 1], [], []>} : vector<8x32xf32>, vector<32x32xf32>, vector<8x32xf32> -> vector<8x32xf32>
    %cst_297 = arith.constant dense<0.000000e+00> : vector<8x32xf32>
    %508 = tpu.matmul %497, %325, %cst_297 {dimension_numbers = #tpu.dot_dimension_numbers<[1], [0], [0], [1], [0, 0, 1, 1], [], []>} : vector<8x32xf32>, vector<32x32xf32>, vector<8x32xf32> -> vector<8x32xf32>
    %cst_298 = arith.constant dense<0.000000e+00> : vector<8x32xf32>
    %509 = tpu.matmul %497, %327, %cst_298 {dimension_numbers = #tpu.dot_dimension_numbers<[1], [0], [0], [1], [0, 0, 1, 1], [], []>} : vector<8x32xf32>, vector<32x32xf32>, vector<8x32xf32> -> vector<8x32xf32>
    %510 = arith.addf %500, %507 : vector<8x32xf32>
    %511 = arith.negf %510 : vector<8x32xf32>
    %512 = math.exp %511 : vector<8x32xf32>
    %cst_299 = arith.constant 1.000000e+00 : f32
    %513 = vector.broadcast %cst_299 : f32 to vector<8x32xf32>
    %514 = arith.addf %513, %512 : vector<8x32xf32>
    %515 = arith.divf %513, %514 : vector<8x32xf32>
    %516 = arith.addf %503, %508 : vector<8x32xf32>
    %517 = arith.negf %516 : vector<8x32xf32>
    %518 = math.exp %517 : vector<8x32xf32>
    %cst_300 = arith.constant 1.000000e+00 : f32
    %519 = vector.broadcast %cst_300 : f32 to vector<8x32xf32>
    %520 = arith.addf %519, %518 : vector<8x32xf32>
    %521 = arith.divf %519, %520 : vector<8x32xf32>
    %522 = arith.addf %509, %331 : vector<8x32xf32>
    %523 = arith.mulf %515, %522 : vector<8x32xf32>
    %524 = arith.addf %506, %523 : vector<8x32xf32>
    %525 = math.tanh %524 : vector<8x32xf32>
    %cst_301 = arith.constant 1.000000e+00 : f32
    %526 = vector.broadcast %cst_301 : f32 to vector<8x32xf32>
    %527 = arith.subf %526, %521 : vector<8x32xf32>
    %528 = arith.mulf %527, %525 : vector<8x32xf32>
    %529 = arith.mulf %521, %497 : vector<8x32xf32>
    %530 = arith.addf %528, %529 : vector<8x32xf32>
    %c0_302 = arith.constant 0 : index
    %c48_303 = arith.constant 48 : index
    %c0_304 = arith.constant 0 : index
    %531 = vector.load %arg16[%c0_302, %c48_303, %c0_304] : memref<3x64x32xf32, #tpu.memory_space<vmem>>, vector<1x8x32xf32>
    %532 = vector.shape_cast %531 : vector<1x8x32xf32> to vector<8x32xf32>
    %533 = arith.addf %532, %307 : vector<8x32xf32>
    %c1_305 = arith.constant 1 : index
    %c48_306 = arith.constant 48 : index
    %c0_307 = arith.constant 0 : index
    %534 = vector.load %arg16[%c1_305, %c48_306, %c0_307] : memref<3x64x32xf32, #tpu.memory_space<vmem>>, vector<1x8x32xf32>
    %535 = vector.shape_cast %534 : vector<1x8x32xf32> to vector<8x32xf32>
    %536 = arith.addf %535, %314 : vector<8x32xf32>
    %c2_308 = arith.constant 2 : index
    %c48_309 = arith.constant 48 : index
    %c0_310 = arith.constant 0 : index
    %537 = vector.load %arg16[%c2_308, %c48_309, %c0_310] : memref<3x64x32xf32, #tpu.memory_space<vmem>>, vector<1x8x32xf32>
    %538 = vector.shape_cast %537 : vector<1x8x32xf32> to vector<8x32xf32>
    %539 = arith.addf %538, %321 : vector<8x32xf32>
    %cst_311 = arith.constant dense<0.000000e+00> : vector<8x32xf32>
    %540 = tpu.matmul %530, %323, %cst_311 {dimension_numbers = #tpu.dot_dimension_numbers<[1], [0], [0], [1], [0, 0, 1, 1], [], []>} : vector<8x32xf32>, vector<32x32xf32>, vector<8x32xf32> -> vector<8x32xf32>
    %cst_312 = arith.constant dense<0.000000e+00> : vector<8x32xf32>
    %541 = tpu.matmul %530, %325, %cst_312 {dimension_numbers = #tpu.dot_dimension_numbers<[1], [0], [0], [1], [0, 0, 1, 1], [], []>} : vector<8x32xf32>, vector<32x32xf32>, vector<8x32xf32> -> vector<8x32xf32>
    %cst_313 = arith.constant dense<0.000000e+00> : vector<8x32xf32>
    %542 = tpu.matmul %530, %327, %cst_313 {dimension_numbers = #tpu.dot_dimension_numbers<[1], [0], [0], [1], [0, 0, 1, 1], [], []>} : vector<8x32xf32>, vector<32x32xf32>, vector<8x32xf32> -> vector<8x32xf32>
    %543 = arith.addf %533, %540 : vector<8x32xf32>
    %544 = arith.negf %543 : vector<8x32xf32>
    %545 = math.exp %544 : vector<8x32xf32>
    %cst_314 = arith.constant 1.000000e+00 : f32
    %546 = vector.broadcast %cst_314 : f32 to vector<8x32xf32>
    %547 = arith.addf %546, %545 : vector<8x32xf32>
    %548 = arith.divf %546, %547 : vector<8x32xf32>
    %549 = arith.addf %536, %541 : vector<8x32xf32>
    %550 = arith.negf %549 : vector<8x32xf32>
    %551 = math.exp %550 : vector<8x32xf32>
    %cst_315 = arith.constant 1.000000e+00 : f32
    %552 = vector.broadcast %cst_315 : f32 to vector<8x32xf32>
    %553 = arith.addf %552, %551 : vector<8x32xf32>
    %554 = arith.divf %552, %553 : vector<8x32xf32>
    %555 = arith.addf %542, %331 : vector<8x32xf32>
    %556 = arith.mulf %548, %555 : vector<8x32xf32>
    %557 = arith.addf %539, %556 : vector<8x32xf32>
    %558 = math.tanh %557 : vector<8x32xf32>
    %cst_316 = arith.constant 1.000000e+00 : f32
    %559 = vector.broadcast %cst_316 : f32 to vector<8x32xf32>
    %560 = arith.subf %559, %554 : vector<8x32xf32>
    %561 = arith.mulf %560, %558 : vector<8x32xf32>
    %562 = arith.mulf %554, %530 : vector<8x32xf32>
    %563 = arith.addf %561, %562 : vector<8x32xf32>
    %c0_317 = arith.constant 0 : index
    %c56_318 = arith.constant 56 : index
    %c0_319 = arith.constant 0 : index
    %564 = vector.load %arg16[%c0_317, %c56_318, %c0_319] : memref<3x64x32xf32, #tpu.memory_space<vmem>>, vector<1x8x32xf32>
    %565 = vector.shape_cast %564 : vector<1x8x32xf32> to vector<8x32xf32>
    %566 = arith.addf %565, %307 : vector<8x32xf32>
    %c1_320 = arith.constant 1 : index
    %c56_321 = arith.constant 56 : index
    %c0_322 = arith.constant 0 : index
    %567 = vector.load %arg16[%c1_320, %c56_321, %c0_322] : memref<3x64x32xf32, #tpu.memory_space<vmem>>, vector<1x8x32xf32>
    %568 = vector.shape_cast %567 : vector<1x8x32xf32> to vector<8x32xf32>
    %569 = arith.addf %568, %314 : vector<8x32xf32>
    %c2_323 = arith.constant 2 : index
    %c56_324 = arith.constant 56 : index
    %c0_325 = arith.constant 0 : index
    %570 = vector.load %arg16[%c2_323, %c56_324, %c0_325] : memref<3x64x32xf32, #tpu.memory_space<vmem>>, vector<1x8x32xf32>
    %571 = vector.shape_cast %570 : vector<1x8x32xf32> to vector<8x32xf32>
    %572 = arith.addf %571, %321 : vector<8x32xf32>
    %cst_326 = arith.constant dense<0.000000e+00> : vector<8x32xf32>
    %573 = tpu.matmul %563, %323, %cst_326 {dimension_numbers = #tpu.dot_dimension_numbers<[1], [0], [0], [1], [0, 0, 1, 1], [], []>} : vector<8x32xf32>, vector<32x32xf32>, vector<8x32xf32> -> vector<8x32xf32>
    %cst_327 = arith.constant dense<0.000000e+00> : vector<8x32xf32>
    %574 = tpu.matmul %563, %325, %cst_327 {dimension_numbers = #tpu.dot_dimension_numbers<[1], [0], [0], [1], [0, 0, 1, 1], [], []>} : vector<8x32xf32>, vector<32x32xf32>, vector<8x32xf32> -> vector<8x32xf32>
    %cst_328 = arith.constant dense<0.000000e+00> : vector<8x32xf32>
    %575 = tpu.matmul %563, %327, %cst_328 {dimension_numbers = #tpu.dot_dimension_numbers<[1], [0], [0], [1], [0, 0, 1, 1], [], []>} : vector<8x32xf32>, vector<32x32xf32>, vector<8x32xf32> -> vector<8x32xf32>
    %576 = arith.addf %566, %573 : vector<8x32xf32>
    %577 = arith.negf %576 : vector<8x32xf32>
    %578 = math.exp %577 : vector<8x32xf32>
    %cst_329 = arith.constant 1.000000e+00 : f32
    %579 = vector.broadcast %cst_329 : f32 to vector<8x32xf32>
    %580 = arith.addf %579, %578 : vector<8x32xf32>
    %581 = arith.divf %579, %580 : vector<8x32xf32>
    %582 = arith.addf %569, %574 : vector<8x32xf32>
    %583 = arith.negf %582 : vector<8x32xf32>
    %584 = math.exp %583 : vector<8x32xf32>
    %cst_330 = arith.constant 1.000000e+00 : f32
    %585 = vector.broadcast %cst_330 : f32 to vector<8x32xf32>
    %586 = arith.addf %585, %584 : vector<8x32xf32>
    %587 = arith.divf %585, %586 : vector<8x32xf32>
    %588 = arith.addf %575, %331 : vector<8x32xf32>
    %589 = arith.mulf %581, %588 : vector<8x32xf32>
    %590 = arith.addf %572, %589 : vector<8x32xf32>
    %591 = math.tanh %590 : vector<8x32xf32>
    %cst_331 = arith.constant 1.000000e+00 : f32
    %592 = vector.broadcast %cst_331 : f32 to vector<8x32xf32>
    %593 = arith.subf %592, %587 : vector<8x32xf32>
    %594 = arith.mulf %593, %591 : vector<8x32xf32>
    %595 = arith.mulf %587, %563 : vector<8x32xf32>
    %596 = arith.addf %594, %595 : vector<8x32xf32>
    %c0_332 = arith.constant 0 : index
    %c0_333 = arith.constant 0 : index
    %597 = vector.load %arg10[%c0_332, %c0_333] : memref<32x16xf32, #tpu.memory_space<vmem>>, vector<32x16xf32>
    %cst_334 = arith.constant dense<0.000000e+00> : vector<8x16xf32>
    %598 = tpu.matmul %596, %597, %cst_334 {dimension_numbers = #tpu.dot_dimension_numbers<[1], [0], [0], [1], [0, 0, 1, 1], [], []>} : vector<8x32xf32>, vector<32x16xf32>, vector<8x16xf32> -> vector<8x16xf32>
    %c0_335 = arith.constant 0 : index
    %c0_336 = arith.constant 0 : index
    %599 = vector.load %arg11[%c0_335, %c0_336] : memref<1x16xf32, #tpu.memory_space<vmem>>, vector<1x16xf32>
    %600 = vector.broadcast %599 : vector<1x16xf32> to vector<8x16xf32>
    %601 = arith.addf %598, %600 : vector<8x16xf32>
    %c0_337 = arith.constant 0 : index
    %c0_338 = arith.constant 0 : index
    %602 = vector.load %arg12[%c0_337, %c0_338] : memref<1x16xf32, #tpu.memory_space<vmem>>, vector<1x16xf32>
    %603 = vector.broadcast %602 : vector<1x16xf32> to vector<8x16xf32>
    %604 = arith.mulf %601, %603 : vector<8x16xf32>
    %cst_339 = arith.constant dense<0.000000e+00> : vector<8xf32>
    %605 = vector.multi_reduction <add>, %604, %cst_339 [1] : vector<8x16xf32> to vector<8xf32>
    %606 = vector.shape_cast %605 : vector<8xf32> to vector<8x1xf32>
    %c0_340 = arith.constant 0 : index
    %c0_341 = arith.constant 0 : index
    %607 = vector.load %arg13[%c0_340, %c0_341] : memref<1x1xf32, #tpu.memory_space<vmem>>, vector<1x1xf32>
    %608 = vector.broadcast %607 : vector<1x1xf32> to vector<8x1xf32>
    %609 = arith.addf %606, %608 : vector<8x1xf32>
    %c0_342 = arith.constant 0 : index
    %c0_343 = arith.constant 0 : index
    %610 = vector.load %arg14[%c0_342, %c0_343] : memref<8x1xf32, #tpu.memory_space<vmem>>, vector<8x1xf32>
    tpu.vector_store %arg14[%c0_342, %c0_343], %609 {strides = array<i32>} : memref<8x1xf32, #tpu.memory_space<vmem>>, vector<8x1xf32>,
    return
  }
}

</mosaic_0001>

<llo_original>
// kernel: discriminator_forward.1
$region0: #{discriminator_forward.1}
  #allocation0 [shape = 'u32[]', space=smem, size = 0x4, offset = 0x4, fixed_abs, tag = 'smem constant byte address 0x4 - core index']
  #allocation1 [shape = 'u32[144,128]{1,0:T(1,128)}', space=vmem, size = 0x12000, scoped, tag = 'internal scratch']
  #allocation2 [shape = 'f32[3,64,32]{2,1,0:T(8,128)}', space=vmem, size = 0x18000, scoped, tag = 'scratch operand']
  #allocation3 [shape = 'f32[3,64,32]{2,1,0:T(8,128)}', space=vmem, size = 0x18000, scoped, tag = 'scratch operand']
  #allocation4 [shape = 'f32[1,1]{1,0:T(1,128)S(1)}', space=vmem, size = 0x200, scoped, tag = 'scoped memory for discriminator_forward.1']
  %s0 = inlined_call_operand.vmem [shape: f32[64,32], index: 0, kind: input, shape index: {}]
  %s1 = inlined_call_operand.vmem [shape: f32[64,32], index: 1, kind: input, shape index: {}]
  %s2 = inlined_call_operand.vmem [shape: f32[8,32], index: 2, kind: input, shape index: {}]
  %s3 = inlined_call_operand.vmem [shape: f32[3,32,32], index: 3, kind: input, shape index: {}]
  %s4 = inlined_call_operand.vmem [shape: f32[3,32,32], index: 4, kind: input, shape index: {}]
  %s5 = inlined_call_operand.vmem [shape: f32[4,1,32], index: 5, kind: input, shape index: {}]
  %s6 = inlined_call_operand.vmem [shape: f32[3,32,32], index: 6, kind: input, shape index: {}]
  %s7 = inlined_call_operand.vmem [shape: f32[3,32,32], index: 7, kind: input, shape index: {}]
  %s8 = inlined_call_operand.vmem [shape: f32[3,32,32], index: 8, kind: input, shape index: {}]
  %s9 = inlined_call_operand.vmem [shape: f32[4,1,32], index: 9, kind: input, shape index: {}]
  %s10 = inlined_call_operand.vmem [shape: f32[32,16], index: 10, kind: input, shape index: {}]
  %s11 = inlined_call_operand.vmem [shape: f32[1,16], index: 11, kind: input, shape index: {}]
  %s12 = inlined_call_operand.vmem [shape: f32[1,16], index: 12, kind: input, shape index: {}]
  %s13 = inlined_call_operand.<no memory space> [shape: f32[1,1], index: 13, kind: input, shape index: {}]
  %s14 = inlined_call_operand.vmem [shape: f32[8,1], index: 14, kind: output, shape index: {}]
  %s15 = sld [smem:[#allocation0]]
  $region66: #{discriminator_forward.1} parent=0
    _
  %s17 = ssub.s32 1, %s15
  %s18 = scalar_select 0, %s17, %s15
  %v19 = vstv %s13
  %20 = vst [vmem:[#allocation4] sm:$0x1] %v19
  // Predicated region
  $region2: #{discriminator_forward.1} parent=0 // pred_check
    _
  $region3: #{discriminator_forward.1} parent=0 // pred_check_branch
    %22 = sbr.rel (0) target = $region5
  $region4: #{discriminator_forward.1} parent=0 // pred_region
    _
  $region5: #{discriminator_forward.1} parent=0 // pred_fallthru
    _
  // Predicated region
  $region6: #{discriminator_forward.1} parent=0 // pred_check
    _
  $region7: #{discriminator_forward.1} parent=0 // pred_check_branch
    %24 = sbr.rel (0) target = $region9
  $region8: #{discriminator_forward.1} parent=0 // pred_region
    _
  $region9: #{discriminator_forward.1} parent=0 // pred_fallthru
    _
  // Predicated region
  $region10: #{discriminator_forward.1} parent=0 // pred_check
    _
  $region11: #{discriminator_forward.1} parent=0 // pred_check_branch
    %26 = sbr.rel (0) target = $region13
  $region12: #{discriminator_forward.1} parent=0 // pred_region
    _
  $region13: #{discriminator_forward.1} parent=0 // pred_fallthru
    _
  // Predicated region
  $region14: #{discriminator_forward.1} parent=0 // pred_check
    _
  $region15: #{discriminator_forward.1} parent=0 // pred_check_branch
    %28 = sbr.rel (0) target = $region17
  $region16: #{discriminator_forward.1} parent=0 // pred_region
    _
  $region17: #{discriminator_forward.1} parent=0 // pred_fallthru
    _
  // Predicated region
  $region18: #{discriminator_forward.1} parent=0 // pred_check
    _
  $region19: #{discriminator_forward.1} parent=0 // pred_check_branch
    %30 = sbr.rel (0) target = $region21
  $region20: #{discriminator_forward.1} parent=0 // pred_region
    _
  $region21: #{discriminator_forward.1} parent=0 // pred_fallthru
    _
  // Predicated region
  $region22: #{discriminator_forward.1} parent=0 // pred_check
    _
  $region23: #{discriminator_forward.1} parent=0 // pred_check_branch
    %32 = sbr.rel (0) target = $region25
  $region24: #{discriminator_forward.1} parent=0 // pred_region
    _
  $region25: #{discriminator_forward.1} parent=0 // pred_fallthru
    _
  // Predicated region
  $region26: #{discriminator_forward.1} parent=0 // pred_check
    _
  $region27: #{discriminator_forward.1} parent=0 // pred_check_branch
    %34 = sbr.rel (0) target = $region29
  $region28: #{discriminator_forward.1} parent=0 // pred_region
    _
  $region29: #{discriminator_forward.1} parent=0 // pred_fallthru
    _
  // Predicated region
  $region30: #{discriminator_forward.1} parent=0 // pred_check
    _
  $region31: #{discriminator_forward.1} parent=0 // pred_check_branch
    %36 = sbr.rel (0) target = $region33
  $region32: #{discriminator_forward.1} parent=0 // pred_region
    _
  $region33: #{discriminator_forward.1} parent=0 // pred_fallthru
    _
  // Predicated region
  $region34: #{discriminator_forward.1} parent=0 // pred_check
    _
  $region35: #{discriminator_forward.1} parent=0 // pred_check_branch
    %38 = sbr.rel (0) target = $region37
  $region36: #{discriminator_forward.1} parent=0 // pred_region
    _
  $region37: #{discriminator_forward.1} parent=0 // pred_fallthru
    _
  // Predicated region
  $region38: #{discriminator_forward.1} parent=0 // pred_check
    _
  $region39: #{discriminator_forward.1} parent=0 // pred_check_branch
    %40 = sbr.rel (0) target = $region41
  $region40: #{discriminator_forward.1} parent=0 // pred_region
    _
  $region41: #{discriminator_forward.1} parent=0 // pred_fallthru
    _
  // Predicated region
  $region42: #{discriminator_forward.1} parent=0 // pred_check
    _
  $region43: #{discriminator_forward.1} parent=0 // pred_check_branch
    %42 = sbr.rel (0) target = $region45
  $region44: #{discriminator_forward.1} parent=0 // pred_region
    _
  $region45: #{discriminator_forward.1} parent=0 // pred_fallthru
    _
  // Predicated region
  $region46: #{discriminator_forward.1} parent=0 // pred_check
    _
  $region47: #{discriminator_forward.1} parent=0 // pred_check_branch
    %44 = sbr.rel (0) target = $region49
  $region48: #{discriminator_forward.1} parent=0 // pred_region
    _
  $region49: #{discriminator_forward.1} parent=0 // pred_fallthru
    _
  // Predicated region
  $region50: #{discriminator_forward.1} parent=0 // pred_check
    _
  $region51: #{discriminator_forward.1} parent=0 // pred_check_branch
    %46 = sbr.rel (0) target = $region53
  $region52: #{discriminator_forward.1} parent=0 // pred_region
    _
  $region53: #{discriminator_forward.1} parent=0 // pred_fallthru
    _
  // Predicated region
  $region54: #{discriminator_forward.1} parent=0 // pred_check
    _
  $region55: #{discriminator_forward.1} parent=0 // pred_check_branch
    %48 = sbr.rel (0) target = $region57
  $region56: #{discriminator_forward.1} parent=0 // pred_region
    _
  $region57: #{discriminator_forward.1} parent=0 // pred_fallthru
    _
  %v49 = vld [vmem:[%s0] sm:$0xff]
  %v50 = vld [vmem:[%s0 + $0x8] sm:$0xff]
  %v51 = vld [vmem:[%s0 + $0x10] sm:$0xff]
  %v52 = vld [vmem:[%s0 + $0x18] sm:$0xff]
  %v53 = vld [vmem:[%s0 + $0x20] sm:$0xff]
  %v54 = vld [vmem:[%s0 + $0x28] sm:$0xff]
  %v55 = vld [vmem:[%s0 + $0x30] sm:$0xff]
  %v56 = vld [vmem:[%s0 + $0x38] sm:$0xff]
  %v57 = vld [vmem:[%s3] sm:$0xff]
  %v58 = vld [vmem:[%s3 + $0x8] sm:$0xff]
  %v59 = vld [vmem:[%s3 + $0x10] sm:$0xff]
  %v60 = vld [vmem:[%s3 + $0x18] sm:$0xff]
  %v61 = vld [vmem:[%s5] sm:$0x1]
  %v63 = vlaneseq
  %v64 = vshrl.u32 %v63, 7
  %v65 = vsub.s32 0, %v64
  %v66 = vrot.slane %v61, %v65
  %vm68 = vcmask 261120
  %v70 = vsel %vm68, %v49, 0
  %v73 = vsel %vm68, %v50, 0
  %v76 = vsel %vm68, %v51, 0
  %v79 = vsel %vm68, %v52, 0
  %v82 = vsel %vm68, %v53, 0
  %v85 = vsel %vm68, %v54, 0
  %v88 = vsel %vm68, %v55, 0
  %v91 = vsel %vm68, %v56, 0
  %93 = vmatprep.subr.mxu0 0.0
  %94 = vmatpush1.msra.mxu0 %v57
  %95 = vmatprep.subr.mxu0 0.0
  %96 = vmatpush1.msra.mxu0 %v58
  %97 = vmatprep.subr.mxu0 0.0
  %98 = vmatpush1.msra.mxu0 %v59
  %99 = vmatprep.subr.mxu0 0.0
  %100 = vmatpush1.msra.mxu0 %v60
  %101 = vmatprep.subr.mxu0 0.0
  %102 = vmatpush1.msra.mxu0 0.0
  %103 = vmatprep.subr.mxu0 0.0
  %104 = vmatpush1.msra.mxu0 0.0
  %105 = vmatprep.subr.mxu0 0.0
  %106 = vmatpush1.msra.mxu0 0.0
  %107 = vmatprep.subr.mxu0 0.0
  %108 = vmatpush1.msra.mxu0 0.0
  %109 = vmatprep.subr.mxu0 0.0
  %110 = vmatpush1.msra.mxu0 0.0
  %111 = vmatprep.subr.mxu0 0.0
  %112 = vmatpush1.msra.mxu0 0.0
  %113 = vmatprep.subr.mxu0 0.0
  %114 = vmatpush1.msra.mxu0 0.0
  %115 = vmatprep.subr.mxu0 0.0
  %116 = vmatpush1.msra.mxu0 0.0
  %117 = vmatprep.subr.mxu0 0.0
  %118 = vmatpush1.msra.mxu0 0.0
  %119 = vmatprep.subr.mxu0 0.0
  %120 = vmatpush1.msra.mxu0 0.0
  %121 = vmatprep.subr.mxu0 0.0
  %122 = vmatpush1.msra.mxu0 0.0
  %123 = vmatprep.subr.mxu0 0.0
  %124 = vmatpush1.msra.mxu0 0.0
  %125 = vmatprep.subr.mxu0 0.0
  %126 = vmatpush1.msra.mxu0 0.0
  %127 = vmatprep.subr.mxu0 0.0
  %128 = vmatpush1.msra.mxu0 0.0
  %129 = vmatprep.subr.mxu0 0.0
  %130 = vmatpush1.msra.mxu0 0.0
  %131 = vmatprep.subr.mxu0 0.0
  %132 = vmatpush1.msra.mxu0 0.0
  %133 = vmatprep.subr.mxu0 0.0
  %134 = vmatpush1.msra.mxu0 0.0
  %135 = vmatprep.subr.mxu0 0.0
  %136 = vmatpush1.msra.mxu0 0.0
  %137 = vmatprep.subr.mxu0 0.0
  %138 = vmatpush1.msra.mxu0 0.0
  %139 = vmatprep.subr.mxu0 0.0
  %140 = vmatpush1.msra.mxu0 0.0
  %141 = vmatprep.subr.mxu0 0.0
  %142 = vmatpush1.msra.mxu0 0.0
  %143 = vmatprep.subr.mxu0 0.0
  %144 = vmatpush1.msra.mxu0 0.0
  %145 = vmatprep.subr.mxu0 0.0
  %146 = vmatpush1.msra.mxu0 0.0
  %147 = vmatprep.subr.mxu0 0.0
  %148 = vmatpush1.msra.mxu0 0.0
  %149 = vmatprep.subr.mxu0 0.0
  %150 = vmatpush1.msra.mxu0 0.0
  %151 = vmatprep.subr.mxu0 0.0
  %152 = vmatpush1.msra.mxu0 0.0
  %153 = vmatprep.subr.mxu0 0.0
  %154 = vmatpush1.msra.mxu0 0.0
  %155 = vmatprep.subr.mxu0 0.0
  %156 = vmatpush1.msra.mxu0 0.0
  %157 = vmatprep.mubr.f32.mxu0 0.0
  %158 = vmatmul.mubr.f32.gmra.mrb[0].mxu0 %v70
  %v159 = vpop.f32.mrb[0].mxu0
  %v160 = vadd.f32 %v66, %v159
  %v161 = vpop.f32.mrb[0].mxu0
  %162 = vmatprep.mubr.f32.mxu0 0.0
  %163 = vmatmul.mubr.f32.gmra.mrb[0].mxu0 %v73
  %v164 = vpop.f32.mrb[0].mxu0
  %v165 = vadd.f32 %v66, %v164
  %v166 = vpop.f32.mrb[0].mxu0
  %167 = vmatprep.mubr.f32.mxu0 0.0
  %168 = vmatmul.mubr.f32.gmra.mrb[0].mxu0 %v76
  %v169 = vpop.f32.mrb[0].mxu0
  %v170 = vadd.f32 %v66, %v169
  %v171 = vpop.f32.mrb[0].mxu0
  %172 = vmatprep.mubr.f32.mxu0 0.0
  %173 = vmatmul.mubr.f32.gmra.mrb[0].mxu0 %v79
  %v174 = vpop.f32.mrb[0].mxu0
  %v175 = vadd.f32 %v66, %v174
  %v176 = vpop.f32.mrb[0].mxu0
  %177 = vmatprep.mubr.f32.mxu0 0.0
  %178 = vmatmul.mubr.f32.gmra.mrb[0].mxu0 %v82
  %v179 = vpop.f32.mrb[0].mxu0
  %v180 = vadd.f32 %v66, %v179
  %v181 = vpop.f32.mrb[0].mxu0
  %182 = vmatprep.mubr.f32.mxu0 0.0
  %183 = vmatmul.mubr.f32.gmra.mrb[0].mxu0 %v85
  %v184 = vpop.f32.mrb[0].mxu0
  %v185 = vadd.f32 %v66, %v184
  %v186 = vpop.f32.mrb[0].mxu0
  %187 = vmatprep.mubr.f32.mxu0 0.0
  %188 = vmatmul.mubr.f32.gmra.mrb[0].mxu0 %v88
  %v189 = vpop.f32.mrb[0].mxu0
  %v190 = vadd.f32 %v66, %v189
  %v191 = vpop.f32.mrb[0].mxu0
  %192 = vmatprep.mubr.f32.mxu0 0.0
  %193 = vmatmul.mubr.f32.gmra.mrb[0].mxu0 %v91
  %v194 = vpop.f32.mrb[0].mxu0
  %v195 = vadd.f32 %v66, %v194
  %v196 = vpop.f32.mrb[0].mxu0
  %197 = vdwg.mxu0
  %198 = vst.msk [vmem:[#allocation2] sm:$0xff] %vm68, %v160
  %199 = vst.msk [vmem:[#allocation2 + $0x8] sm:$0xff] %vm68, %v165
  %200 = vst.msk [vmem:[#allocation2 + $0x10] sm:$0xff] %vm68, %v170
  %201 = vst.msk [vmem:[#allocation2 + $0x18] sm:$0xff] %vm68, %v175
  %202 = vst.msk [vmem:[#allocation2 + $0x20] sm:$0xff] %vm68, %v180
  %203 = vst.msk [vmem:[#allocation2 + $0x28] sm:$0xff] %vm68, %v185
  %204 = vst.msk [vmem:[#allocation2 + $0x30] sm:$0xff] %vm68, %v190
  %205 = vst.msk [vmem:[#allocation2 + $0x38] sm:$0xff] %vm68, %v195
  %s206 = scalar_lea.vmem %s3, 32
  %v207 = vld [vmem:[%s206] sm:$0xff]
  %v208 = vld [vmem:[%s206 + $0x8] sm:$0xff]
  %v209 = vld [vmem:[%s206 + $0x10] sm:$0xff]
  %v210 = vld [vmem:[%s206 + $0x18] sm:$0xff]
  %s211 = scalar_lea.vmem %s5, 1
  %v212 = vld [vmem:[%s211] sm:$0x1]
  %v214 = vlaneseq
  %v215 = vshrl.u32 %v214, 7
  %v216 = vsub.s32 0, %v215
  %v217 = vrot.slane %v212, %v216
  %219 = vmatprep.subr.mxu0 0.0
  %220 = vmatpush1.msra.mxu0 %v207
  %221 = vmatprep.subr.mxu0 0.0
  %222 = vmatpush1.msra.mxu0 %v208
  %223 = vmatprep.subr.mxu0 0.0
  %224 = vmatpush1.msra.mxu0 %v209
  %225 = vmatprep.subr.mxu0 0.0
  %226 = vmatpush1.msra.mxu0 %v210
  %227 = vmatprep.subr.mxu0 0.0
  %228 = vmatpush1.msra.mxu0 0.0
  %229 = vmatprep.subr.mxu0 0.0
  %230 = vmatpush1.msra.mxu0 0.0
  %231 = vmatprep.subr.mxu0 0.0
  %232 = vmatpush1.msra.mxu0 0.0
  %233 = vmatprep.subr.mxu0 0.0
  %234 = vmatpush1.msra.mxu0 0.0
  %235 = vmatprep.subr.mxu0 0.0
  %236 = vmatpush1.msra.mxu0 0.0
  %237 = vmatprep.subr.mxu0 0.0
  %238 = vmatpush1.msra.mxu0 0.0
  %239 = vmatprep.subr.mxu0 0.0
  %240 = vmatpush1.msra.mxu0 0.0
  %241 = vmatprep.subr.mxu0 0.0
  %242 = vmatpush1.msra.mxu0 0.0
  %243 = vmatprep.subr.mxu0 0.0
  %244 = vmatpush1.msra.mxu0 0.0
  %245 = vmatprep.subr.mxu0 0.0
  %246 = vmatpush1.msra.mxu0 0.0
  %247 = vmatprep.subr.mxu0 0.0
  %248 = vmatpush1.msra.mxu0 0.0
  %249 = vmatprep.subr.mxu0 0.0
  %250 = vmatpush1.msra.mxu0 0.0
  %251 = vmatprep.subr.mxu0 0.0
  %252 = vmatpush1.msra.mxu0 0.0
  %253 = vmatprep.subr.mxu0 0.0
  %254 = vmatpush1.msra.mxu0 0.0
  %255 = vmatprep.subr.mxu0 0.0
  %256 = vmatpush1.msra.mxu0 0.0
  %257 = vmatprep.subr.mxu0 0.0
  %258 = vmatpush1.msra.mxu0 0.0
  %259 = vmatprep.subr.mxu0 0.0
  %260 = vmatpush1.msra.mxu0 0.0
  %261 = vmatprep.subr.mxu0 0.0
  %262 = vmatpush1.msra.mxu0 0.0
  %263 = vmatprep.subr.mxu0 0.0
  %264 = vmatpush1.msra.mxu0 0.0
  %265 = vmatprep.subr.mxu0 0.0
  %266 = vmatpush1.msra.mxu0 0.0
  %267 = vmatprep.subr.mxu0 0.0
  %268 = vmatpush1.msra.mxu0 0.0
  %269 = vmatprep.subr.mxu0 0.0
  %270 = vmatpush1.msra.mxu0 0.0
  %271 = vmatprep.subr.mxu0 0.0
  %272 = vmatpush1.msra.mxu0 0.0
  %273 = vmatprep.subr.mxu0 0.0
  %274 = vmatpush1.msra.mxu0 0.0
  %275 = vmatprep.subr.mxu0 0.0
  %276 = vmatpush1.msra.mxu0 0.0
  %277 = vmatprep.subr.mxu0 0.0
  %278 = vmatpush1.msra.mxu0 0.0
  %279 = vmatprep.subr.mxu0 0.0
  %280 = vmatpush1.msra.mxu0 0.0
  %281 = vmatprep.subr.mxu0 0.0
  %282 = vmatpush1.msra.mxu0 0.0
  %283 = vmatprep.mubr.f32.mxu0 0.0
  %284 = vmatmul.mubr.f32.gmra.mrb[0].mxu0 %v70
  %v285 = vpop.f32.mrb[0].mxu0
  %v286 = vadd.f32 %v217, %v285
  %v287 = vpop.f32.mrb[0].mxu0
  %288 = vmatprep.mubr.f32.mxu0 0.0
  %289 = vmatmul.mubr.f32.gmra.mrb[0].mxu0 %v73
  %v290 = vpop.f32.mrb[0].mxu0
  %v291 = vadd.f32 %v217, %v290
  %v292 = vpop.f32.mrb[0].mxu0
  %293 = vmatprep.mubr.f32.mxu0 0.0
  %294 = vmatmul.mubr.f32.gmra.mrb[0].mxu0 %v76
  %v295 = vpop.f32.mrb[0].mxu0
  %v296 = vadd.f32 %v217, %v295
  %v297 = vpop.f32.mrb[0].mxu0
  %298 = vmatprep.mubr.f32.mxu0 0.0
  %299 = vmatmul.mubr.f32.gmra.mrb[0].mxu0 %v79
  %v300 = vpop.f32.mrb[0].mxu0
  %v301 = vadd.f32 %v217, %v300
  %v302 = vpop.f32.mrb[0].mxu0
  %303 = vmatprep.mubr.f32.mxu0 0.0
  %304 = vmatmul.mubr.f32.gmra.mrb[0].mxu0 %v82
  %v305 = vpop.f32.mrb[0].mxu0
  %v306 = vadd.f32 %v217, %v305
  %v307 = vpop.f32.mrb[0].mxu0
  %308 = vmatprep.mubr.f32.mxu0 0.0
  %309 = vmatmul.mubr.f32.gmra.mrb[0].mxu0 %v85
  %v310 = vpop.f32.mrb[0].mxu0
  %v311 = vadd.f32 %v217, %v310
  %v312 = vpop.f32.mrb[0].mxu0
  %313 = vmatprep.mubr.f32.mxu0 0.0
  %314 = vmatmul.mubr.f32.gmra.mrb[0].mxu0 %v88
  %v315 = vpop.f32.mrb[0].mxu0
  %v316 = vadd.f32 %v217, %v315
  %v317 = vpop.f32.mrb[0].mxu0
  %318 = vmatprep.mubr.f32.mxu0 0.0
  %319 = vmatmul.mubr.f32.gmra.mrb[0].mxu0 %v91
  %v320 = vpop.f32.mrb[0].mxu0
  %v321 = vadd.f32 %v217, %v320
  %v322 = vpop.f32.mrb[0].mxu0
  %323 = vdwg.mxu0
  %s324 = scalar_lea.vmem [#allocation2], 64
  %325 = vst.msk [vmem:[%s324] sm:$0xff] %vm68, %v286
  %326 = vst.msk [vmem:[%s324 + $0x8] sm:$0xff] %vm68, %v291
  %327 = vst.msk [vmem:[%s324 + $0x10] sm:$0xff] %vm68, %v296
  %328 = vst.msk [vmem:[%s324 + $0x18] sm:$0xff] %vm68, %v301
  %329 = vst.msk [vmem:[%s324 + $0x20] sm:$0xff] %vm68, %v306
  %330 = vst.msk [vmem:[%s324 + $0x28] sm:$0xff] %vm68, %v311
  %331 = vst.msk [vmem:[%s324 + $0x30] sm:$0xff] %vm68, %v316
  %332 = vst.msk [vmem:[%s324 + $0x38] sm:$0xff] %vm68, %v321
  %s333 = scalar_lea.vmem %s3, 64
  %v334 = vld [vmem:[%s333] sm:$0xff]
  %v335 = vld [vmem:[%s333 + $0x8] sm:$0xff]
  %v336 = vld [vmem:[%s333 + $0x10] sm:$0xff]
  %v337 = vld [vmem:[%s333 + $0x18] sm:$0xff]
  %s338 = scalar_lea.vmem %s5, 2
  %v339 = vld [vmem:[%s338] sm:$0x1]
  %v341 = vlaneseq
  %v342 = vshrl.u32 %v341, 7
  %v343 = vsub.s32 0, %v342
  %v344 = vrot.slane %v339, %v343
  %346 = vmatprep.subr.mxu0 0.0
  %347 = vmatpush1.msra.mxu0 %v334
  %348 = vmatprep.subr.mxu0 0.0
  %349 = vmatpush1.msra.mxu0 %v335
  %350 = vmatprep.subr.mxu0 0.0
  %351 = vmatpush1.msra.mxu0 %v336
  %352 = vmatprep.subr.mxu0 0.0
  %353 = vmatpush1.msra.mxu0 %v337
  %354 = vmatprep.subr.mxu0 0.0
  %355 = vmatpush1.msra.mxu0 0.0
  %356 = vmatprep.subr.mxu0 0.0
  %357 = vmatpush1.msra.mxu0 0.0
  %358 = vmatprep.subr.mxu0 0.0
  %359 = vmatpush1.msra.mxu0 0.0
  %360 = vmatprep.subr.mxu0 0.0
  %361 = vmatpush1.msra.mxu0 0.0
  %362 = vmatprep.subr.mxu0 0.0
  %363 = vmatpush1.msra.mxu0 0.0
  %364 = vmatprep.subr.mxu0 0.0
  %365 = vmatpush1.msra.mxu0 0.0
  %366 = vmatprep.subr.mxu0 0.0
  %367 = vmatpush1.msra.mxu0 0.0
  %368 = vmatprep.subr.mxu0 0.0
  %369 = vmatpush1.msra.mxu0 0.0
  %370 = vmatprep.subr.mxu0 0.0
  %371 = vmatpush1.msra.mxu0 0.0
  %372 = vmatprep.subr.mxu0 0.0
  %373 = vmatpush1.msra.mxu0 0.0
  %374 = vmatprep.subr.mxu0 0.0
  %375 = vmatpush1.msra.mxu0 0.0
  %376 = vmatprep.subr.mxu0 0.0
  %377 = vmatpush1.msra.mxu0 0.0
  %378 = vmatprep.subr.mxu0 0.0
  %379 = vmatpush1.msra.mxu0 0.0
  %380 = vmatprep.subr.mxu0 0.0
  %381 = vmatpush1.msra.mxu0 0.0
  %382 = vmatprep.subr.mxu0 0.0
  %383 = vmatpush1.msra.mxu0 0.0
  %384 = vmatprep.subr.mxu0 0.0
  %385 = vmatpush1.msra.mxu0 0.0
  %386 = vmatprep.subr.mxu0 0.0
  %387 = vmatpush1.msra.mxu0 0.0
  %388 = vmatprep.subr.mxu0 0.0
  %389 = vmatpush1.msra.mxu0 0.0
  %390 = vmatprep.subr.mxu0 0.0
  %391 = vmatpush1.msra.mxu0 0.0
  %392 = vmatprep.subr.mxu0 0.0
  %393 = vmatpush1.msra.mxu0 0.0
  %394 = vmatprep.subr.mxu0 0.0
  %395 = vmatpush1.msra.mxu0 0.0
  %396 = vmatprep.subr.mxu0 0.0
  %397 = vmatpush1.msra.mxu0 0.0
  %398 = vmatprep.subr.mxu0 0.0
  %399 = vmatpush1.msra.mxu0 0.0
  %400 = vmatprep.subr.mxu0 0.0
  %401 = vmatpush1.msra.mxu0 0.0
  %402 = vmatprep.subr.mxu0 0.0
  %403 = vmatpush1.msra.mxu0 0.0
  %404 = vmatprep.subr.mxu0 0.0
  %405 = vmatpush1.msra.mxu0 0.0
  %406 = vmatprep.subr.mxu0 0.0
  %407 = vmatpush1.msra.mxu0 0.0
  %408 = vmatprep.subr.mxu0 0.0
  %409 = vmatpush1.msra.mxu0 0.0
  %410 = vmatprep.mubr.f32.mxu0 0.0
  %411 = vmatmul.mubr.f32.gmra.mrb[0].mxu0 %v70
  %v412 = vpop.f32.mrb[0].mxu0
  %v413 = vadd.f32 %v344, %v412
  %v414 = vpop.f32.mrb[0].mxu0
  %415 = vmatprep.mubr.f32.mxu0 0.0
  %416 = vmatmul.mubr.f32.gmra.mrb[0].mxu0 %v73
  %v417 = vpop.f32.mrb[0].mxu0
  %v418 = vadd.f32 %v344, %v417
  %v419 = vpop.f32.mrb[0].mxu0
  %420 = vmatprep.mubr.f32.mxu0 0.0
  %421 = vmatmul.mubr.f32.gmra.mrb[0].mxu0 %v76
  %v422 = vpop.f32.mrb[0].mxu0
  %v423 = vadd.f32 %v344, %v422
  %v424 = vpop.f32.mrb[0].mxu0
  %425 = vmatprep.mubr.f32.mxu0 0.0
  %426 = vmatmul.mubr.f32.gmra.mrb[0].mxu0 %v79
  %v427 = vpop.f32.mrb[0].mxu0
  %v428 = vadd.f32 %v344, %v427
  %v429 = vpop.f32.mrb[0].mxu0
  %430 = vmatprep.mubr.f32.mxu0 0.0
  %431 = vmatmul.mubr.f32.gmra.mrb[0].mxu0 %v82
  %v432 = vpop.f32.mrb[0].mxu0
  %v433 = vadd.f32 %v344, %v432
  %v434 = vpop.f32.mrb[0].mxu0
  %435 = vmatprep.mubr.f32.mxu0 0.0
  %436 = vmatmul.mubr.f32.gmra.mrb[0].mxu0 %v85
  %v437 = vpop.f32.mrb[0].mxu0
  %v438 = vadd.f32 %v344, %v437
  %v439 = vpop.f32.mrb[0].mxu0
  %440 = vmatprep.mubr.f32.mxu0 0.0
  %441 = vmatmul.mubr.f32.gmra.mrb[0].mxu0 %v88
  %v442 = vpop.f32.mrb[0].mxu0
  %v443 = vadd.f32 %v344, %v442
  %v444 = vpop.f32.mrb[0].mxu0
  %445 = vmatprep.mubr.f32.mxu0 0.0
  %446 = vmatmul.mubr.f32.gmra.mrb[0].mxu0 %v91
  %v447 = vpop.f32.mrb[0].mxu0
  %v448 = vadd.f32 %v344, %v447
  %v449 = vpop.f32.mrb[0].mxu0
  %450 = vdwg.mxu0
  %s451 = scalar_lea.vmem [#allocation2], 128
  %452 = vst.msk [vmem:[%s451] sm:$0xff] %vm68, %v413
  %453 = vst.msk [vmem:[%s451 + $0x8] sm:$0xff] %vm68, %v418
  %454 = vst.msk [vmem:[%s451 + $0x10] sm:$0xff] %vm68, %v423
  %455 = vst.msk [vmem:[%s451 + $0x18] sm:$0xff] %vm68, %v428
  %456 = vst.msk [vmem:[%s451 + $0x20] sm:$0xff] %vm68, %v433
  %457 = vst.msk [vmem:[%s451 + $0x28] sm:$0xff] %vm68, %v438
  %458 = vst.msk [vmem:[%s451 + $0x30] sm:$0xff] %vm68, %v443
  %459 = vst.msk [vmem:[%s451 + $0x38] sm:$0xff] %vm68, %v448
  %v460 = vld [vmem:[%s1] sm:$0xff]
  %v461 = vld [vmem:[%s1 + $0x8] sm:$0xff]
  %v462 = vld [vmem:[%s1 + $0x10] sm:$0xff]
  %v463 = vld [vmem:[%s1 + $0x18] sm:$0xff]
  %v464 = vld [vmem:[%s1 + $0x20] sm:$0xff]
  %v465 = vld [vmem:[%s1 + $0x28] sm:$0xff]
  %v466 = vld [vmem:[%s1 + $0x30] sm:$0xff]
  %v467 = vld [vmem:[%s1 + $0x38] sm:$0xff]
  %v468 = vld [vmem:[%s6] sm:$0xff]
  %v469 = vld [vmem:[%s6 + $0x8] sm:$0xff]
  %v470 = vld [vmem:[%s6 + $0x10] sm:$0xff]
  %v471 = vld [vmem:[%s6 + $0x18] sm:$0xff]
  %v473 = vsel %vm68, %v460, 0
  %v476 = vsel %vm68, %v461, 0
  %v479 = vsel %vm68, %v462, 0
  %v482 = vsel %vm68, %v463, 0
  %v485 = vsel %vm68, %v464, 0
  %v488 = vsel %vm68, %v465, 0
  %v491 = vsel %vm68, %v466, 0
  %v494 = vsel %vm68, %v467, 0
  %496 = vmatprep.subr.mxu0 0.0
  %497 = vmatpush1.msra.mxu0 %v468
  %498 = vmatprep.subr.mxu0 0.0
  %499 = vmatpush1.msra.mxu0 %v469
  %500 = vmatprep.subr.mxu0 0.0
  %501 = vmatpush1.msra.mxu0 %v470
  %502 = vmatprep.subr.mxu0 0.0
  %503 = vmatpush1.msra.mxu0 %v471
  %504 = vmatprep.subr.mxu0 0.0
  %505 = vmatpush1.msra.mxu0 0.0
  %506 = vmatprep.subr.mxu0 0.0
  %507 = vmatpush1.msra.mxu0 0.0
  %508 = vmatprep.subr.mxu0 0.0
  %509 = vmatpush1.msra.mxu0 0.0
  %510 = vmatprep.subr.mxu0 0.0
  %511 = vmatpush1.msra.mxu0 0.0
  %512 = vmatprep.subr.mxu0 0.0
  %513 = vmatpush1.msra.mxu0 0.0
  %514 = vmatprep.subr.mxu0 0.0
  %515 = vmatpush1.msra.mxu0 0.0
  %516 = vmatprep.subr.mxu0 0.0
  %517 = vmatpush1.msra.mxu0 0.0
  %518 = vmatprep.subr.mxu0 0.0
  %519 = vmatpush1.msra.mxu0 0.0
  %520 = vmatprep.subr.mxu0 0.0
  %521 = vmatpush1.msra.mxu0 0.0
  %522 = vmatprep.subr.mxu0 0.0
  %523 = vmatpush1.msra.mxu0 0.0
  %524 = vmatprep.subr.mxu0 0.0
  %525 = vmatpush1.msra.mxu0 0.0
  %526 = vmatprep.subr.mxu0 0.0
  %527 = vmatpush1.msra.mxu0 0.0
  %528 = vmatprep.subr.mxu0 0.0
  %529 = vmatpush1.msra.mxu0 0.0
  %530 = vmatprep.subr.mxu0 0.0
  %531 = vmatpush1.msra.mxu0 0.0
  %532 = vmatprep.subr.mxu0 0.0
  %533 = vmatpush1.msra.mxu0 0.0
  %534 = vmatprep.subr.mxu0 0.0
  %535 = vmatpush1.msra.mxu0 0.0
  %536 = vmatprep.subr.mxu0 0.0
  %537 = vmatpush1.msra.mxu0 0.0
  %538 = vmatprep.subr.mxu0 0.0
  %539 = vmatpush1.msra.mxu0 0.0
  %540 = vmatprep.subr.mxu0 0.0
  %541 = vmatpush1.msra.mxu0 0.0
  %542 = vmatprep.subr.mxu0 0.0
  %543 = vmatpush1.msra.mxu0 0.0
  %544 = vmatprep.subr.mxu0 0.0
  %545 = vmatpush1.msra.mxu0 0.0
  %546 = vmatprep.subr.mxu0 0.0
  %547 = vmatpush1.msra.mxu0 0.0
  %548 = vmatprep.subr.mxu0 0.0
  %549 = vmatpush1.msra.mxu0 0.0
  %550 = vmatprep.subr.mxu0 0.0
  %551 = vmatpush1.msra.mxu0 0.0
  %552 = vmatprep.subr.mxu0 0.0
  %553 = vmatpush1.msra.mxu0 0.0
  %554 = vmatprep.subr.mxu0 0.0
  %555 = vmatpush1.msra.mxu0 0.0
  %556 = vmatprep.subr.mxu0 0.0
  %557 = vmatpush1.msra.mxu0 0.0
  %558 = vmatprep.subr.mxu0 0.0
  %559 = vmatpush1.msra.mxu0 0.0
  %560 = vmatprep.mubr.f32.mxu0 0.0
  %561 = vmatmul.mubr.f32.gmra.mrb[0].mxu0 %v473
  %v562 = vpop.f32.mrb[0].mxu0
  %v563 = vadd.f32 0.0, %v562
  %v564 = vpop.f32.mrb[0].mxu0
  %565 = vmatprep.mubr.f32.mxu0 0.0
  %566 = vmatmul.mubr.f32.gmra.mrb[0].mxu0 %v476
  %v567 = vpop.f32.mrb[0].mxu0
  %v568 = vadd.f32 0.0, %v567
  %v569 = vpop.f32.mrb[0].mxu0
  %570 = vmatprep.mubr.f32.mxu0 0.0
  %571 = vmatmul.mubr.f32.gmra.mrb[0].mxu0 %v479
  %v572 = vpop.f32.mrb[0].mxu0
  %v573 = vadd.f32 0.0, %v572
  %v574 = vpop.f32.mrb[0].mxu0
  %575 = vmatprep.mubr.f32.mxu0 0.0
  %576 = vmatmul.mubr.f32.gmra.mrb[0].mxu0 %v482
  %v577 = vpop.f32.mrb[0].mxu0
  %v578 = vadd.f32 0.0, %v577
  %v579 = vpop.f32.mrb[0].mxu0
  %580 = vmatprep.mubr.f32.mxu0 0.0
  %581 = vmatmul.mubr.f32.gmra.mrb[0].mxu0 %v485
  %v582 = vpop.f32.mrb[0].mxu0
  %v583 = vadd.f32 0.0, %v582
  %v584 = vpop.f32.mrb[0].mxu0
  %585 = vmatprep.mubr.f32.mxu0 0.0
  %586 = vmatmul.mubr.f32.gmra.mrb[0].mxu0 %v488
  %v587 = vpop.f32.mrb[0].mxu0
  %v588 = vadd.f32 0.0, %v587
  %v589 = vpop.f32.mrb[0].mxu0
  %590 = vmatprep.mubr.f32.mxu0 0.0
  %591 = vmatmul.mubr.f32.gmra.mrb[0].mxu0 %v491
  %v592 = vpop.f32.mrb[0].mxu0
  %v593 = vadd.f32 0.0, %v592
  %v594 = vpop.f32.mrb[0].mxu0
  %595 = vmatprep.mubr.f32.mxu0 0.0
  %596 = vmatmul.mubr.f32.gmra.mrb[0].mxu0 %v494
  %v597 = vpop.f32.mrb[0].mxu0
  %v598 = vadd.f32 0.0, %v597
  %v599 = vpop.f32.mrb[0].mxu0
  %600 = vdwg.mxu0
  %601 = vst.msk [vmem:[#allocation3] sm:$0xff] %vm68, %v563
  %602 = vst.msk [vmem:[#allocation3 + $0x8] sm:$0xff] %vm68, %v568
  %603 = vst.msk [vmem:[#allocation3 + $0x10] sm:$0xff] %vm68, %v573
  %604 = vst.msk [vmem:[#allocation3 + $0x18] sm:$0xff] %vm68, %v578
  %605 = vst.msk [vmem:[#allocation3 + $0x20] sm:$0xff] %vm68, %v583
  %606 = vst.msk [vmem:[#allocation3 + $0x28] sm:$0xff] %vm68, %v588
  %607 = vst.msk [vmem:[#allocation3 + $0x30] sm:$0xff] %vm68, %v593
  %608 = vst.msk [vmem:[#allocation3 + $0x38] sm:$0xff] %vm68, %v598
  %s609 = scalar_lea.vmem %s6, 32
  %v610 = vld [vmem:[%s609] sm:$0xff]
  %v611 = vld [vmem:[%s609 + $0x8] sm:$0xff]
  %v612 = vld [vmem:[%s609 + $0x10] sm:$0xff]
  %v613 = vld [vmem:[%s609 + $0x18] sm:$0xff]
  %614 = vmatprep.subr.mxu0 0.0
  %615 = vmatpush1.msra.mxu0 %v610
  %616 = vmatprep.subr.mxu0 0.0
  %617 = vmatpush1.msra.mxu0 %v611
  %618 = vmatprep.subr.mxu0 0.0
  %619 = vmatpush1.msra.mxu0 %v612
  %620 = vmatprep.subr.mxu0 0.0
  %621 = vmatpush1.msra.mxu0 %v613
  %622 = vmatprep.subr.mxu0 0.0
  %623 = vmatpush1.msra.mxu0 0.0
  %624 = vmatprep.subr.mxu0 0.0
  %625 = vmatpush1.msra.mxu0 0.0
  %626 = vmatprep.subr.mxu0 0.0
  %627 = vmatpush1.msra.mxu0 0.0
  %628 = vmatprep.subr.mxu0 0.0
  %629 = vmatpush1.msra.mxu0 0.0
  %630 = vmatprep.subr.mxu0 0.0
  %631 = vmatpush1.msra.mxu0 0.0
  %632 = vmatprep.subr.mxu0 0.0
  %633 = vmatpush1.msra.mxu0 0.0
  %634 = vmatprep.subr.mxu0 0.0
  %635 = vmatpush1.msra.mxu0 0.0
  %636 = vmatprep.subr.mxu0 0.0
  %637 = vmatpush1.msra.mxu0 0.0
  %638 = vmatprep.subr.mxu0 0.0
  %639 = vmatpush1.msra.mxu0 0.0
  %640 = vmatprep.subr.mxu0 0.0
  %641 = vmatpush1.msra.mxu0 0.0
  %642 = vmatprep.subr.mxu0 0.0
  %643 = vmatpush1.msra.mxu0 0.0
  %644 = vmatprep.subr.mxu0 0.0
  %645 = vmatpush1.msra.mxu0 0.0
  %646 = vmatprep.subr.mxu0 0.0
  %647 = vmatpush1.msra.mxu0 0.0
  %648 = vmatprep.subr.mxu0 0.0
  %649 = vmatpush1.msra.mxu0 0.0
  %650 = vmatprep.subr.mxu0 0.0
  %651 = vmatpush1.msra.mxu0 0.0
  %652 = vmatprep.subr.mxu0 0.0
  %653 = vmatpush1.msra.mxu0 0.0
  %654 = vmatprep.subr.mxu0 0.0
  %655 = vmatpush1.msra.mxu0 0.0
  %656 = vmatprep.subr.mxu0 0.0
  %657 = vmatpush1.msra.mxu0 0.0
  %658 = vmatprep.subr.mxu0 0.0
  %659 = vmatpush1.msra.mxu0 0.0
  %660 = vmatprep.subr.mxu0 0.0
  %661 = vmatpush1.msra.mxu0 0.0
  %662 = vmatprep.subr.mxu0 0.0
  %663 = vmatpush1.msra.mxu0 0.0
  %664 = vmatprep.subr.mxu0 0.0
  %665 = vmatpush1.msra.mxu0 0.0
  %666 = vmatprep.subr.mxu0 0.0
  %667 = vmatpush1.msra.mxu0 0.0
  %668 = vmatprep.subr.mxu0 0.0
  %669 = vmatpush1.msra.mxu0 0.0
  %670 = vmatprep.subr.mxu0 0.0
  %671 = vmatpush1.msra.mxu0 0.0
  %672 = vmatprep.subr.mxu0 0.0
  %673 = vmatpush1.msra.mxu0 0.0
  %674 = vmatprep.subr.mxu0 0.0
  %675 = vmatpush1.msra.mxu0 0.0
  %676 = vmatprep.subr.mxu0 0.0
  %677 = vmatpush1.msra.mxu0 0.0
  %678 = vmatprep.mubr.f32.mxu0 0.0
  %679 = vmatmul.mubr.f32.gmra.mrb[0].mxu0 %v473
  %v680 = vpop.f32.mrb[0].mxu0
  %v681 = vadd.f32 0.0, %v680
  %v682 = vpop.f32.mrb[0].mxu0
  %683 = vmatprep.mubr.f32.mxu0 0.0
  %684 = vmatmul.mubr.f32.gmra.mrb[0].mxu0 %v476
  %v685 = vpop.f32.mrb[0].mxu0
  %v686 = vadd.f32 0.0, %v685
  %v687 = vpop.f32.mrb[0].mxu0
  %688 = vmatprep.mubr.f32.mxu0 0.0
  %689 = vmatmul.mubr.f32.gmra.mrb[0].mxu0 %v479
  %v690 = vpop.f32.mrb[0].mxu0
  %v691 = vadd.f32 0.0, %v690
  %v692 = vpop.f32.mrb[0].mxu0
  %693 = vmatprep.mubr.f32.mxu0 0.0
  %694 = vmatmul.mubr.f32.gmra.mrb[0].mxu0 %v482
  %v695 = vpop.f32.mrb[0].mxu0
  %v696 = vadd.f32 0.0, %v695
  %v697 = vpop.f32.mrb[0].mxu0
  %698 = vmatprep.mubr.f32.mxu0 0.0
  %699 = vmatmul.mubr.f32.gmra.mrb[0].mxu0 %v485
  %v700 = vpop.f32.mrb[0].mxu0
  %v701 = vadd.f32 0.0, %v700
  %v702 = vpop.f32.mrb[0].mxu0
  %703 = vmatprep.mubr.f32.mxu0 0.0
  %704 = vmatmul.mubr.f32.gmra.mrb[0].mxu0 %v488
  %v705 = vpop.f32.mrb[0].mxu0
  %v706 = vadd.f32 0.0, %v705
  %v707 = vpop.f32.mrb[0].mxu0
  %708 = vmatprep.mubr.f32.mxu0 0.0
  %709 = vmatmul.mubr.f32.gmra.mrb[0].mxu0 %v491
  %v710 = vpop.f32.mrb[0].mxu0
  %v711 = vadd.f32 0.0, %v710
  %v712 = vpop.f32.mrb[0].mxu0
  %713 = vmatprep.mubr.f32.mxu0 0.0
  %714 = vmatmul.mubr.f32.gmra.mrb[0].mxu0 %v494
  %v715 = vpop.f32.mrb[0].mxu0
  %v716 = vadd.f32 0.0, %v715
  %v717 = vpop.f32.mrb[0].mxu0
  %718 = vdwg.mxu0
  %s719 = scalar_lea.vmem [#allocation3], 64
  %720 = vst.msk [vmem:[%s719] sm:$0xff] %vm68, %v681
  %721 = vst.msk [vmem:[%s719 + $0x8] sm:$0xff] %vm68, %v686
  %722 = vst.msk [vmem:[%s719 + $0x10] sm:$0xff] %vm68, %v691
  %723 = vst.msk [vmem:[%s719 + $0x18] sm:$0xff] %vm68, %v696
  %724 = vst.msk [vmem:[%s719 + $0x20] sm:$0xff] %vm68, %v701
  %725 = vst.msk [vmem:[%s719 + $0x28] sm:$0xff] %vm68, %v706
  %726 = vst.msk [vmem:[%s719 + $0x30] sm:$0xff] %vm68, %v711
  %727 = vst.msk [vmem:[%s719 + $0x38] sm:$0xff] %vm68, %v716
  %s728 = scalar_lea.vmem %s6, 64
  %v729 = vld [vmem:[%s728] sm:$0xff]
  %v730 = vld [vmem:[%s728 + $0x8] sm:$0xff]
  %v731 = vld [vmem:[%s728 + $0x10] sm:$0xff]
  %v732 = vld [vmem:[%s728 + $0x18] sm:$0xff]
  %733 = vmatprep.subr.mxu0 0.0
  %734 = vmatpush1.msra.mxu0 %v729
  %735 = vmatprep.subr.mxu0 0.0
  %736 = vmatpush1.msra.mxu0 %v730
  %737 = vmatprep.subr.mxu0 0.0
  %738 = vmatpush1.msra.mxu0 %v731
  %739 = vmatprep.subr.mxu0 0.0
  %740 = vmatpush1.msra.mxu0 %v732
  %741 = vmatprep.subr.mxu0 0.0
  %742 = vmatpush1.msra.mxu0 0.0
  %743 = vmatprep.subr.mxu0 0.0
  %744 = vmatpush1.msra.mxu0 0.0
  %745 = vmatprep.subr.mxu0 0.0
  %746 = vmatpush1.msra.mxu0 0.0
  %747 = vmatprep.subr.mxu0 0.0
  %748 = vmatpush1.msra.mxu0 0.0
  %749 = vmatprep.subr.mxu0 0.0
  %750 = vmatpush1.msra.mxu0 0.0
  %751 = vmatprep.subr.mxu0 0.0
  %752 = vmatpush1.msra.mxu0 0.0
  %753 = vmatprep.subr.mxu0 0.0
  %754 = vmatpush1.msra.mxu0 0.0
  %755 = vmatprep.subr.mxu0 0.0
  %756 = vmatpush1.msra.mxu0 0.0
  %757 = vmatprep.subr.mxu0 0.0
  %758 = vmatpush1.msra.mxu0 0.0
  %759 = vmatprep.subr.mxu0 0.0
  %760 = vmatpush1.msra.mxu0 0.0
  %761 = vmatprep.subr.mxu0 0.0
  %762 = vmatpush1.msra.mxu0 0.0
  %763 = vmatprep.subr.mxu0 0.0
  %764 = vmatpush1.msra.mxu0 0.0
  %765 = vmatprep.subr.mxu0 0.0
  %766 = vmatpush1.msra.mxu0 0.0
  %767 = vmatprep.subr.mxu0 0.0
  %768 = vmatpush1.msra.mxu0 0.0
  %769 = vmatprep.subr.mxu0 0.0
  %770 = vmatpush1.msra.mxu0 0.0
  %771 = vmatprep.subr.mxu0 0.0
  %772 = vmatpush1.msra.mxu0 0.0
  %773 = vmatprep.subr.mxu0 0.0
  %774 = vmatpush1.msra.mxu0 0.0
  %775 = vmatprep.subr.mxu0 0.0
  %776 = vmatpush1.msra.mxu0 0.0
  %777 = vmatprep.subr.mxu0 0.0
  %778 = vmatpush1.msra.mxu0 0.0
  %779 = vmatprep.subr.mxu0 0.0
  %780 = vmatpush1.msra.mxu0 0.0
  %781 = vmatprep.subr.mxu0 0.0
  %782 = vmatpush1.msra.mxu0 0.0
  %783 = vmatprep.subr.mxu0 0.0
  %784 = vmatpush1.msra.mxu0 0.0
  %785 = vmatprep.subr.mxu0 0.0
  %786 = vmatpush1.msra.mxu0 0.0
  %787 = vmatprep.subr.mxu0 0.0
  %788 = vmatpush1.msra.mxu0 0.0
  %789 = vmatprep.subr.mxu0 0.0
  %790 = vmatpush1.msra.mxu0 0.0
  %791 = vmatprep.subr.mxu0 0.0
  %792 = vmatpush1.msra.mxu0 0.0
  %793 = vmatprep.subr.mxu0 0.0
  %794 = vmatpush1.msra.mxu0 0.0
  %795 = vmatprep.subr.mxu0 0.0
  %796 = vmatpush1.msra.mxu0 0.0
  %797 = vmatprep.mubr.f32.mxu0 0.0
  %798 = vmatmul.mubr.f32.gmra.mrb[0].mxu0 %v473
  %v799 = vpop.f32.mrb[0].mxu0
  %v800 = vadd.f32 0.0, %v799
  %v801 = vpop.f32.mrb[0].mxu0
  %802 = vmatprep.mubr.f32.mxu0 0.0
  %803 = vmatmul.mubr.f32.gmra.mrb[0].mxu0 %v476
  %v804 = vpop.f32.mrb[0].mxu0
  %v805 = vadd.f32 0.0, %v804
  %v806 = vpop.f32.mrb[0].mxu0
  %807 = vmatprep.mubr.f32.mxu0 0.0
  %808 = vmatmul.mubr.f32.gmra.mrb[0].mxu0 %v479
  %v809 = vpop.f32.mrb[0].mxu0
  %v810 = vadd.f32 0.0, %v809
  %v811 = vpop.f32.mrb[0].mxu0
  %812 = vmatprep.mubr.f32.mxu0 0.0
  %813 = vmatmul.mubr.f32.gmra.mrb[0].mxu0 %v482
  %v814 = vpop.f32.mrb[0].mxu0
  %v815 = vadd.f32 0.0, %v814
  %v816 = vpop.f32.mrb[0].mxu0
  %817 = vmatprep.mubr.f32.mxu0 0.0
  %818 = vmatmul.mubr.f32.gmra.mrb[0].mxu0 %v485
  %v819 = vpop.f32.mrb[0].mxu0
  %v820 = vadd.f32 0.0, %v819
  %v821 = vpop.f32.mrb[0].mxu0
  %822 = vmatprep.mubr.f32.mxu0 0.0
  %823 = vmatmul.mubr.f32.gmra.mrb[0].mxu0 %v488
  %v824 = vpop.f32.mrb[0].mxu0
  %v825 = vadd.f32 0.0, %v824
  %v826 = vpop.f32.mrb[0].mxu0
  %827 = vmatprep.mubr.f32.mxu0 0.0
  %828 = vmatmul.mubr.f32.gmra.mrb[0].mxu0 %v491
  %v829 = vpop.f32.mrb[0].mxu0
  %v830 = vadd.f32 0.0, %v829
  %v831 = vpop.f32.mrb[0].mxu0
  %832 = vmatprep.mubr.f32.mxu0 0.0
  %833 = vmatmul.mubr.f32.gmra.mrb[0].mxu0 %v494
  %v834 = vpop.f32.mrb[0].mxu0
  %v835 = vadd.f32 0.0, %v834
  %v836 = vpop.f32.mrb[0].mxu0
  %837 = vdwg.mxu0
  %s838 = scalar_lea.vmem [#allocation3], 128
  %839 = vst.msk [vmem:[%s838] sm:$0xff] %vm68, %v800
  %840 = vst.msk [vmem:[%s838 + $0x8] sm:$0xff] %vm68, %v805
  %841 = vst.msk [vmem:[%s838 + $0x10] sm:$0xff] %vm68, %v810
  %842 = vst.msk [vmem:[%s838 + $0x18] sm:$0xff] %vm68, %v815
  %843 = vst.msk [vmem:[%s838 + $0x20] sm:$0xff] %vm68, %v820
  %844 = vst.msk [vmem:[%s838 + $0x28] sm:$0xff] %vm68, %v825
  %845 = vst.msk [vmem:[%s838 + $0x30] sm:$0xff] %vm68, %v830
  %846 = vst.msk [vmem:[%s838 + $0x38] sm:$0xff] %vm68, %v835
  %v847 = vld [vmem:[%s4] sm:$0xff]
  %v848 = vld [vmem:[%s4 + $0x8] sm:$0xff]
  %v849 = vld [vmem:[%s4 + $0x10] sm:$0xff]
  %v850 = vld [vmem:[%s4 + $0x18] sm:$0xff]
  %s851 = scalar_lea.vmem %s4, 32
  %v852 = vld [vmem:[%s851] sm:$0xff]
  %v853 = vld [vmem:[%s851 + $0x8] sm:$0xff]
  %v854 = vld [vmem:[%s851 + $0x10] sm:$0xff]
  %v855 = vld [vmem:[%s851 + $0x18] sm:$0xff]
  %s856 = scalar_lea.vmem %s4, 64
  %v857 = vld [vmem:[%s856] sm:$0xff]
  %v858 = vld [vmem:[%s856 + $0x8] sm:$0xff]
  %v859 = vld [vmem:[%s856 + $0x10] sm:$0xff]
  %v860 = vld [vmem:[%s856 + $0x18] sm:$0xff]
  %s861 = scalar_lea.vmem %s5, 3
  %v862 = vld [vmem:[%s861] sm:$0x1]
  %v864 = vlaneseq
  %v865 = vshrl.u32 %v864, 7
  %v866 = vsub.s32 0, %v865
  %v867 = vrot.slane %v862, %v866
  %v869 = vld [vmem:[%s2] sm:$0xff]
  %v870 = vld [vmem:[#allocation2] sm:$0xff]
  %v871 = vld [vmem:[%s324] sm:$0xff]
  %v872 = vld [vmem:[%s451] sm:$0xff]
  %v874 = vsel %vm68, %v869, 0
  %876 = vmatprep.subr.mxu0 0.0
  %877 = vmatpush1.msra.mxu0 %v847
  %878 = vmatprep.subr.mxu0 0.0
  %879 = vmatpush1.msra.mxu0 %v848
  %880 = vmatprep.subr.mxu0 0.0
  %881 = vmatpush1.msra.mxu0 %v849
  %882 = vmatprep.subr.mxu0 0.0
  %883 = vmatpush1.msra.mxu0 %v850
  %884 = vmatprep.subr.mxu0 0.0
  %885 = vmatpush1.msra.mxu0 0.0
  %886 = vmatprep.subr.mxu0 0.0
  %887 = vmatpush1.msra.mxu0 0.0
  %888 = vmatprep.subr.mxu0 0.0
  %889 = vmatpush1.msra.mxu0 0.0
  %890 = vmatprep.subr.mxu0 0.0
  %891 = vmatpush1.msra.mxu0 0.0
  %892 = vmatprep.subr.mxu0 0.0
  %893 = vmatpush1.msra.mxu0 0.0
  %894 = vmatprep.subr.mxu0 0.0
  %895 = vmatpush1.msra.mxu0 0.0
  %896 = vmatprep.subr.mxu0 0.0
  %897 = vmatpush1.msra.mxu0 0.0
  %898 = vmatprep.subr.mxu0 0.0
  %899 = vmatpush1.msra.mxu0 0.0
  %900 = vmatprep.subr.mxu0 0.0
  %901 = vmatpush1.msra.mxu0 0.0
  %902 = vmatprep.subr.mxu0 0.0
  %903 = vmatpush1.msra.mxu0 0.0
  %904 = vmatprep.subr.mxu0 0.0
  %905 = vmatpush1.msra.mxu0 0.0
  %906 = vmatprep.subr.mxu0 0.0
  %907 = vmatpush1.msra.mxu0 0.0
  %908 = vmatprep.subr.mxu0 0.0
  %909 = vmatpush1.msra.mxu0 0.0
  %910 = vmatprep.subr.mxu0 0.0
  %911 = vmatpush1.msra.mxu0 0.0
  %912 = vmatprep.subr.mxu0 0.0
  %913 = vmatpush1.msra.mxu0 0.0
  %914 = vmatprep.subr.mxu0 0.0
  %915 = vmatpush1.msra.mxu0 0.0
  %916 = vmatprep.subr.mxu0 0.0
  %917 = vmatpush1.msra.mxu0 0.0
  %918 = vmatprep.subr.mxu0 0.0
  %919 = vmatpush1.msra.mxu0 0.0
  %920 = vmatprep.subr.mxu0 0.0
  %921 = vmatpush1.msra.mxu0 0.0
  %922 = vmatprep.subr.mxu0 0.0
  %923 = vmatpush1.msra.mxu0 0.0
  %924 = vmatprep.subr.mxu0 0.0
  %925 = vmatpush1.msra.mxu0 0.0
  %926 = vmatprep.subr.mxu0 0.0
  %927 = vmatpush1.msra.mxu0 0.0
  %928 = vmatprep.subr.mxu0 0.0
  %929 = vmatpush1.msra.mxu0 0.0
  %930 = vmatprep.subr.mxu0 0.0
  %931 = vmatpush1.msra.mxu0 0.0
  %932 = vmatprep.subr.mxu0 0.0
  %933 = vmatpush1.msra.mxu0 0.0
  %934 = vmatprep.subr.mxu0 0.0
  %935 = vmatpush1.msra.mxu0 0.0
  %936 = vmatprep.subr.mxu0 0.0
  %937 = vmatpush1.msra.mxu0 0.0
  %938 = vmatprep.subr.mxu0 0.0
  %939 = vmatpush1.msra.mxu0 0.0
  %940 = vmatprep.mubr.f32.mxu0 0.0
  %941 = vmatmul.mubr.f32.gmra.mrb[0].mxu0 %v874
  %v942 = vpop.f32.mrb[0].mxu0
  %v943 = vadd.f32 0.0, %v942
  %v944 = vpop.f32.mrb[0].mxu0
  %945 = vdwg.mxu0
  %946 = vmatprep.subr.mxu0 0.0
  %947 = vmatpush1.msra.mxu0 %v852
  %948 = vmatprep.subr.mxu0 0.0
  %949 = vmatpush1.msra.mxu0 %v853
  %950 = vmatprep.subr.mxu0 0.0
  %951 = vmatpush1.msra.mxu0 %v854
  %952 = vmatprep.subr.mxu0 0.0
  %953 = vmatpush1.msra.mxu0 %v855
  %954 = vmatprep.subr.mxu0 0.0
  %955 = vmatpush1.msra.mxu0 0.0
  %956 = vmatprep.subr.mxu0 0.0
  %957 = vmatpush1.msra.mxu0 0.0
  %958 = vmatprep.subr.mxu0 0.0
  %959 = vmatpush1.msra.mxu0 0.0
  %960 = vmatprep.subr.mxu0 0.0
  %961 = vmatpush1.msra.mxu0 0.0
  %962 = vmatprep.subr.mxu0 0.0
  %963 = vmatpush1.msra.mxu0 0.0
  %964 = vmatprep.subr.mxu0 0.0
  %965 = vmatpush1.msra.mxu0 0.0
  %966 = vmatprep.subr.mxu0 0.0
  %967 = vmatpush1.msra.mxu0 0.0
  %968 = vmatprep.subr.mxu0 0.0
  %969 = vmatpush1.msra.mxu0 0.0
  %970 = vmatprep.subr.mxu0 0.0
  %971 = vmatpush1.msra.mxu0 0.0
  %972 = vmatprep.subr.mxu0 0.0
  %973 = vmatpush1.msra.mxu0 0.0
  %974 = vmatprep.subr.mxu0 0.0
  %975 = vmatpush1.msra.mxu0 0.0
  %976 = vmatprep.subr.mxu0 0.0
  %977 = vmatpush1.msra.mxu0 0.0
  %978 = vmatprep.subr.mxu0 0.0
  %979 = vmatpush1.msra.mxu0 0.0
  %980 = vmatprep.subr.mxu0 0.0
  %981 = vmatpush1.msra.mxu0 0.0
  %982 = vmatprep.subr.mxu0 0.0
  %983 = vmatpush1.msra.mxu0 0.0
  %984 = vmatprep.subr.mxu0 0.0
  %985 = vmatpush1.msra.mxu0 0.0
  %986 = vmatprep.subr.mxu0 0.0
  %987 = vmatpush1.msra.mxu0 0.0
  %988 = vmatprep.subr.mxu0 0.0
  %989 = vmatpush1.msra.mxu0 0.0
  %990 = vmatprep.subr.mxu0 0.0
  %991 = vmatpush1.msra.mxu0 0.0
  %992 = vmatprep.subr.mxu0 0.0
  %993 = vmatpush1.msra.mxu0 0.0
  %994 = vmatprep.subr.mxu0 0.0
  %995 = vmatpush1.msra.mxu0 0.0
  %996 = vmatprep.subr.mxu0 0.0
  %997 = vmatpush1.msra.mxu0 0.0
  %998 = vmatprep.subr.mxu0 0.0
  %999 = vmatpush1.msra.mxu0 0.0
  %1000 = vmatprep.subr.mxu0 0.0
  %1001 = vmatpush1.msra.mxu0 0.0
  %1002 = vmatprep.subr.mxu0 0.0
  %1003 = vmatpush1.msra.mxu0 0.0
  %1004 = vmatprep.subr.mxu0 0.0
  %1005 = vmatpush1.msra.mxu0 0.0
  %1006 = vmatprep.subr.mxu0 0.0
  %1007 = vmatpush1.msra.mxu0 0.0
  %1008 = vmatprep.subr.mxu0 0.0
  %1009 = vmatpush1.msra.mxu0 0.0
  %1010 = vmatprep.mubr.f32.mxu0 0.0
  %1011 = vmatmul.mubr.f32.gmra.mrb[0].mxu0 %v874
  %v1012 = vpop.f32.mrb[0].mxu0
  %v1013 = vadd.f32 0.0, %v1012
  %v1014 = vpop.f32.mrb[0].mxu0
  %1015 = vdwg.mxu0
  %v1016 = vadd.f32 %v870, %v943
  %v1017 = vxor.u32 %v1016, 2147483648
  %v1018 = vmul.f32 %v1017, 1.442695
  %v1019 = vpow.pop %v1018
  %v1020 = vadd.f32 %v1019, 1.0
  %v1021 = vrcp.pop %v1020
  %v1022 = vmul.f32 1.0, %v1021
  %v1023 = vadd.f32 %v871, %v1013
  %v1024 = vxor.u32 %v1023, 2147483648
  %v1025 = vmul.f32 %v1024, 1.442695
  %v1026 = vpow.pop %v1025
  %v1027 = vadd.f32 %v1026, 1.0
  %v1028 = vrcp.pop %v1027
  %v1029 = vmul.f32 1.0, %v1028
  %1030 = vmatprep.subr.mxu0 0.0
  %1031 = vmatpush1.msra.mxu0 %v857
  %1032 = vmatprep.subr.mxu0 0.0
  %1033 = vmatpush1.msra.mxu0 %v858
  %1034 = vmatprep.subr.mxu0 0.0
  %1035 = vmatpush1.msra.mxu0 %v859
  %1036 = vmatprep.subr.mxu0 0.0
  %1037 = vmatpush1.msra.mxu0 %v860
  %1038 = vmatprep.subr.mxu0 0.0
  %1039 = vmatpush1.msra.mxu0 0.0
  %1040 = vmatprep.subr.mxu0 0.0
  %1041 = vmatpush1.msra.mxu0 0.0
  %1042 = vmatprep.subr.mxu0 0.0
  %1043 = vmatpush1.msra.mxu0 0.0
  %1044 = vmatprep.subr.mxu0 0.0
  %1045 = vmatpush1.msra.mxu0 0.0
  %1046 = vmatprep.subr.mxu0 0.0
  %1047 = vmatpush1.msra.mxu0 0.0
  %1048 = vmatprep.subr.mxu0 0.0
  %1049 = vmatpush1.msra.mxu0 0.0
  %1050 = vmatprep.subr.mxu0 0.0
  %1051 = vmatpush1.msra.mxu0 0.0
  %1052 = vmatprep.subr.mxu0 0.0
  %1053 = vmatpush1.msra.mxu0 0.0
  %1054 = vmatprep.subr.mxu0 0.0
  %1055 = vmatpush1.msra.mxu0 0.0
  %1056 = vmatprep.subr.mxu0 0.0
  %1057 = vmatpush1.msra.mxu0 0.0
  %1058 = vmatprep.subr.mxu0 0.0
  %1059 = vmatpush1.msra.mxu0 0.0
  %1060 = vmatprep.subr.mxu0 0.0
  %1061 = vmatpush1.msra.mxu0 0.0
  %1062 = vmatprep.subr.mxu0 0.0
  %1063 = vmatpush1.msra.mxu0 0.0
  %1064 = vmatprep.subr.mxu0 0.0
  %1065 = vmatpush1.msra.mxu0 0.0
  %1066 = vmatprep.subr.mxu0 0.0
  %1067 = vmatpush1.msra.mxu0 0.0
  %1068 = vmatprep.subr.mxu0 0.0
  %1069 = vmatpush1.msra.mxu0 0.0
  %1070 = vmatprep.subr.mxu0 0.0
  %1071 = vmatpush1.msra.mxu0 0.0
  %1072 = vmatprep.subr.mxu0 0.0
  %1073 = vmatpush1.msra.mxu0 0.0
  %1074 = vmatprep.subr.mxu0 0.0
  %1075 = vmatpush1.msra.mxu0 0.0
  %1076 = vmatprep.subr.mxu0 0.0
  %1077 = vmatpush1.msra.mxu0 0.0
  %1078 = vmatprep.subr.mxu0 0.0
  %1079 = vmatpush1.msra.mxu0 0.0
  %1080 = vmatprep.subr.mxu0 0.0
  %1081 = vmatpush1.msra.mxu0 0.0
  %1082 = vmatprep.subr.mxu0 0.0
  %1083 = vmatpush1.msra.mxu0 0.0
  %1084 = vmatprep.subr.mxu0 0.0
  %1085 = vmatpush1.msra.mxu0 0.0
  %1086 = vmatprep.subr.mxu0 0.0
  %1087 = vmatpush1.msra.mxu0 0.0
  %1088 = vmatprep.subr.mxu0 0.0
  %1089 = vmatpush1.msra.mxu0 0.0
  %1090 = vmatprep.subr.mxu0 0.0
  %1091 = vmatpush1.msra.mxu0 0.0
  %1092 = vmatprep.subr.mxu0 0.0
  %1093 = vmatpush1.msra.mxu0 0.0
  %1094 = vmatprep.mubr.f32.mxu0 0.0
  %1095 = vmatmul.mubr.f32.gmra.mrb[0].mxu0 %v874
  %v1096 = vpop.f32.mrb[0].mxu0
  %v1097 = vadd.f32 %v867, %v1096
  %v1098 = vpop.f32.mrb[0].mxu0
  %1099 = vdwg.mxu0
  %v1100 = vmul.f32 %v1022, %v1097
  %v1101 = vadd.f32 %v872, %v1100
  %v1102 = vtanh.pop %v1101
  %v1103 = vsub.f32 1.0, %v1029
  %v1104 = vmul.f32 %v1103, %v1102
  %v1105 = vmul.f32 %v1029, %v869
  %v1106 = vadd.f32 %v1104, %v1105
  %v1107 = vld [vmem:[#allocation2 + $0x8] sm:$0xff]
  %v1108 = vld [vmem:[%s324 + $0x8] sm:$0xff]
  %v1109 = vld [vmem:[%s451 + $0x8] sm:$0xff]
  %v1111 = vsel %vm68, %v1106, 0
  %1113 = vmatprep.subr.mxu0 0.0
  %1114 = vmatpush1.msra.mxu0 %v847
  %1115 = vmatprep.subr.mxu0 0.0
  %1116 = vmatpush1.msra.mxu0 %v848
  %1117 = vmatprep.subr.mxu0 0.0
  %1118 = vmatpush1.msra.mxu0 %v849
  %1119 = vmatprep.subr.mxu0 0.0
  %1120 = vmatpush1.msra.mxu0 %v850
  %1121 = vmatprep.subr.mxu0 0.0
  %1122 = vmatpush1.msra.mxu0 0.0
  %1123 = vmatprep.subr.mxu0 0.0
  %1124 = vmatpush1.msra.mxu0 0.0
  %1125 = vmatprep.subr.mxu0 0.0
  %1126 = vmatpush1.msra.mxu0 0.0
  %1127 = vmatprep.subr.mxu0 0.0
  %1128 = vmatpush1.msra.mxu0 0.0
  %1129 = vmatprep.subr.mxu0 0.0
  %1130 = vmatpush1.msra.mxu0 0.0
  %1131 = vmatprep.subr.mxu0 0.0
  %1132 = vmatpush1.msra.mxu0 0.0
  %1133 = vmatprep.subr.mxu0 0.0
  %1134 = vmatpush1.msra.mxu0 0.0
  %1135 = vmatprep.subr.mxu0 0.0
  %1136 = vmatpush1.msra.mxu0 0.0
  %1137 = vmatprep.subr.mxu0 0.0
  %1138 = vmatpush1.msra.mxu0 0.0
  %1139 = vmatprep.subr.mxu0 0.0
  %1140 = vmatpush1.msra.mxu0 0.0
  %1141 = vmatprep.subr.mxu0 0.0
  %1142 = vmatpush1.msra.mxu0 0.0
  %1143 = vmatprep.subr.mxu0 0.0
  %1144 = vmatpush1.msra.mxu0 0.0
  %1145 = vmatprep.subr.mxu0 0.0
  %1146 = vmatpush1.msra.mxu0 0.0
  %1147 = vmatprep.subr.mxu0 0.0
  %1148 = vmatpush1.msra.mxu0 0.0
  %1149 = vmatprep.subr.mxu0 0.0
  %1150 = vmatpush1.msra.mxu0 0.0
  %1151 = vmatprep.subr.mxu0 0.0
  %1152 = vmatpush1.msra.mxu0 0.0
  %1153 = vmatprep.subr.mxu0 0.0
  %1154 = vmatpush1.msra.mxu0 0.0
  %1155 = vmatprep.subr.mxu0 0.0
  %1156 = vmatpush1.msra.mxu0 0.0
  %1157 = vmatprep.subr.mxu0 0.0
  %1158 = vmatpush1.msra.mxu0 0.0
  %1159 = vmatprep.subr.mxu0 0.0
  %1160 = vmatpush1.msra.mxu0 0.0
  %1161 = vmatprep.subr.mxu0 0.0
  %1162 = vmatpush1.msra.mxu0 0.0
  %1163 = vmatprep.subr.mxu0 0.0
  %1164 = vmatpush1.msra.mxu0 0.0
  %1165 = vmatprep.subr.mxu0 0.0
  %1166 = vmatpush1.msra.mxu0 0.0
  %1167 = vmatprep.subr.mxu0 0.0
  %1168 = vmatpush1.msra.mxu0 0.0
  %1169 = vmatprep.subr.mxu0 0.0
  %1170 = vmatpush1.msra.mxu0 0.0
  %1171 = vmatprep.subr.mxu0 0.0
  %1172 = vmatpush1.msra.mxu0 0.0
  %1173 = vmatprep.subr.mxu0 0.0
  %1174 = vmatpush1.msra.mxu0 0.0
  %1175 = vmatprep.subr.mxu0 0.0
  %1176 = vmatpush1.msra.mxu0 0.0
  %1177 = vmatprep.mubr.f32.mxu0 0.0
  %1178 = vmatmul.mubr.f32.gmra.mrb[0].mxu0 %v1111
  %v1179 = vpop.f32.mrb[0].mxu0
  %v1180 = vadd.f32 0.0, %v1179
  %v1181 = vpop.f32.mrb[0].mxu0
  %1182 = vdwg.mxu0
  %1183 = vmatprep.subr.mxu0 0.0
  %1184 = vmatpush1.msra.mxu0 %v852
  %1185 = vmatprep.subr.mxu0 0.0
  %1186 = vmatpush1.msra.mxu0 %v853
  %1187 = vmatprep.subr.mxu0 0.0
  %1188 = vmatpush1.msra.mxu0 %v854
  %1189 = vmatprep.subr.mxu0 0.0
  %1190 = vmatpush1.msra.mxu0 %v855
  %1191 = vmatprep.subr.mxu0 0.0
  %1192 = vmatpush1.msra.mxu0 0.0
  %1193 = vmatprep.subr.mxu0 0.0
  %1194 = vmatpush1.msra.mxu0 0.0
  %1195 = vmatprep.subr.mxu0 0.0
  %1196 = vmatpush1.msra.mxu0 0.0
  %1197 = vmatprep.subr.mxu0 0.0
  %1198 = vmatpush1.msra.mxu0 0.0
  %1199 = vmatprep.subr.mxu0 0.0
  %1200 = vmatpush1.msra.mxu0 0.0
  %1201 = vmatprep.subr.mxu0 0.0
  %1202 = vmatpush1.msra.mxu0 0.0
  %1203 = vmatprep.subr.mxu0 0.0
  %1204 = vmatpush1.msra.mxu0 0.0
  %1205 = vmatprep.subr.mxu0 0.0
  %1206 = vmatpush1.msra.mxu0 0.0
  %1207 = vmatprep.subr.mxu0 0.0
  %1208 = vmatpush1.msra.mxu0 0.0
  %1209 = vmatprep.subr.mxu0 0.0
  %1210 = vmatpush1.msra.mxu0 0.0
  %1211 = vmatprep.subr.mxu0 0.0
  %1212 = vmatpush1.msra.mxu0 0.0
  %1213 = vmatprep.subr.mxu0 0.0
  %1214 = vmatpush1.msra.mxu0 0.0
  %1215 = vmatprep.subr.mxu0 0.0
  %1216 = vmatpush1.msra.mxu0 0.0
  %1217 = vmatprep.subr.mxu0 0.0
  %1218 = vmatpush1.msra.mxu0 0.0
  %1219 = vmatprep.subr.mxu0 0.0
  %1220 = vmatpush1.msra.mxu0 0.0
  %1221 = vmatprep.subr.mxu0 0.0
  %1222 = vmatpush1.msra.mxu0 0.0
  %1223 = vmatprep.subr.mxu0 0.0
  %1224 = vmatpush1.msra.mxu0 0.0
  %1225 = vmatprep.subr.mxu0 0.0
  %1226 = vmatpush1.msra.mxu0 0.0
  %1227 = vmatprep.subr.mxu0 0.0
  %1228 = vmatpush1.msra.mxu0 0.0
  %1229 = vmatprep.subr.mxu0 0.0
  %1230 = vmatpush1.msra.mxu0 0.0
  %1231 = vmatprep.subr.mxu0 0.0
  %1232 = vmatpush1.msra.mxu0 0.0
  %1233 = vmatprep.subr.mxu0 0.0
  %1234 = vmatpush1.msra.mxu0 0.0
  %1235 = vmatprep.subr.mxu0 0.0
  %1236 = vmatpush1.msra.mxu0 0.0
  %1237 = vmatprep.subr.mxu0 0.0
  %1238 = vmatpush1.msra.mxu0 0.0
  %1239 = vmatprep.subr.mxu0 0.0
  %1240 = vmatpush1.msra.mxu0 0.0
  %1241 = vmatprep.subr.mxu0 0.0
  %1242 = vmatpush1.msra.mxu0 0.0
  %1243 = vmatprep.subr.mxu0 0.0
  %1244 = vmatpush1.msra.mxu0 0.0
  %1245 = vmatprep.subr.mxu0 0.0
  %1246 = vmatpush1.msra.mxu0 0.0
  %1247 = vmatprep.mubr.f32.mxu0 0.0
  %1248 = vmatmul.mubr.f32.gmra.mrb[0].mxu0 %v1111
  %v1249 = vpop.f32.mrb[0].mxu0
  %v1250 = vadd.f32 0.0, %v1249
  %v1251 = vpop.f32.mrb[0].mxu0
  %1252 = vdwg.mxu0
  %v1253 = vadd.f32 %v1107, %v1180
  %v1254 = vxor.u32 %v1253, 2147483648
  %v1255 = vmul.f32 %v1254, 1.442695
  %v1256 = vpow.pop %v1255
  %v1257 = vadd.f32 %v1256, 1.0
  %v1258 = vrcp.pop %v1257
  %v1259 = vmul.f32 1.0, %v1258
  %v1260 = vadd.f32 %v1108, %v1250
  %v1261 = vxor.u32 %v1260, 2147483648
  %v1262 = vmul.f32 %v1261, 1.442695
  %v1263 = vpow.pop %v1262
  %v1264 = vadd.f32 %v1263, 1.0
  %v1265 = vrcp.pop %v1264
  %v1266 = vmul.f32 1.0, %v1265
  %1267 = vmatprep.subr.mxu0 0.0
  %1268 = vmatpush1.msra.mxu0 %v857
  %1269 = vmatprep.subr.mxu0 0.0
  %1270 = vmatpush1.msra.mxu0 %v858
  %1271 = vmatprep.subr.mxu0 0.0
  %1272 = vmatpush1.msra.mxu0 %v859
  %1273 = vmatprep.subr.mxu0 0.0
  %1274 = vmatpush1.msra.mxu0 %v860
  %1275 = vmatprep.subr.mxu0 0.0
  %1276 = vmatpush1.msra.mxu0 0.0
  %1277 = vmatprep.subr.mxu0 0.0
  %1278 = vmatpush1.msra.mxu0 0.0
  %1279 = vmatprep.subr.mxu0 0.0
  %1280 = vmatpush1.msra.mxu0 0.0
  %1281 = vmatprep.subr.mxu0 0.0
  %1282 = vmatpush1.msra.mxu0 0.0
  %1283 = vmatprep.subr.mxu0 0.0
  %1284 = vmatpush1.msra.mxu0 0.0
  %1285 = vmatprep.subr.mxu0 0.0
  %1286 = vmatpush1.msra.mxu0 0.0
  %1287 = vmatprep.subr.mxu0 0.0
  %1288 = vmatpush1.msra.mxu0 0.0
  %1289 = vmatprep.subr.mxu0 0.0
  %1290 = vmatpush1.msra.mxu0 0.0
  %1291 = vmatprep.subr.mxu0 0.0
  %1292 = vmatpush1.msra.mxu0 0.0
  %1293 = vmatprep.subr.mxu0 0.0
  %1294 = vmatpush1.msra.mxu0 0.0
  %1295 = vmatprep.subr.mxu0 0.0
  %1296 = vmatpush1.msra.mxu0 0.0
  %1297 = vmatprep.subr.mxu0 0.0
  %1298 = vmatpush1.msra.mxu0 0.0
  %1299 = vmatprep.subr.mxu0 0.0
  %1300 = vmatpush1.msra.mxu0 0.0
  %1301 = vmatprep.subr.mxu0 0.0
  %1302 = vmatpush1.msra.mxu0 0.0
  %1303 = vmatprep.subr.mxu0 0.0
  %1304 = vmatpush1.msra.mxu0 0.0
  %1305 = vmatprep.subr.mxu0 0.0
  %1306 = vmatpush1.msra.mxu0 0.0
  %1307 = vmatprep.subr.mxu0 0.0
  %1308 = vmatpush1.msra.mxu0 0.0
  %1309 = vmatprep.subr.mxu0 0.0
  %1310 = vmatpush1.msra.mxu0 0.0
  %1311 = vmatprep.subr.mxu0 0.0
  %1312 = vmatpush1.msra.mxu0 0.0
  %1313 = vmatprep.subr.mxu0 0.0
  %1314 = vmatpush1.msra.mxu0 0.0
  %1315 = vmatprep.subr.mxu0 0.0
  %1316 = vmatpush1.msra.mxu0 0.0
  %1317 = vmatprep.subr.mxu0 0.0
  %1318 = vmatpush1.msra.mxu0 0.0
  %1319 = vmatprep.subr.mxu0 0.0
  %1320 = vmatpush1.msra.mxu0 0.0
  %1321 = vmatprep.subr.mxu0 0.0
  %1322 = vmatpush1.msra.mxu0 0.0
  %1323 = vmatprep.subr.mxu0 0.0
  %1324 = vmatpush1.msra.mxu0 0.0
  %1325 = vmatprep.subr.mxu0 0.0
  %1326 = vmatpush1.msra.mxu0 0.0
  %1327 = vmatprep.subr.mxu0 0.0
  %1328 = vmatpush1.msra.mxu0 0.0
  %1329 = vmatprep.subr.mxu0 0.0
  %1330 = vmatpush1.msra.mxu0 0.0
  %1331 = vmatprep.mubr.f32.mxu0 0.0
  %1332 = vmatmul.mubr.f32.gmra.mrb[0].mxu0 %v1111
  %v1333 = vpop.f32.mrb[0].mxu0
  %v1334 = vadd.f32 %v867, %v1333
  %v1335 = vpop.f32.mrb[0].mxu0
  %1336 = vdwg.mxu0
  %v1337 = vmul.f32 %v1259, %v1334
  %v1338 = vadd.f32 %v1109, %v1337
  %v1339 = vtanh.pop %v1338
  %v1340 = vsub.f32 1.0, %v1266
  %v1341 = vmul.f32 %v1340, %v1339
  %v1342 = vmul.f32 %v1266, %v1106
  %v1343 = vadd.f32 %v1341, %v1342
  %v1344 = vld [vmem:[#allocation2 + $0x10] sm:$0xff]
  %v1345 = vld [vmem:[%s324 + $0x10] sm:$0xff]
  %v1346 = vld [vmem:[%s451 + $0x10] sm:$0xff]
  %v1348 = vsel %vm68, %v1343, 0
  %1350 = vmatprep.subr.mxu0 0.0
  %1351 = vmatpush1.msra.mxu0 %v847
  %1352 = vmatprep.subr.mxu0 0.0
  %1353 = vmatpush1.msra.mxu0 %v848
  %1354 = vmatprep.subr.mxu0 0.0
  %1355 = vmatpush1.msra.mxu0 %v849
  %1356 = vmatprep.subr.mxu0 0.0
  %1357 = vmatpush1.msra.mxu0 %v850
  %1358 = vmatprep.subr.mxu0 0.0
  %1359 = vmatpush1.msra.mxu0 0.0
  %1360 = vmatprep.subr.mxu0 0.0
  %1361 = vmatpush1.msra.mxu0 0.0
  %1362 = vmatprep.subr.mxu0 0.0
  %1363 = vmatpush1.msra.mxu0 0.0
  %1364 = vmatprep.subr.mxu0 0.0
  %1365 = vmatpush1.msra.mxu0 0.0
  %1366 = vmatprep.subr.mxu0 0.0
  %1367 = vmatpush1.msra.mxu0 0.0
  %1368 = vmatprep.subr.mxu0 0.0
  %1369 = vmatpush1.msra.mxu0 0.0
  %1370 = vmatprep.subr.mxu0 0.0
  %1371 = vmatpush1.msra.mxu0 0.0
  %1372 = vmatprep.subr.mxu0 0.0
  %1373 = vmatpush1.msra.mxu0 0.0
  %1374 = vmatprep.subr.mxu0 0.0
  %1375 = vmatpush1.msra.mxu0 0.0
  %1376 = vmatprep.subr.mxu0 0.0
  %1377 = vmatpush1.msra.mxu0 0.0
  %1378 = vmatprep.subr.mxu0 0.0
  %1379 = vmatpush1.msra.mxu0 0.0
  %1380 = vmatprep.subr.mxu0 0.0
  %1381 = vmatpush1.msra.mxu0 0.0
  %1382 = vmatprep.subr.mxu0 0.0
  %1383 = vmatpush1.msra.mxu0 0.0
  %1384 = vmatprep.subr.mxu0 0.0
  %1385 = vmatpush1.msra.mxu0 0.0
  %1386 = vmatprep.subr.mxu0 0.0
  %1387 = vmatpush1.msra.mxu0 0.0
  %1388 = vmatprep.subr.mxu0 0.0
  %1389 = vmatpush1.msra.mxu0 0.0
  %1390 = vmatprep.subr.mxu0 0.0
  %1391 = vmatpush1.msra.mxu0 0.0
  %1392 = vmatprep.subr.mxu0 0.0
  %1393 = vmatpush1.msra.mxu0 0.0
  %1394 = vmatprep.subr.mxu0 0.0
  %1395 = vmatpush1.msra.mxu0 0.0
  %1396 = vmatprep.subr.mxu0 0.0
  %1397 = vmatpush1.msra.mxu0 0.0
  %1398 = vmatprep.subr.mxu0 0.0
  %1399 = vmatpush1.msra.mxu0 0.0
  %1400 = vmatprep.subr.mxu0 0.0
  %1401 = vmatpush1.msra.mxu0 0.0
  %1402 = vmatprep.subr.mxu0 0.0
  %1403 = vmatpush1.msra.mxu0 0.0
  %1404 = vmatprep.subr.mxu0 0.0
  %1405 = vmatpush1.msra.mxu0 0.0
  %1406 = vmatprep.subr.mxu0 0.0
  %1407 = vmatpush1.msra.mxu0 0.0
  %1408 = vmatprep.subr.mxu0 0.0
  %1409 = vmatpush1.msra.mxu0 0.0
  %1410 = vmatprep.subr.mxu0 0.0
  %1411 = vmatpush1.msra.mxu0 0.0
  %1412 = vmatprep.subr.mxu0 0.0
  %1413 = vmatpush1.msra.mxu0 0.0
  %1414 = vmatprep.mubr.f32.mxu0 0.0
  %1415 = vmatmul.mubr.f32.gmra.mrb[0].mxu0 %v1348
  %v1416 = vpop.f32.mrb[0].mxu0
  %v1417 = vadd.f32 0.0, %v1416
  %v1418 = vpop.f32.mrb[0].mxu0
  %1419 = vdwg.mxu0
  %1420 = vmatprep.subr.mxu0 0.0
  %1421 = vmatpush1.msra.mxu0 %v852
  %1422 = vmatprep.subr.mxu0 0.0
  %1423 = vmatpush1.msra.mxu0 %v853
  %1424 = vmatprep.subr.mxu0 0.0
  %1425 = vmatpush1.msra.mxu0 %v854
  %1426 = vmatprep.subr.mxu0 0.0
  %1427 = vmatpush1.msra.mxu0 %v855
  %1428 = vmatprep.subr.mxu0 0.0
  %1429 = vmatpush1.msra.mxu0 0.0
  %1430 = vmatprep.subr.mxu0 0.0
  %1431 = vmatpush1.msra.mxu0 0.0
  %1432 = vmatprep.subr.mxu0 0.0
  %1433 = vmatpush1.msra.mxu0 0.0
  %1434 = vmatprep.subr.mxu0 0.0
  %1435 = vmatpush1.msra.mxu0 0.0
  %1436 = vmatprep.subr.mxu0 0.0
  %1437 = vmatpush1.msra.mxu0 0.0
  %1438 = vmatprep.subr.mxu0 0.0
  %1439 = vmatpush1.msra.mxu0 0.0
  %1440 = vmatprep.subr.mxu0 0.0
  %1441 = vmatpush1.msra.mxu0 0.0
  %1442 = vmatprep.subr.mxu0 0.0
  %1443 = vmatpush1.msra.mxu0 0.0
  %1444 = vmatprep.subr.mxu0 0.0
  %1445 = vmatpush1.msra.mxu0 0.0
  %1446 = vmatprep.subr.mxu0 0.0
  %1447 = vmatpush1.msra.mxu0 0.0
  %1448 = vmatprep.subr.mxu0 0.0
  %1449 = vmatpush1.msra.mxu0 0.0
  %1450 = vmatprep.subr.mxu0 0.0
  %1451 = vmatpush1.msra.mxu0 0.0
  %1452 = vmatprep.subr.mxu0 0.0
  %1453 = vmatpush1.msra.mxu0 0.0
  %1454 = vmatprep.subr.mxu0 0.0
  %1455 = vmatpush1.msra.mxu0 0.0
  %1456 = vmatprep.subr.mxu0 0.0
  %1457 = vmatpush1.msra.mxu0 0.0
  %1458 = vmatprep.subr.mxu0 0.0
  %1459 = vmatpush1.msra.mxu0 0.0
  %1460 = vmatprep.subr.mxu0 0.0
  %1461 = vmatpush1.msra.mxu0 0.0
  %1462 = vmatprep.subr.mxu0 0.0
  %1463 = vmatpush1.msra.mxu0 0.0
  %1464 = vmatprep.subr.mxu0 0.0
  %1465 = vmatpush1.msra.mxu0 0.0
  %1466 = vmatprep.subr.mxu0 0.0
  %1467 = vmatpush1.msra.mxu0 0.0
  %1468 = vmatprep.subr.mxu0 0.0
  %1469 = vmatpush1.msra.mxu0 0.0
  %1470 = vmatprep.subr.mxu0 0.0
  %1471 = vmatpush1.msra.mxu0 0.0
  %1472 = vmatprep.subr.mxu0 0.0
  %1473 = vmatpush1.msra.mxu0 0.0
  %1474 = vmatprep.subr.mxu0 0.0
  %1475 = vmatpush1.msra.mxu0 0.0
  %1476 = vmatprep.subr.mxu0 0.0
  %1477 = vmatpush1.msra.mxu0 0.0
  %1478 = vmatprep.subr.mxu0 0.0
  %1479 = vmatpush1.msra.mxu0 0.0
  %1480 = vmatprep.subr.mxu0 0.0
  %1481 = vmatpush1.msra.mxu0 0.0
  %1482 = vmatprep.subr.mxu0 0.0
  %1483 = vmatpush1.msra.mxu0 0.0
  %1484 = vmatprep.mubr.f32.mxu0 0.0
  %1485 = vmatmul.mubr.f32.gmra.mrb[0].mxu0 %v1348
  %v1486 = vpop.f32.mrb[0].mxu0
  %v1487 = vadd.f32 0.0, %v1486
  %v1488 = vpop.f32.mrb[0].mxu0
  %1489 = vdwg.mxu0
  %v1490 = vadd.f32 %v1344, %v1417
  %v1491 = vxor.u32 %v1490, 2147483648
  %v1492 = vmul.f32 %v1491, 1.442695
  %v1493 = vpow.pop %v1492
  %v1494 = vadd.f32 %v1493, 1.0
  %v1495 = vrcp.pop %v1494
  %v1496 = vmul.f32 1.0, %v1495
  %v1497 = vadd.f32 %v1345, %v1487
  %v1498 = vxor.u32 %v1497, 2147483648
  %v1499 = vmul.f32 %v1498, 1.442695
  %v1500 = vpow.pop %v1499
  %v1501 = vadd.f32 %v1500, 1.0
  %v1502 = vrcp.pop %v1501
  %v1503 = vmul.f32 1.0, %v1502
  %1504 = vmatprep.subr.mxu0 0.0
  %1505 = vmatpush1.msra.mxu0 %v857
  %1506 = vmatprep.subr.mxu0 0.0
  %1507 = vmatpush1.msra.mxu0 %v858
  %1508 = vmatprep.subr.mxu0 0.0
  %1509 = vmatpush1.msra.mxu0 %v859
  %1510 = vmatprep.subr.mxu0 0.0
  %1511 = vmatpush1.msra.mxu0 %v860
  %1512 = vmatprep.subr.mxu0 0.0
  %1513 = vmatpush1.msra.mxu0 0.0
  %1514 = vmatprep.subr.mxu0 0.0
  %1515 = vmatpush1.msra.mxu0 0.0
  %1516 = vmatprep.subr.mxu0 0.0
  %1517 = vmatpush1.msra.mxu0 0.0
  %1518 = vmatprep.subr.mxu0 0.0
  %1519 = vmatpush1.msra.mxu0 0.0
  %1520 = vmatprep.subr.mxu0 0.0
  %1521 = vmatpush1.msra.mxu0 0.0
  %1522 = vmatprep.subr.mxu0 0.0
  %1523 = vmatpush1.msra.mxu0 0.0
  %1524 = vmatprep.subr.mxu0 0.0
  %1525 = vmatpush1.msra.mxu0 0.0
  %1526 = vmatprep.subr.mxu0 0.0
  %1527 = vmatpush1.msra.mxu0 0.0
  %1528 = vmatprep.subr.mxu0 0.0
  %1529 = vmatpush1.msra.mxu0 0.0
  %1530 = vmatprep.subr.mxu0 0.0
  %1531 = vmatpush1.msra.mxu0 0.0
  %1532 = vmatprep.subr.mxu0 0.0
  %1533 = vmatpush1.msra.mxu0 0.0
  %1534 = vmatprep.subr.mxu0 0.0
  %1535 = vmatpush1.msra.mxu0 0.0
  %1536 = vmatprep.subr.mxu0 0.0
  %1537 = vmatpush1.msra.mxu0 0.0
  %1538 = vmatprep.subr.mxu0 0.0
  %1539 = vmatpush1.msra.mxu0 0.0
  %1540 = vmatprep.subr.mxu0 0.0
  %1541 = vmatpush1.msra.mxu0 0.0
  %1542 = vmatprep.subr.mxu0 0.0
  %1543 = vmatpush1.msra.mxu0 0.0
  %1544 = vmatprep.subr.mxu0 0.0
  %1545 = vmatpush1.msra.mxu0 0.0
  %1546 = vmatprep.subr.mxu0 0.0
  %1547 = vmatpush1.msra.mxu0 0.0
  %1548 = vmatprep.subr.mxu0 0.0
  %1549 = vmatpush1.msra.mxu0 0.0
  %1550 = vmatprep.subr.mxu0 0.0
  %1551 = vmatpush1.msra.mxu0 0.0
  %1552 = vmatprep.subr.mxu0 0.0
  %1553 = vmatpush1.msra.mxu0 0.0
  %1554 = vmatprep.subr.mxu0 0.0
  %1555 = vmatpush1.msra.mxu0 0.0
  %1556 = vmatprep.subr.mxu0 0.0
  %1557 = vmatpush1.msra.mxu0 0.0
  %1558 = vmatprep.subr.mxu0 0.0
  %1559 = vmatpush1.msra.mxu0 0.0
  %1560 = vmatprep.subr.mxu0 0.0
  %1561 = vmatpush1.msra.mxu0 0.0
  %1562 = vmatprep.subr.mxu0 0.0
  %1563 = vmatpush1.msra.mxu0 0.0
  %1564 = vmatprep.subr.mxu0 0.0
  %1565 = vmatpush1.msra.mxu0 0.0
  %1566 = vmatprep.subr.mxu0 0.0
  %1567 = vmatpush1.msra.mxu0 0.0
  %1568 = vmatprep.mubr.f32.mxu0 0.0
  %1569 = vmatmul.mubr.f32.gmra.mrb[0].mxu0 %v1348
  %v1570 = vpop.f32.mrb[0].mxu0
  %v1571 = vadd.f32 %v867, %v1570
  %v1572 = vpop.f32.mrb[0].mxu0
  %1573 = vdwg.mxu0
  %v1574 = vmul.f32 %v1496, %v1571
  %v1575 = vadd.f32 %v1346, %v1574
  %v1576 = vtanh.pop %v1575
  %v1577 = vsub.f32 1.0, %v1503
  %v1578 = vmul.f32 %v1577, %v1576
  %v1579 = vmul.f32 %v1503, %v1343
  %v1580 = vadd.f32 %v1578, %v1579
  %v1581 = vld [vmem:[#allocation2 + $0x18] sm:$0xff]
  %v1582 = vld [vmem:[%s324 + $0x18] sm:$0xff]
  %v1583 = vld [vmem:[%s451 + $0x18] sm:$0xff]
  %v1585 = vsel %vm68, %v1580, 0
  %1587 = vmatprep.subr.mxu0 0.0
  %1588 = vmatpush1.msra.mxu0 %v847
  %1589 = vmatprep.subr.mxu0 0.0
  %1590 = vmatpush1.msra.mxu0 %v848
  %1591 = vmatprep.subr.mxu0 0.0
  %1592 = vmatpush1.msra.mxu0 %v849
  %1593 = vmatprep.subr.mxu0 0.0
  %1594 = vmatpush1.msra.mxu0 %v850
  %1595 = vmatprep.subr.mxu0 0.0
  %1596 = vmatpush1.msra.mxu0 0.0
  %1597 = vmatprep.subr.mxu0 0.0
  %1598 = vmatpush1.msra.mxu0 0.0
  %1599 = vmatprep.subr.mxu0 0.0
  %1600 = vmatpush1.msra.mxu0 0.0
  %1601 = vmatprep.subr.mxu0 0.0
  %1602 = vmatpush1.msra.mxu0 0.0
  %1603 = vmatprep.subr.mxu0 0.0
  %1604 = vmatpush1.msra.mxu0 0.0
  %1605 = vmatprep.subr.mxu0 0.0
  %1606 = vmatpush1.msra.mxu0 0.0
  %1607 = vmatprep.subr.mxu0 0.0
  %1608 = vmatpush1.msra.mxu0 0.0
  %1609 = vmatprep.subr.mxu0 0.0
  %1610 = vmatpush1.msra.mxu0 0.0
  %1611 = vmatprep.subr.mxu0 0.0
  %1612 = vmatpush1.msra.mxu0 0.0
  %1613 = vmatprep.subr.mxu0 0.0
  %1614 = vmatpush1.msra.mxu0 0.0
  %1615 = vmatprep.subr.mxu0 0.0
  %1616 = vmatpush1.msra.mxu0 0.0
  %1617 = vmatprep.subr.mxu0 0.0
  %1618 = vmatpush1.msra.mxu0 0.0
  %1619 = vmatprep.subr.mxu0 0.0
  %1620 = vmatpush1.msra.mxu0 0.0
  %1621 = vmatprep.subr.mxu0 0.0
  %1622 = vmatpush1.msra.mxu0 0.0
  %1623 = vmatprep.subr.mxu0 0.0
  %1624 = vmatpush1.msra.mxu0 0.0
  %1625 = vmatprep.subr.mxu0 0.0
  %1626 = vmatpush1.msra.mxu0 0.0
  %1627 = vmatprep.subr.mxu0 0.0
  %1628 = vmatpush1.msra.mxu0 0.0
  %1629 = vmatprep.subr.mxu0 0.0
  %1630 = vmatpush1.msra.mxu0 0.0
  %1631 = vmatprep.subr.mxu0 0.0
  %1632 = vmatpush1.msra.mxu0 0.0
  %1633 = vmatprep.subr.mxu0 0.0
  %1634 = vmatpush1.msra.mxu0 0.0
  %1635 = vmatprep.subr.mxu0 0.0
  %1636 = vmatpush1.msra.mxu0 0.0
  %1637 = vmatprep.subr.mxu0 0.0
  %1638 = vmatpush1.msra.mxu0 0.0
  %1639 = vmatprep.subr.mxu0 0.0
  %1640 = vmatpush1.msra.mxu0 0.0
  %1641 = vmatprep.subr.mxu0 0.0
  %1642 = vmatpush1.msra.mxu0 0.0
  %1643 = vmatprep.subr.mxu0 0.0
  %1644 = vmatpush1.msra.mxu0 0.0
  %1645 = vmatprep.subr.mxu0 0.0
  %1646 = vmatpush1.msra.mxu0 0.0
  %1647 = vmatprep.subr.mxu0 0.0
  %1648 = vmatpush1.msra.mxu0 0.0
  %1649 = vmatprep.subr.mxu0 0.0
  %1650 = vmatpush1.msra.mxu0 0.0
  %1651 = vmatprep.mubr.f32.mxu0 0.0
  %1652 = vmatmul.mubr.f32.gmra.mrb[0].mxu0 %v1585
  %v1653 = vpop.f32.mrb[0].mxu0
  %v1654 = vadd.f32 0.0, %v1653
  %v1655 = vpop.f32.mrb[0].mxu0
  %1656 = vdwg.mxu0
  %1657 = vmatprep.subr.mxu0 0.0
  %1658 = vmatpush1.msra.mxu0 %v852
  %1659 = vmatprep.subr.mxu0 0.0
  %1660 = vmatpush1.msra.mxu0 %v853
  %1661 = vmatprep.subr.mxu0 0.0
  %1662 = vmatpush1.msra.mxu0 %v854
  %1663 = vmatprep.subr.mxu0 0.0
  %1664 = vmatpush1.msra.mxu0 %v855
  %1665 = vmatprep.subr.mxu0 0.0
  %1666 = vmatpush1.msra.mxu0 0.0
  %1667 = vmatprep.subr.mxu0 0.0
  %1668 = vmatpush1.msra.mxu0 0.0
  %1669 = vmatprep.subr.mxu0 0.0
  %1670 = vmatpush1.msra.mxu0 0.0
  %1671 = vmatprep.subr.mxu0 0.0
  %1672 = vmatpush1.msra.mxu0 0.0
  %1673 = vmatprep.subr.mxu0 0.0
  %1674 = vmatpush1.msra.mxu0 0.0
  %1675 = vmatprep.subr.mxu0 0.0
  %1676 = vmatpush1.msra.mxu0 0.0
  %1677 = vmatprep.subr.mxu0 0.0
  %1678 = vmatpush1.msra.mxu0 0.0
  %1679 = vmatprep.subr.mxu0 0.0
  %1680 = vmatpush1.msra.mxu0 0.0
  %1681 = vmatprep.subr.mxu0 0.0
  %1682 = vmatpush1.msra.mxu0 0.0
  %1683 = vmatprep.subr.mxu0 0.0
  %1684 = vmatpush1.msra.mxu0 0.0
  %1685 = vmatprep.subr.mxu0 0.0
  %1686 = vmatpush1.msra.mxu0 0.0
  %1687 = vmatprep.subr.mxu0 0.0
  %1688 = vmatpush1.msra.mxu0 0.0
  %1689 = vmatprep.subr.mxu0 0.0
  %1690 = vmatpush1.msra.mxu0 0.0
  %1691 = vmatprep.subr.mxu0 0.0
  %1692 = vmatpush1.msra.mxu0 0.0
  %1693 = vmatprep.subr.mxu0 0.0
  %1694 = vmatpush1.msra.mxu0 0.0
  %1695 = vmatprep.subr.mxu0 0.0
  %1696 = vmatpush1.msra.mxu0 0.0
  %1697 = vmatprep.subr.mxu0 0.0
  %1698 = vmatpush1.msra.mxu0 0.0
  %1699 = vmatprep.subr.mxu0 0.0
  %1700 = vmatpush1.msra.mxu0 0.0
  %1701 = vmatprep.subr.mxu0 0.0
  %1702 = vmatpush1.msra.mxu0 0.0
  %1703 = vmatprep.subr.mxu0 0.0
  %1704 = vmatpush1.msra.mxu0 0.0
  %1705 = vmatprep.subr.mxu0 0.0
  %1706 = vmatpush1.msra.mxu0 0.0
  %1707 = vmatprep.subr.mxu0 0.0
  %1708 = vmatpush1.msra.mxu0 0.0
  %1709 = vmatprep.subr.mxu0 0.0
  %1710 = vmatpush1.msra.mxu0 0.0
  %1711 = vmatprep.subr.mxu0 0.0
  %1712 = vmatpush1.msra.mxu0 0.0
  %1713 = vmatprep.subr.mxu0 0.0
  %1714 = vmatpush1.msra.mxu0 0.0
  %1715 = vmatprep.subr.mxu0 0.0
  %1716 = vmatpush1.msra.mxu0 0.0
  %1717 = vmatprep.subr.mxu0 0.0
  %1718 = vmatpush1.msra.mxu0 0.0
  %1719 = vmatprep.subr.mxu0 0.0
  %1720 = vmatpush1.msra.mxu0 0.0
  %1721 = vmatprep.mubr.f32.mxu0 0.0
  %1722 = vmatmul.mubr.f32.gmra.mrb[0].mxu0 %v1585
  %v1723 = vpop.f32.mrb[0].mxu0
  %v1724 = vadd.f32 0.0, %v1723
  %v1725 = vpop.f32.mrb[0].mxu0
  %1726 = vdwg.mxu0
  %v1727 = vadd.f32 %v1581, %v1654
  %v1728 = vxor.u32 %v1727, 2147483648
  %v1729 = vmul.f32 %v1728, 1.442695
  %v1730 = vpow.pop %v1729
  %v1731 = vadd.f32 %v1730, 1.0
  %v1732 = vrcp.pop %v1731
  %v1733 = vmul.f32 1.0, %v1732
  %v1734 = vadd.f32 %v1582, %v1724
  %v1735 = vxor.u32 %v1734, 2147483648
  %v1736 = vmul.f32 %v1735, 1.442695
  %v1737 = vpow.pop %v1736
  %v1738 = vadd.f32 %v1737, 1.0
  %v1739 = vrcp.pop %v1738
  %v1740 = vmul.f32 1.0, %v1739
  %1741 = vmatprep.subr.mxu0 0.0
  %1742 = vmatpush1.msra.mxu0 %v857
  %1743 = vmatprep.subr.mxu0 0.0
  %1744 = vmatpush1.msra.mxu0 %v858
  %1745 = vmatprep.subr.mxu0 0.0
  %1746 = vmatpush1.msra.mxu0 %v859
  %1747 = vmatprep.subr.mxu0 0.0
  %1748 = vmatpush1.msra.mxu0 %v860
  %1749 = vmatprep.subr.mxu0 0.0
  %1750 = vmatpush1.msra.mxu0 0.0
  %1751 = vmatprep.subr.mxu0 0.0
  %1752 = vmatpush1.msra.mxu0 0.0
  %1753 = vmatprep.subr.mxu0 0.0
  %1754 = vmatpush1.msra.mxu0 0.0
  %1755 = vmatprep.subr.mxu0 0.0
  %1756 = vmatpush1.msra.mxu0 0.0
  %1757 = vmatprep.subr.mxu0 0.0
  %1758 = vmatpush1.msra.mxu0 0.0
  %1759 = vmatprep.subr.mxu0 0.0
  %1760 = vmatpush1.msra.mxu0 0.0
  %1761 = vmatprep.subr.mxu0 0.0
  %1762 = vmatpush1.msra.mxu0 0.0
  %1763 = vmatprep.subr.mxu0 0.0
  %1764 = vmatpush1.msra.mxu0 0.0
  %1765 = vmatprep.subr.mxu0 0.0
  %1766 = vmatpush1.msra.mxu0 0.0
  %1767 = vmatprep.subr.mxu0 0.0
  %1768 = vmatpush1.msra.mxu0 0.0
  %1769 = vmatprep.subr.mxu0 0.0
  %1770 = vmatpush1.msra.mxu0 0.0
  %1771 = vmatprep.subr.mxu0 0.0
  %1772 = vmatpush1.msra.mxu0 0.0
  %1773 = vmatprep.subr.mxu0 0.0
  %1774 = vmatpush1.msra.mxu0 0.0
  %1775 = vmatprep.subr.mxu0 0.0
  %1776 = vmatpush1.msra.mxu0 0.0
  %1777 = vmatprep.subr.mxu0 0.0
  %1778 = vmatpush1.msra.mxu0 0.0
  %1779 = vmatprep.subr.mxu0 0.0
  %1780 = vmatpush1.msra.mxu0 0.0
  %1781 = vmatprep.subr.mxu0 0.0
  %1782 = vmatpush1.msra.mxu0 0.0
  %1783 = vmatprep.subr.mxu0 0.0
  %1784 = vmatpush1.msra.mxu0 0.0
  %1785 = vmatprep.subr.mxu0 0.0
  %1786 = vmatpush1.msra.mxu0 0.0
  %1787 = vmatprep.subr.mxu0 0.0
  %1788 = vmatpush1.msra.mxu0 0.0
  %1789 = vmatprep.subr.mxu0 0.0
  %1790 = vmatpush1.msra.mxu0 0.0
  %1791 = vmatprep.subr.mxu0 0.0
  %1792 = vmatpush1.msra.mxu0 0.0
  %1793 = vmatprep.subr.mxu0 0.0
  %1794 = vmatpush1.msra.mxu0 0.0
  %1795 = vmatprep.subr.mxu0 0.0
  %1796 = vmatpush1.msra.mxu0 0.0
  %1797 = vmatprep.subr.mxu0 0.0
  %1798 = vmatpush1.msra.mxu0 0.0
  %1799 = vmatprep.subr.mxu0 0.0
  %1800 = vmatpush1.msra.mxu0 0.0
  %1801 = vmatprep.subr.mxu0 0.0
  %1802 = vmatpush1.msra.mxu0 0.0
  %1803 = vmatprep.subr.mxu0 0.0
  %1804 = vmatpush1.msra.mxu0 0.0
  %1805 = vmatprep.mubr.f32.mxu0 0.0
  %1806 = vmatmul.mubr.f32.gmra.mrb[0].mxu0 %v1585
  %v1807 = vpop.f32.mrb[0].mxu0
  %v1808 = vadd.f32 %v867, %v1807
  %v1809 = vpop.f32.mrb[0].mxu0
  %1810 = vdwg.mxu0
  %v1811 = vmul.f32 %v1733, %v1808
  %v1812 = vadd.f32 %v1583, %v1811
  %v1813 = vtanh.pop %v1812
  %v1814 = vsub.f32 1.0, %v1740
  %v1815 = vmul.f32 %v1814, %v1813
  %v1816 = vmul.f32 %v1740, %v1580
  %v1817 = vadd.f32 %v1815, %v1816
  %v1818 = vld [vmem:[#allocation2 + $0x20] sm:$0xff]
  %v1819 = vld [vmem:[%s324 + $0x20] sm:$0xff]
  %v1820 = vld [vmem:[%s451 + $0x20] sm:$0xff]
  %v1822 = vsel %vm68, %v1817, 0
  %1824 = vmatprep.subr.mxu0 0.0
  %1825 = vmatpush1.msra.mxu0 %v847
  %1826 = vmatprep.subr.mxu0 0.0
  %1827 = vmatpush1.msra.mxu0 %v848
  %1828 = vmatprep.subr.mxu0 0.0
  %1829 = vmatpush1.msra.mxu0 %v849
  %1830 = vmatprep.subr.mxu0 0.0
  %1831 = vmatpush1.msra.mxu0 %v850
  %1832 = vmatprep.subr.mxu0 0.0
  %1833 = vmatpush1.msra.mxu0 0.0
  %1834 = vmatprep.subr.mxu0 0.0
  %1835 = vmatpush1.msra.mxu0 0.0
  %1836 = vmatprep.subr.mxu0 0.0
  %1837 = vmatpush1.msra.mxu0 0.0
  %1838 = vmatprep.subr.mxu0 0.0
  %1839 = vmatpush1.msra.mxu0 0.0
  %1840 = vmatprep.subr.mxu0 0.0
  %1841 = vmatpush1.msra.mxu0 0.0
  %1842 = vmatprep.subr.mxu0 0.0
  %1843 = vmatpush1.msra.mxu0 0.0
  %1844 = vmatprep.subr.mxu0 0.0
  %1845 = vmatpush1.msra.mxu0 0.0
  %1846 = vmatprep.subr.mxu0 0.0
  %1847 = vmatpush1.msra.mxu0 0.0
  %1848 = vmatprep.subr.mxu0 0.0
  %1849 = vmatpush1.msra.mxu0 0.0
  %1850 = vmatprep.subr.mxu0 0.0
  %1851 = vmatpush1.msra.mxu0 0.0
  %1852 = vmatprep.subr.mxu0 0.0
  %1853 = vmatpush1.msra.mxu0 0.0
  %1854 = vmatprep.subr.mxu0 0.0
  %1855 = vmatpush1.msra.mxu0 0.0
  %1856 = vmatprep.subr.mxu0 0.0
  %1857 = vmatpush1.msra.mxu0 0.0
  %1858 = vmatprep.subr.mxu0 0.0
  %1859 = vmatpush1.msra.mxu0 0.0
  %1860 = vmatprep.subr.mxu0 0.0
  %1861 = vmatpush1.msra.mxu0 0.0
  %1862 = vmatprep.subr.mxu0 0.0
  %1863 = vmatpush1.msra.mxu0 0.0
  %1864 = vmatprep.subr.mxu0 0.0
  %1865 = vmatpush1.msra.mxu0 0.0
  %1866 = vmatprep.subr.mxu0 0.0
  %1867 = vmatpush1.msra.mxu0 0.0
  %1868 = vmatprep.subr.mxu0 0.0
  %1869 = vmatpush1.msra.mxu0 0.0
  %1870 = vmatprep.subr.mxu0 0.0
  %1871 = vmatpush1.msra.mxu0 0.0
  %1872 = vmatprep.subr.mxu0 0.0
  %1873 = vmatpush1.msra.mxu0 0.0
  %1874 = vmatprep.subr.mxu0 0.0
  %1875 = vmatpush1.msra.mxu0 0.0
  %1876 = vmatprep.subr.mxu0 0.0
  %1877 = vmatpush1.msra.mxu0 0.0
  %1878 = vmatprep.subr.mxu0 0.0
  %1879 = vmatpush1.msra.mxu0 0.0
  %1880 = vmatprep.subr.mxu0 0.0
  %1881 = vmatpush1.msra.mxu0 0.0
  %1882 = vmatprep.subr.mxu0 0.0
  %1883 = vmatpush1.msra.mxu0 0.0
  %1884 = vmatprep.subr.mxu0 0.0
  %1885 = vmatpush1.msra.mxu0 0.0
  %1886 = vmatprep.subr.mxu0 0.0
  %1887 = vmatpush1.msra.mxu0 0.0
  %1888 = vmatprep.mubr.f32.mxu0 0.0
  %1889 = vmatmul.mubr.f32.gmra.mrb[0].mxu0 %v1822
  %v1890 = vpop.f32.mrb[0].mxu0
  %v1891 = vadd.f32 0.0, %v1890
  %v1892 = vpop.f32.mrb[0].mxu0
  %1893 = vdwg.mxu0
  %1894 = vmatprep.subr.mxu0 0.0
  %1895 = vmatpush1.msra.mxu0 %v852
  %1896 = vmatprep.subr.mxu0 0.0
  %1897 = vmatpush1.msra.mxu0 %v853
  %1898 = vmatprep.subr.mxu0 0.0
  %1899 = vmatpush1.msra.mxu0 %v854
  %1900 = vmatprep.subr.mxu0 0.0
  %1901 = vmatpush1.msra.mxu0 %v855
  %1902 = vmatprep.subr.mxu0 0.0
  %1903 = vmatpush1.msra.mxu0 0.0
  %1904 = vmatprep.subr.mxu0 0.0
  %1905 = vmatpush1.msra.mxu0 0.0
  %1906 = vmatprep.subr.mxu0 0.0
  %1907 = vmatpush1.msra.mxu0 0.0
  %1908 = vmatprep.subr.mxu0 0.0
  %1909 = vmatpush1.msra.mxu0 0.0
  %1910 = vmatprep.subr.mxu0 0.0
  %1911 = vmatpush1.msra.mxu0 0.0
  %1912 = vmatprep.subr.mxu0 0.0
  %1913 = vmatpush1.msra.mxu0 0.0
  %1914 = vmatprep.subr.mxu0 0.0
  %1915 = vmatpush1.msra.mxu0 0.0
  %1916 = vmatprep.subr.mxu0 0.0
  %1917 = vmatpush1.msra.mxu0 0.0
  %1918 = vmatprep.subr.mxu0 0.0
  %1919 = vmatpush1.msra.mxu0 0.0
  %1920 = vmatprep.subr.mxu0 0.0
  %1921 = vmatpush1.msra.mxu0 0.0
  %1922 = vmatprep.subr.mxu0 0.0
  %1923 = vmatpush1.msra.mxu0 0.0
  %1924 = vmatprep.subr.mxu0 0.0
  %1925 = vmatpush1.msra.mxu0 0.0
  %1926 = vmatprep.subr.mxu0 0.0
  %1927 = vmatpush1.msra.mxu0 0.0
  %1928 = vmatprep.subr.mxu0 0.0
  %1929 = vmatpush1.msra.mxu0 0.0
  %1930 = vmatprep.subr.mxu0 0.0
  %1931 = vmatpush1.msra.mxu0 0.0
  %1932 = vmatprep.subr.mxu0 0.0
  %1933 = vmatpush1.msra.mxu0 0.0
  %1934 = vmatprep.subr.mxu0 0.0
  %1935 = vmatpush1.msra.mxu0 0.0
  %1936 = vmatprep.subr.mxu0 0.0
  %1937 = vmatpush1.msra.mxu0 0.0
  %1938 = vmatprep.subr.mxu0 0.0
  %1939 = vmatpush1.msra.mxu0 0.0
  %1940 = vmatprep.subr.mxu0 0.0
  %1941 = vmatpush1.msra.mxu0 0.0
  %1942 = vmatprep.subr.mxu0 0.0
  %1943 = vmatpush1.msra.mxu0 0.0
  %1944 = vmatprep.subr.mxu0 0.0
  %1945 = vmatpush1.msra.mxu0 0.0
  %1946 = vmatprep.subr.mxu0 0.0
  %1947 = vmatpush1.msra.mxu0 0.0
  %1948 = vmatprep.subr.mxu0 0.0
  %1949 = vmatpush1.msra.mxu0 0.0
  %1950 = vmatprep.subr.mxu0 0.0
  %1951 = vmatpush1.msra.mxu0 0.0
  %1952 = vmatprep.subr.mxu0 0.0
  %1953 = vmatpush1.msra.mxu0 0.0
  %1954 = vmatprep.subr.mxu0 0.0
  %1955 = vmatpush1.msra.mxu0 0.0
  %1956 = vmatprep.subr.mxu0 0.0
  %1957 = vmatpush1.msra.mxu0 0.0
  %1958 = vmatprep.mubr.f32.mxu0 0.0
  %1959 = vmatmul.mubr.f32.gmra.mrb[0].mxu0 %v1822
  %v1960 = vpop.f32.mrb[0].mxu0
  %v1961 = vadd.f32 0.0, %v1960
  %v1962 = vpop.f32.mrb[0].mxu0
  %1963 = vdwg.mxu0
  %v1964 = vadd.f32 %v1818, %v1891
  %v1965 = vxor.u32 %v1964, 2147483648
  %v1966 = vmul.f32 %v1965, 1.442695
  %v1967 = vpow.pop %v1966
  %v1968 = vadd.f32 %v1967, 1.0
  %v1969 = vrcp.pop %v1968
  %v1970 = vmul.f32 1.0, %v1969
  %v1971 = vadd.f32 %v1819, %v1961
  %v1972 = vxor.u32 %v1971, 2147483648
  %v1973 = vmul.f32 %v1972, 1.442695
  %v1974 = vpow.pop %v1973
  %v1975 = vadd.f32 %v1974, 1.0
  %v1976 = vrcp.pop %v1975
  %v1977 = vmul.f32 1.0, %v1976
  %1978 = vmatprep.subr.mxu0 0.0
  %1979 = vmatpush1.msra.mxu0 %v857
  %1980 = vmatprep.subr.mxu0 0.0
  %1981 = vmatpush1.msra.mxu0 %v858
  %1982 = vmatprep.subr.mxu0 0.0
  %1983 = vmatpush1.msra.mxu0 %v859
  %1984 = vmatprep.subr.mxu0 0.0
  %1985 = vmatpush1.msra.mxu0 %v860
  %1986 = vmatprep.subr.mxu0 0.0
  %1987 = vmatpush1.msra.mxu0 0.0
  %1988 = vmatprep.subr.mxu0 0.0
  %1989 = vmatpush1.msra.mxu0 0.0
  %1990 = vmatprep.subr.mxu0 0.0
  %1991 = vmatpush1.msra.mxu0 0.0
  %1992 = vmatprep.subr.mxu0 0.0
  %1993 = vmatpush1.msra.mxu0 0.0
  %1994 = vmatprep.subr.mxu0 0.0
  %1995 = vmatpush1.msra.mxu0 0.0
  %1996 = vmatprep.subr.mxu0 0.0
  %1997 = vmatpush1.msra.mxu0 0.0
  %1998 = vmatprep.subr.mxu0 0.0
  %1999 = vmatpush1.msra.mxu0 0.0
  %2000 = vmatprep.subr.mxu0 0.0
  %2001 = vmatpush1.msra.mxu0 0.0
  %2002 = vmatprep.subr.mxu0 0.0
  %2003 = vmatpush1.msra.mxu0 0.0
  %2004 = vmatprep.subr.mxu0 0.0
  %2005 = vmatpush1.msra.mxu0 0.0
  %2006 = vmatprep.subr.mxu0 0.0
  %2007 = vmatpush1.msra.mxu0 0.0
  %2008 = vmatprep.subr.mxu0 0.0
  %2009 = vmatpush1.msra.mxu0 0.0
  %2010 = vmatprep.subr.mxu0 0.0
  %2011 = vmatpush1.msra.mxu0 0.0
  %2012 = vmatprep.subr.mxu0 0.0
  %2013 = vmatpush1.msra.mxu0 0.0
  %2014 = vmatprep.subr.mxu0 0.0
  %2015 = vmatpush1.msra.mxu0 0.0
  %2016 = vmatprep.subr.mxu0 0.0
  %2017 = vmatpush1.msra.mxu0 0.0
  %2018 = vmatprep.subr.mxu0 0.0
  %2019 = vmatpush1.msra.mxu0 0.0
  %2020 = vmatprep.subr.mxu0 0.0
  %2021 = vmatpush1.msra.mxu0 0.0
  %2022 = vmatprep.subr.mxu0 0.0
  %2023 = vmatpush1.msra.mxu0 0.0
  %2024 = vmatprep.subr.mxu0 0.0
  %2025 = vmatpush1.msra.mxu0 0.0
  %2026 = vmatprep.subr.mxu0 0.0
  %2027 = vmatpush1.msra.mxu0 0.0
  %2028 = vmatprep.subr.mxu0 0.0
  %2029 = vmatpush1.msra.mxu0 0.0
  %2030 = vmatprep.subr.mxu0 0.0
  %2031 = vmatpush1.msra.mxu0 0.0
  %2032 = vmatprep.subr.mxu0 0.0
  %2033 = vmatpush1.msra.mxu0 0.0
  %2034 = vmatprep.subr.mxu0 0.0
  %2035 = vmatpush1.msra.mxu0 0.0
  %2036 = vmatprep.subr.mxu0 0.0
  %2037 = vmatpush1.msra.mxu0 0.0
  %2038 = vmatprep.subr.mxu0 0.0
  %2039 = vmatpush1.msra.mxu0 0.0
  %2040 = vmatprep.subr.mxu0 0.0
  %2041 = vmatpush1.msra.mxu0 0.0
  %2042 = vmatprep.mubr.f32.mxu0 0.0
  %2043 = vmatmul.mubr.f32.gmra.mrb[0].mxu0 %v1822
  %v2044 = vpop.f32.mrb[0].mxu0
  %v2045 = vadd.f32 %v867, %v2044
  %v2046 = vpop.f32.mrb[0].mxu0
  %2047 = vdwg.mxu0
  %v2048 = vmul.f32 %v1970, %v2045
  %v2049 = vadd.f32 %v1820, %v2048
  %v2050 = vtanh.pop %v2049
  %v2051 = vsub.f32 1.0, %v1977
  %v2052 = vmul.f32 %v2051, %v2050
  %v2053 = vmul.f32 %v1977, %v1817
  %v2054 = vadd.f32 %v2052, %v2053
  %v2055 = vld [vmem:[#allocation2 + $0x28] sm:$0xff]
  %v2056 = vld [vmem:[%s324 + $0x28] sm:$0xff]
  %v2057 = vld [vmem:[%s451 + $0x28] sm:$0xff]
  %v2059 = vsel %vm68, %v2054, 0
  %2061 = vmatprep.subr.mxu0 0.0
  %2062 = vmatpush1.msra.mxu0 %v847
  %2063 = vmatprep.subr.mxu0 0.0
  %2064 = vmatpush1.msra.mxu0 %v848
  %2065 = vmatprep.subr.mxu0 0.0
  %2066 = vmatpush1.msra.mxu0 %v849
  %2067 = vmatprep.subr.mxu0 0.0
  %2068 = vmatpush1.msra.mxu0 %v850
  %2069 = vmatprep.subr.mxu0 0.0
  %2070 = vmatpush1.msra.mxu0 0.0
  %2071 = vmatprep.subr.mxu0 0.0
  %2072 = vmatpush1.msra.mxu0 0.0
  %2073 = vmatprep.subr.mxu0 0.0
  %2074 = vmatpush1.msra.mxu0 0.0
  %2075 = vmatprep.subr.mxu0 0.0
  %2076 = vmatpush1.msra.mxu0 0.0
  %2077 = vmatprep.subr.mxu0 0.0
  %2078 = vmatpush1.msra.mxu0 0.0
  %2079 = vmatprep.subr.mxu0 0.0
  %2080 = vmatpush1.msra.mxu0 0.0
  %2081 = vmatprep.subr.mxu0 0.0
  %2082 = vmatpush1.msra.mxu0 0.0
  %2083 = vmatprep.subr.mxu0 0.0
  %2084 = vmatpush1.msra.mxu0 0.0
  %2085 = vmatprep.subr.mxu0 0.0
  %2086 = vmatpush1.msra.mxu0 0.0
  %2087 = vmatprep.subr.mxu0 0.0
  %2088 = vmatpush1.msra.mxu0 0.0
  %2089 = vmatprep.subr.mxu0 0.0
  %2090 = vmatpush1.msra.mxu0 0.0
  %2091 = vmatprep.subr.mxu0 0.0
  %2092 = vmatpush1.msra.mxu0 0.0
  %2093 = vmatprep.subr.mxu0 0.0
  %2094 = vmatpush1.msra.mxu0 0.0
  %2095 = vmatprep.subr.mxu0 0.0
  %2096 = vmatpush1.msra.mxu0 0.0
  %2097 = vmatprep.subr.mxu0 0.0
  %2098 = vmatpush1.msra.mxu0 0.0
  %2099 = vmatprep.subr.mxu0 0.0
  %2100 = vmatpush1.msra.mxu0 0.0
  %2101 = vmatprep.subr.mxu0 0.0
  %2102 = vmatpush1.msra.mxu0 0.0
  %2103 = vmatprep.subr.mxu0 0.0
  %2104 = vmatpush1.msra.mxu0 0.0
  %2105 = vmatprep.subr.mxu0 0.0
  %2106 = vmatpush1.msra.mxu0 0.0
  %2107 = vmatprep.subr.mxu0 0.0
  %2108 = vmatpush1.msra.mxu0 0.0
  %2109 = vmatprep.subr.mxu0 0.0
  %2110 = vmatpush1.msra.mxu0 0.0
  %2111 = vmatprep.subr.mxu0 0.0
  %2112 = vmatpush1.msra.mxu0 0.0
  %2113 = vmatprep.subr.mxu0 0.0
  %2114 = vmatpush1.msra.mxu0 0.0
  %2115 = vmatprep.subr.mxu0 0.0
  %2116 = vmatpush1.msra.mxu0 0.0
  %2117 = vmatprep.subr.mxu0 0.0
  %2118 = vmatpush1.msra.mxu0 0.0
  %2119 = vmatprep.subr.mxu0 0.0
  %2120 = vmatpush1.msra.mxu0 0.0
  %2121 = vmatprep.subr.mxu0 0.0
  %2122 = vmatpush1.msra.mxu0 0.0
  %2123 = vmatprep.subr.mxu0 0.0
  %2124 = vmatpush1.msra.mxu0 0.0
  %2125 = vmatprep.mubr.f32.mxu0 0.0
  %2126 = vmatmul.mubr.f32.gmra.mrb[0].mxu0 %v2059
  %v2127 = vpop.f32.mrb[0].mxu0
  %v2128 = vadd.f32 0.0, %v2127
  %v2129 = vpop.f32.mrb[0].mxu0
  %2130 = vdwg.mxu0
  %2131 = vmatprep.subr.mxu0 0.0
  %2132 = vmatpush1.msra.mxu0 %v852
  %2133 = vmatprep.subr.mxu0 0.0
  %2134 = vmatpush1.msra.mxu0 %v853
  %2135 = vmatprep.subr.mxu0 0.0
  %2136 = vmatpush1.msra.mxu0 %v854
  %2137 = vmatprep.subr.mxu0 0.0
  %2138 = vmatpush1.msra.mxu0 %v855
  %2139 = vmatprep.subr.mxu0 0.0
  %2140 = vmatpush1.msra.mxu0 0.0
  %2141 = vmatprep.subr.mxu0 0.0
  %2142 = vmatpush1.msra.mxu0 0.0
  %2143 = vmatprep.subr.mxu0 0.0
  %2144 = vmatpush1.msra.mxu0 0.0
  %2145 = vmatprep.subr.mxu0 0.0
  %2146 = vmatpush1.msra.mxu0 0.0
  %2147 = vmatprep.subr.mxu0 0.0
  %2148 = vmatpush1.msra.mxu0 0.0
  %2149 = vmatprep.subr.mxu0 0.0
  %2150 = vmatpush1.msra.mxu0 0.0
  %2151 = vmatprep.subr.mxu0 0.0
  %2152 = vmatpush1.msra.mxu0 0.0
  %2153 = vmatprep.subr.mxu0 0.0
  %2154 = vmatpush1.msra.mxu0 0.0
  %2155 = vmatprep.subr.mxu0 0.0
  %2156 = vmatpush1.msra.mxu0 0.0
  %2157 = vmatprep.subr.mxu0 0.0
  %2158 = vmatpush1.msra.mxu0 0.0
  %2159 = vmatprep.subr.mxu0 0.0
  %2160 = vmatpush1.msra.mxu0 0.0
  %2161 = vmatprep.subr.mxu0 0.0
  %2162 = vmatpush1.msra.mxu0 0.0
  %2163 = vmatprep.subr.mxu0 0.0
  %2164 = vmatpush1.msra.mxu0 0.0
  %2165 = vmatprep.subr.mxu0 0.0
  %2166 = vmatpush1.msra.mxu0 0.0
  %2167 = vmatprep.subr.mxu0 0.0
  %2168 = vmatpush1.msra.mxu0 0.0
  %2169 = vmatprep.subr.mxu0 0.0
  %2170 = vmatpush1.msra.mxu0 0.0
  %2171 = vmatprep.subr.mxu0 0.0
  %2172 = vmatpush1.msra.mxu0 0.0
  %2173 = vmatprep.subr.mxu0 0.0
  %2174 = vmatpush1.msra.mxu0 0.0
  %2175 = vmatprep.subr.mxu0 0.0
  %2176 = vmatpush1.msra.mxu0 0.0
  %2177 = vmatprep.subr.mxu0 0.0
  %2178 = vmatpush1.msra.mxu0 0.0
  %2179 = vmatprep.subr.mxu0 0.0
  %2180 = vmatpush1.msra.mxu0 0.0
  %2181 = vmatprep.subr.mxu0 0.0
  %2182 = vmatpush1.msra.mxu0 0.0
  %2183 = vmatprep.subr.mxu0 0.0
  %2184 = vmatpush1.msra.mxu0 0.0
  %2185 = vmatprep.subr.mxu0 0.0
  %2186 = vmatpush1.msra.mxu0 0.0
  %2187 = vmatprep.subr.mxu0 0.0
  %2188 = vmatpush1.msra.mxu0 0.0
  %2189 = vmatprep.subr.mxu0 0.0
  %2190 = vmatpush1.msra.mxu0 0.0
  %2191 = vmatprep.subr.mxu0 0.0
  %2192 = vmatpush1.msra.mxu0 0.0
  %2193 = vmatprep.subr.mxu0 0.0
  %2194 = vmatpush1.msra.mxu0 0.0
  %2195 = vmatprep.mubr.f32.mxu0 0.0
  %2196 = vmatmul.mubr.f32.gmra.mrb[0].mxu0 %v2059
  %v2197 = vpop.f32.mrb[0].mxu0
  %v2198 = vadd.f32 0.0, %v2197
  %v2199 = vpop.f32.mrb[0].mxu0
  %2200 = vdwg.mxu0
  %v2201 = vadd.f32 %v2055, %v2128
  %v2202 = vxor.u32 %v2201, 2147483648
  %v2203 = vmul.f32 %v2202, 1.442695
  %v2204 = vpow.pop %v2203
  %v2205 = vadd.f32 %v2204, 1.0
  %v2206 = vrcp.pop %v2205
  %v2207 = vmul.f32 1.0, %v2206
  %v2208 = vadd.f32 %v2056, %v2198
  %v2209 = vxor.u32 %v2208, 2147483648
  %v2210 = vmul.f32 %v2209, 1.442695
  %v2211 = vpow.pop %v2210
  %v2212 = vadd.f32 %v2211, 1.0
  %v2213 = vrcp.pop %v2212
  %v2214 = vmul.f32 1.0, %v2213
  %2215 = vmatprep.subr.mxu0 0.0
  %2216 = vmatpush1.msra.mxu0 %v857
  %2217 = vmatprep.subr.mxu0 0.0
  %2218 = vmatpush1.msra.mxu0 %v858
  %2219 = vmatprep.subr.mxu0 0.0
  %2220 = vmatpush1.msra.mxu0 %v859
  %2221 = vmatprep.subr.mxu0 0.0
  %2222 = vmatpush1.msra.mxu0 %v860
  %2223 = vmatprep.subr.mxu0 0.0
  %2224 = vmatpush1.msra.mxu0 0.0
  %2225 = vmatprep.subr.mxu0 0.0
  %2226 = vmatpush1.msra.mxu0 0.0
  %2227 = vmatprep.subr.mxu0 0.0
  %2228 = vmatpush1.msra.mxu0 0.0
  %2229 = vmatprep.subr.mxu0 0.0
  %2230 = vmatpush1.msra.mxu0 0.0
  %2231 = vmatprep.subr.mxu0 0.0
  %2232 = vmatpush1.msra.mxu0 0.0
  %2233 = vmatprep.subr.mxu0 0.0
  %2234 = vmatpush1.msra.mxu0 0.0
  %2235 = vmatprep.subr.mxu0 0.0
  %2236 = vmatpush1.msra.mxu0 0.0
  %2237 = vmatprep.subr.mxu0 0.0
  %2238 = vmatpush1.msra.mxu0 0.0
  %2239 = vmatprep.subr.mxu0 0.0
  %2240 = vmatpush1.msra.mxu0 0.0
  %2241 = vmatprep.subr.mxu0 0.0
  %2242 = vmatpush1.msra.mxu0 0.0
  %2243 = vmatprep.subr.mxu0 0.0
  %2244 = vmatpush1.msra.mxu0 0.0
  %2245 = vmatprep.subr.mxu0 0.0
  %2246 = vmatpush1.msra.mxu0 0.0
  %2247 = vmatprep.subr.mxu0 0.0
  %2248 = vmatpush1.msra.mxu0 0.0
  %2249 = vmatprep.subr.mxu0 0.0
  %2250 = vmatpush1.msra.mxu0 0.0
  %2251 = vmatprep.subr.mxu0 0.0
  %2252 = vmatpush1.msra.mxu0 0.0
  %2253 = vmatprep.subr.mxu0 0.0
  %2254 = vmatpush1.msra.mxu0 0.0
  %2255 = vmatprep.subr.mxu0 0.0
  %2256 = vmatpush1.msra.mxu0 0.0
  %2257 = vmatprep.subr.mxu0 0.0
  %2258 = vmatpush1.msra.mxu0 0.0
  %2259 = vmatprep.subr.mxu0 0.0
  %2260 = vmatpush1.msra.mxu0 0.0
  %2261 = vmatprep.subr.mxu0 0.0
  %2262 = vmatpush1.msra.mxu0 0.0
  %2263 = vmatprep.subr.mxu0 0.0
  %2264 = vmatpush1.msra.mxu0 0.0
  %2265 = vmatprep.subr.mxu0 0.0
  %2266 = vmatpush1.msra.mxu0 0.0
  %2267 = vmatprep.subr.mxu0 0.0
  %2268 = vmatpush1.msra.mxu0 0.0
  %2269 = vmatprep.subr.mxu0 0.0
  %2270 = vmatpush1.msra.mxu0 0.0
  %2271 = vmatprep.subr.mxu0 0.0
  %2272 = vmatpush1.msra.mxu0 0.0
  %2273 = vmatprep.subr.mxu0 0.0
  %2274 = vmatpush1.msra.mxu0 0.0
  %2275 = vmatprep.subr.mxu0 0.0
  %2276 = vmatpush1.msra.mxu0 0.0
  %2277 = vmatprep.subr.mxu0 0.0
  %2278 = vmatpush1.msra.mxu0 0.0
  %2279 = vmatprep.mubr.f32.mxu0 0.0
  %2280 = vmatmul.mubr.f32.gmra.mrb[0].mxu0 %v2059
  %v2281 = vpop.f32.mrb[0].mxu0
  %v2282 = vadd.f32 %v867, %v2281
  %v2283 = vpop.f32.mrb[0].mxu0
  %2284 = vdwg.mxu0
  %v2285 = vmul.f32 %v2207, %v2282
  %v2286 = vadd.f32 %v2057, %v2285
  %v2287 = vtanh.pop %v2286
  %v2288 = vsub.f32 1.0, %v2214
  %v2289 = vmul.f32 %v2288, %v2287
  %v2290 = vmul.f32 %v2214, %v2054
  %v2291 = vadd.f32 %v2289, %v2290
  %v2292 = vld [vmem:[#allocation2 + $0x30] sm:$0xff]
  %v2293 = vld [vmem:[%s324 + $0x30] sm:$0xff]
  %v2294 = vld [vmem:[%s451 + $0x30] sm:$0xff]
  %v2296 = vsel %vm68, %v2291, 0
  %2298 = vmatprep.subr.mxu0 0.0
  %2299 = vmatpush1.msra.mxu0 %v847
  %2300 = vmatprep.subr.mxu0 0.0
  %2301 = vmatpush1.msra.mxu0 %v848
  %2302 = vmatprep.subr.mxu0 0.0
  %2303 = vmatpush1.msra.mxu0 %v849
  %2304 = vmatprep.subr.mxu0 0.0
  %2305 = vmatpush1.msra.mxu0 %v850
  %2306 = vmatprep.subr.mxu0 0.0
  %2307 = vmatpush1.msra.mxu0 0.0
  %2308 = vmatprep.subr.mxu0 0.0
  %2309 = vmatpush1.msra.mxu0 0.0
  %2310 = vmatprep.subr.mxu0 0.0
  %2311 = vmatpush1.msra.mxu0 0.0
  %2312 = vmatprep.subr.mxu0 0.0
  %2313 = vmatpush1.msra.mxu0 0.0
  %2314 = vmatprep.subr.mxu0 0.0
  %2315 = vmatpush1.msra.mxu0 0.0
  %2316 = vmatprep.subr.mxu0 0.0
  %2317 = vmatpush1.msra.mxu0 0.0
  %2318 = vmatprep.subr.mxu0 0.0
  %2319 = vmatpush1.msra.mxu0 0.0
  %2320 = vmatprep.subr.mxu0 0.0
  %2321 = vmatpush1.msra.mxu0 0.0
  %2322 = vmatprep.subr.mxu0 0.0
  %2323 = vmatpush1.msra.mxu0 0.0
  %2324 = vmatprep.subr.mxu0 0.0
  %2325 = vmatpush1.msra.mxu0 0.0
  %2326 = vmatprep.subr.mxu0 0.0
  %2327 = vmatpush1.msra.mxu0 0.0
  %2328 = vmatprep.subr.mxu0 0.0
  %2329 = vmatpush1.msra.mxu0 0.0
  %2330 = vmatprep.subr.mxu0 0.0
  %2331 = vmatpush1.msra.mxu0 0.0
  %2332 = vmatprep.subr.mxu0 0.0
  %2333 = vmatpush1.msra.mxu0 0.0
  %2334 = vmatprep.subr.mxu0 0.0
  %2335 = vmatpush1.msra.mxu0 0.0
  %2336 = vmatprep.subr.mxu0 0.0
  %2337 = vmatpush1.msra.mxu0 0.0
  %2338 = vmatprep.subr.mxu0 0.0
  %2339 = vmatpush1.msra.mxu0 0.0
  %2340 = vmatprep.subr.mxu0 0.0
  %2341 = vmatpush1.msra.mxu0 0.0
  %2342 = vmatprep.subr.mxu0 0.0
  %2343 = vmatpush1.msra.mxu0 0.0
  %2344 = vmatprep.subr.mxu0 0.0
  %2345 = vmatpush1.msra.mxu0 0.0
  %2346 = vmatprep.subr.mxu0 0.0
  %2347 = vmatpush1.msra.mxu0 0.0
  %2348 = vmatprep.subr.mxu0 0.0
  %2349 = vmatpush1.msra.mxu0 0.0
  %2350 = vmatprep.subr.mxu0 0.0
  %2351 = vmatpush1.msra.mxu0 0.0
  %2352 = vmatprep.subr.mxu0 0.0
  %2353 = vmatpush1.msra.mxu0 0.0
  %2354 = vmatprep.subr.mxu0 0.0
  %2355 = vmatpush1.msra.mxu0 0.0
  %2356 = vmatprep.subr.mxu0 0.0
  %2357 = vmatpush1.msra.mxu0 0.0
  %2358 = vmatprep.subr.mxu0 0.0
  %2359 = vmatpush1.msra.mxu0 0.0
  %2360 = vmatprep.subr.mxu0 0.0
  %2361 = vmatpush1.msra.mxu0 0.0
  %2362 = vmatprep.mubr.f32.mxu0 0.0
  %2363 = vmatmul.mubr.f32.gmra.mrb[0].mxu0 %v2296
  %v2364 = vpop.f32.mrb[0].mxu0
  %v2365 = vadd.f32 0.0, %v2364
  %v2366 = vpop.f32.mrb[0].mxu0
  %2367 = vdwg.mxu0
  %2368 = vmatprep.subr.mxu0 0.0
  %2369 = vmatpush1.msra.mxu0 %v852
  %2370 = vmatprep.subr.mxu0 0.0
  %2371 = vmatpush1.msra.mxu0 %v853
  %2372 = vmatprep.subr.mxu0 0.0
  %2373 = vmatpush1.msra.mxu0 %v854
  %2374 = vmatprep.subr.mxu0 0.0
  %2375 = vmatpush1.msra.mxu0 %v855
  %2376 = vmatprep.subr.mxu0 0.0
  %2377 = vmatpush1.msra.mxu0 0.0
  %2378 = vmatprep.subr.mxu0 0.0
  %2379 = vmatpush1.msra.mxu0 0.0
  %2380 = vmatprep.subr.mxu0 0.0
  %2381 = vmatpush1.msra.mxu0 0.0
  %2382 = vmatprep.subr.mxu0 0.0
  %2383 = vmatpush1.msra.mxu0 0.0
  %2384 = vmatprep.subr.mxu0 0.0
  %2385 = vmatpush1.msra.mxu0 0.0
  %2386 = vmatprep.subr.mxu0 0.0
  %2387 = vmatpush1.msra.mxu0 0.0
  %2388 = vmatprep.subr.mxu0 0.0
  %2389 = vmatpush1.msra.mxu0 0.0
  %2390 = vmatprep.subr.mxu0 0.0
  %2391 = vmatpush1.msra.mxu0 0.0
  %2392 = vmatprep.subr.mxu0 0.0
  %2393 = vmatpush1.msra.mxu0 0.0
  %2394 = vmatprep.subr.mxu0 0.0
  %2395 = vmatpush1.msra.mxu0 0.0
  %2396 = vmatprep.subr.mxu0 0.0
  %2397 = vmatpush1.msra.mxu0 0.0
  %2398 = vmatprep.subr.mxu0 0.0
  %2399 = vmatpush1.msra.mxu0 0.0
  %2400 = vmatprep.subr.mxu0 0.0
  %2401 = vmatpush1.msra.mxu0 0.0
  %2402 = vmatprep.subr.mxu0 0.0
  %2403 = vmatpush1.msra.mxu0 0.0
  %2404 = vmatprep.subr.mxu0 0.0
  %2405 = vmatpush1.msra.mxu0 0.0
  %2406 = vmatprep.subr.mxu0 0.0
  %2407 = vmatpush1.msra.mxu0 0.0
  %2408 = vmatprep.subr.mxu0 0.0
  %2409 = vmatpush1.msra.mxu0 0.0
  %2410 = vmatprep.subr.mxu0 0.0
  %2411 = vmatpush1.msra.mxu0 0.0
  %2412 = vmatprep.subr.mxu0 0.0
  %2413 = vmatpush1.msra.mxu0 0.0
  %2414 = vmatprep.subr.mxu0 0.0
  %2415 = vmatpush1.msra.mxu0 0.0
  %2416 = vmatprep.subr.mxu0 0.0
  %2417 = vmatpush1.msra.mxu0 0.0
  %2418 = vmatprep.subr.mxu0 0.0
  %2419 = vmatpush1.msra.mxu0 0.0
  %2420 = vmatprep.subr.mxu0 0.0
  %2421 = vmatpush1.msra.mxu0 0.0
  %2422 = vmatprep.subr.mxu0 0.0
  %2423 = vmatpush1.msra.mxu0 0.0
  %2424 = vmatprep.subr.mxu0 0.0
  %2425 = vmatpush1.msra.mxu0 0.0
  %2426 = vmatprep.subr.mxu0 0.0
  %2427 = vmatpush1.msra.mxu0 0.0
  %2428 = vmatprep.subr.mxu0 0.0
  %2429 = vmatpush1.msra.mxu0 0.0
  %2430 = vmatprep.subr.mxu0 0.0
  %2431 = vmatpush1.msra.mxu0 0.0
  %2432 = vmatprep.mubr.f32.mxu0 0.0
  %2433 = vmatmul.mubr.f32.gmra.mrb[0].mxu0 %v2296
  %v2434 = vpop.f32.mrb[0].mxu0
  %v2435 = vadd.f32 0.0, %v2434
  %v2436 = vpop.f32.mrb[0].mxu0
  %2437 = vdwg.mxu0
  %v2438 = vadd.f32 %v2292, %v2365
  %v2439 = vxor.u32 %v2438, 2147483648
  %v2440 = vmul.f32 %v2439, 1.442695
  %v2441 = vpow.pop %v2440
  %v2442 = vadd.f32 %v2441, 1.0
  %v2443 = vrcp.pop %v2442
  %v2444 = vmul.f32 1.0, %v2443
  %v2445 = vadd.f32 %v2293, %v2435
  %v2446 = vxor.u32 %v2445, 2147483648
  %v2447 = vmul.f32 %v2446, 1.442695
  %v2448 = vpow.pop %v2447
  %v2449 = vadd.f32 %v2448, 1.0
  %v2450 = vrcp.pop %v2449
  %v2451 = vmul.f32 1.0, %v2450
  %2452 = vmatprep.subr.mxu0 0.0
  %2453 = vmatpush1.msra.mxu0 %v857
  %2454 = vmatprep.subr.mxu0 0.0
  %2455 = vmatpush1.msra.mxu0 %v858
  %2456 = vmatprep.subr.mxu0 0.0
  %2457 = vmatpush1.msra.mxu0 %v859
  %2458 = vmatprep.subr.mxu0 0.0
  %2459 = vmatpush1.msra.mxu0 %v860
  %2460 = vmatprep.subr.mxu0 0.0
  %2461 = vmatpush1.msra.mxu0 0.0
  %2462 = vmatprep.subr.mxu0 0.0
  %2463 = vmatpush1.msra.mxu0 0.0
  %2464 = vmatprep.subr.mxu0 0.0
  %2465 = vmatpush1.msra.mxu0 0.0
  %2466 = vmatprep.subr.mxu0 0.0
  %2467 = vmatpush1.msra.mxu0 0.0
  %2468 = vmatprep.subr.mxu0 0.0
  %2469 = vmatpush1.msra.mxu0 0.0
  %2470 = vmatprep.subr.mxu0 0.0
  %2471 = vmatpush1.msra.mxu0 0.0
  %2472 = vmatprep.subr.mxu0 0.0
  %2473 = vmatpush1.msra.mxu0 0.0
  %2474 = vmatprep.subr.mxu0 0.0
  %2475 = vmatpush1.msra.mxu0 0.0
  %2476 = vmatprep.subr.mxu0 0.0
  %2477 = vmatpush1.msra.mxu0 0.0
  %2478 = vmatprep.subr.mxu0 0.0
  %2479 = vmatpush1.msra.mxu0 0.0
  %2480 = vmatprep.subr.mxu0 0.0
  %2481 = vmatpush1.msra.mxu0 0.0
  %2482 = vmatprep.subr.mxu0 0.0
  %2483 = vmatpush1.msra.mxu0 0.0
  %2484 = vmatprep.subr.mxu0 0.0
  %2485 = vmatpush1.msra.mxu0 0.0
  %2486 = vmatprep.subr.mxu0 0.0
  %2487 = vmatpush1.msra.mxu0 0.0
  %2488 = vmatprep.subr.mxu0 0.0
  %2489 = vmatpush1.msra.mxu0 0.0
  %2490 = vmatprep.subr.mxu0 0.0
  %2491 = vmatpush1.msra.mxu0 0.0
  %2492 = vmatprep.subr.mxu0 0.0
  %2493 = vmatpush1.msra.mxu0 0.0
  %2494 = vmatprep.subr.mxu0 0.0
  %2495 = vmatpush1.msra.mxu0 0.0
  %2496 = vmatprep.subr.mxu0 0.0
  %2497 = vmatpush1.msra.mxu0 0.0
  %2498 = vmatprep.subr.mxu0 0.0
  %2499 = vmatpush1.msra.mxu0 0.0
  %2500 = vmatprep.subr.mxu0 0.0
  %2501 = vmatpush1.msra.mxu0 0.0
  %2502 = vmatprep.subr.mxu0 0.0
  %2503 = vmatpush1.msra.mxu0 0.0
  %2504 = vmatprep.subr.mxu0 0.0
  %2505 = vmatpush1.msra.mxu0 0.0
  %2506 = vmatprep.subr.mxu0 0.0
  %2507 = vmatpush1.msra.mxu0 0.0
  %2508 = vmatprep.subr.mxu0 0.0
  %2509 = vmatpush1.msra.mxu0 0.0
  %2510 = vmatprep.subr.mxu0 0.0
  %2511 = vmatpush1.msra.mxu0 0.0
  %2512 = vmatprep.subr.mxu0 0.0
  %2513 = vmatpush1.msra.mxu0 0.0
  %2514 = vmatprep.subr.mxu0 0.0
  %2515 = vmatpush1.msra.mxu0 0.0
  %2516 = vmatprep.mubr.f32.mxu0 0.0
  %2517 = vmatmul.mubr.f32.gmra.mrb[0].mxu0 %v2296
  %v2518 = vpop.f32.mrb[0].mxu0
  %v2519 = vadd.f32 %v867, %v2518
  %v2520 = vpop.f32.mrb[0].mxu0
  %2521 = vdwg.mxu0
  %v2522 = vmul.f32 %v2444, %v2519
  %v2523 = vadd.f32 %v2294, %v2522
  %v2524 = vtanh.pop %v2523
  %v2525 = vsub.f32 1.0, %v2451
  %v2526 = vmul.f32 %v2525, %v2524
  %v2527 = vmul.f32 %v2451, %v2291
  %v2528 = vadd.f32 %v2526, %v2527
  %v2529 = vld [vmem:[#allocation2 + $0x38] sm:$0xff]
  %v2530 = vld [vmem:[%s324 + $0x38] sm:$0xff]
  %v2531 = vld [vmem:[%s451 + $0x38] sm:$0xff]
  %v2533 = vsel %vm68, %v2528, 0
  %2535 = vmatprep.subr.mxu0 0.0
  %2536 = vmatpush1.msra.mxu0 %v847
  %2537 = vmatprep.subr.mxu0 0.0
  %2538 = vmatpush1.msra.mxu0 %v848
  %2539 = vmatprep.subr.mxu0 0.0
  %2540 = vmatpush1.msra.mxu0 %v849
  %2541 = vmatprep.subr.mxu0 0.0
  %2542 = vmatpush1.msra.mxu0 %v850
  %2543 = vmatprep.subr.mxu0 0.0
  %2544 = vmatpush1.msra.mxu0 0.0
  %2545 = vmatprep.subr.mxu0 0.0
  %2546 = vmatpush1.msra.mxu0 0.0
  %2547 = vmatprep.subr.mxu0 0.0
  %2548 = vmatpush1.msra.mxu0 0.0
  %2549 = vmatprep.subr.mxu0 0.0
  %2550 = vmatpush1.msra.mxu0 0.0
  %2551 = vmatprep.subr.mxu0 0.0
  %2552 = vmatpush1.msra.mxu0 0.0
  %2553 = vmatprep.subr.mxu0 0.0
  %2554 = vmatpush1.msra.mxu0 0.0
  %2555 = vmatprep.subr.mxu0 0.0
  %2556 = vmatpush1.msra.mxu0 0.0
  %2557 = vmatprep.subr.mxu0 0.0
  %2558 = vmatpush1.msra.mxu0 0.0
  %2559 = vmatprep.subr.mxu0 0.0
  %2560 = vmatpush1.msra.mxu0 0.0
  %2561 = vmatprep.subr.mxu0 0.0
  %2562 = vmatpush1.msra.mxu0 0.0
  %2563 = vmatprep.subr.mxu0 0.0
  %2564 = vmatpush1.msra.mxu0 0.0
  %2565 = vmatprep.subr.mxu0 0.0
  %2566 = vmatpush1.msra.mxu0 0.0
  %2567 = vmatprep.subr.mxu0 0.0
  %2568 = vmatpush1.msra.mxu0 0.0
  %2569 = vmatprep.subr.mxu0 0.0
  %2570 = vmatpush1.msra.mxu0 0.0
  %2571 = vmatprep.subr.mxu0 0.0
  %2572 = vmatpush1.msra.mxu0 0.0
  %2573 = vmatprep.subr.mxu0 0.0
  %2574 = vmatpush1.msra.mxu0 0.0
  %2575 = vmatprep.subr.mxu0 0.0
  %2576 = vmatpush1.msra.mxu0 0.0
  %2577 = vmatprep.subr.mxu0 0.0
  %2578 = vmatpush1.msra.mxu0 0.0
  %2579 = vmatprep.subr.mxu0 0.0
  %2580 = vmatpush1.msra.mxu0 0.0
  %2581 = vmatprep.subr.mxu0 0.0
  %2582 = vmatpush1.msra.mxu0 0.0
  %2583 = vmatprep.subr.mxu0 0.0
  %2584 = vmatpush1.msra.mxu0 0.0
  %2585 = vmatprep.subr.mxu0 0.0
  %2586 = vmatpush1.msra.mxu0 0.0
  %2587 = vmatprep.subr.mxu0 0.0
  %2588 = vmatpush1.msra.mxu0 0.0
  %2589 = vmatprep.subr.mxu0 0.0
  %2590 = vmatpush1.msra.mxu0 0.0
  %2591 = vmatprep.subr.mxu0 0.0
  %2592 = vmatpush1.msra.mxu0 0.0
  %2593 = vmatprep.subr.mxu0 0.0
  %2594 = vmatpush1.msra.mxu0 0.0
  %2595 = vmatprep.subr.mxu0 0.0
  %2596 = vmatpush1.msra.mxu0 0.0
  %2597 = vmatprep.subr.mxu0 0.0
  %2598 = vmatpush1.msra.mxu0 0.0
  %2599 = vmatprep.mubr.f32.mxu0 0.0
  %2600 = vmatmul.mubr.f32.gmra.mrb[0].mxu0 %v2533
  %v2601 = vpop.f32.mrb[0].mxu0
  %v2602 = vadd.f32 0.0, %v2601
  %v2603 = vpop.f32.mrb[0].mxu0
  %2604 = vdwg.mxu0
  %2605 = vmatprep.subr.mxu0 0.0
  %2606 = vmatpush1.msra.mxu0 %v852
  %2607 = vmatprep.subr.mxu0 0.0
  %2608 = vmatpush1.msra.mxu0 %v853
  %2609 = vmatprep.subr.mxu0 0.0
  %2610 = vmatpush1.msra.mxu0 %v854
  %2611 = vmatprep.subr.mxu0 0.0
  %2612 = vmatpush1.msra.mxu0 %v855
  %2613 = vmatprep.subr.mxu0 0.0
  %2614 = vmatpush1.msra.mxu0 0.0
  %2615 = vmatprep.subr.mxu0 0.0
  %2616 = vmatpush1.msra.mxu0 0.0
  %2617 = vmatprep.subr.mxu0 0.0
  %2618 = vmatpush1.msra.mxu0 0.0
  %2619 = vmatprep.subr.mxu0 0.0
  %2620 = vmatpush1.msra.mxu0 0.0
  %2621 = vmatprep.subr.mxu0 0.0
  %2622 = vmatpush1.msra.mxu0 0.0
  %2623 = vmatprep.subr.mxu0 0.0
  %2624 = vmatpush1.msra.mxu0 0.0
  %2625 = vmatprep.subr.mxu0 0.0
  %2626 = vmatpush1.msra.mxu0 0.0
  %2627 = vmatprep.subr.mxu0 0.0
  %2628 = vmatpush1.msra.mxu0 0.0
  %2629 = vmatprep.subr.mxu0 0.0
  %2630 = vmatpush1.msra.mxu0 0.0
  %2631 = vmatprep.subr.mxu0 0.0
  %2632 = vmatpush1.msra.mxu0 0.0
  %2633 = vmatprep.subr.mxu0 0.0
  %2634 = vmatpush1.msra.mxu0 0.0
  %2635 = vmatprep.subr.mxu0 0.0
  %2636 = vmatpush1.msra.mxu0 0.0
  %2637 = vmatprep.subr.mxu0 0.0
  %2638 = vmatpush1.msra.mxu0 0.0
  %2639 = vmatprep.subr.mxu0 0.0
  %2640 = vmatpush1.msra.mxu0 0.0
  %2641 = vmatprep.subr.mxu0 0.0
  %2642 = vmatpush1.msra.mxu0 0.0
  %2643 = vmatprep.subr.mxu0 0.0
  %2644 = vmatpush1.msra.mxu0 0.0
  %2645 = vmatprep.subr.mxu0 0.0
  %2646 = vmatpush1.msra.mxu0 0.0
  %2647 = vmatprep.subr.mxu0 0.0
  %2648 = vmatpush1.msra.mxu0 0.0
  %2649 = vmatprep.subr.mxu0 0.0
  %2650 = vmatpush1.msra.mxu0 0.0
  %2651 = vmatprep.subr.mxu0 0.0
  %2652 = vmatpush1.msra.mxu0 0.0
  %2653 = vmatprep.subr.mxu0 0.0
  %2654 = vmatpush1.msra.mxu0 0.0
  %2655 = vmatprep.subr.mxu0 0.0
  %2656 = vmatpush1.msra.mxu0 0.0
  %2657 = vmatprep.subr.mxu0 0.0
  %2658 = vmatpush1.msra.mxu0 0.0
  %2659 = vmatprep.subr.mxu0 0.0
  %2660 = vmatpush1.msra.mxu0 0.0
  %2661 = vmatprep.subr.mxu0 0.0
  %2662 = vmatpush1.msra.mxu0 0.0
  %2663 = vmatprep.subr.mxu0 0.0
  %2664 = vmatpush1.msra.mxu0 0.0
  %2665 = vmatprep.subr.mxu0 0.0
  %2666 = vmatpush1.msra.mxu0 0.0
  %2667 = vmatprep.subr.mxu0 0.0
  %2668 = vmatpush1.msra.mxu0 0.0
  %2669 = vmatprep.mubr.f32.mxu0 0.0
  %2670 = vmatmul.mubr.f32.gmra.mrb[0].mxu0 %v2533
  %v2671 = vpop.f32.mrb[0].mxu0
  %v2672 = vadd.f32 0.0, %v2671
  %v2673 = vpop.f32.mrb[0].mxu0
  %2674 = vdwg.mxu0
  %v2675 = vadd.f32 %v2529, %v2602
  %v2676 = vxor.u32 %v2675, 2147483648
  %v2677 = vmul.f32 %v2676, 1.442695
  %v2678 = vpow.pop %v2677
  %v2679 = vadd.f32 %v2678, 1.0
  %v2680 = vrcp.pop %v2679
  %v2681 = vmul.f32 1.0, %v2680
  %v2682 = vadd.f32 %v2530, %v2672
  %v2683 = vxor.u32 %v2682, 2147483648
  %v2684 = vmul.f32 %v2683, 1.442695
  %v2685 = vpow.pop %v2684
  %v2686 = vadd.f32 %v2685, 1.0
  %v2687 = vrcp.pop %v2686
  %v2688 = vmul.f32 1.0, %v2687
  %2689 = vmatprep.subr.mxu0 0.0
  %2690 = vmatpush1.msra.mxu0 %v857
  %2691 = vmatprep.subr.mxu0 0.0
  %2692 = vmatpush1.msra.mxu0 %v858
  %2693 = vmatprep.subr.mxu0 0.0
  %2694 = vmatpush1.msra.mxu0 %v859
  %2695 = vmatprep.subr.mxu0 0.0
  %2696 = vmatpush1.msra.mxu0 %v860
  %2697 = vmatprep.subr.mxu0 0.0
  %2698 = vmatpush1.msra.mxu0 0.0
  %2699 = vmatprep.subr.mxu0 0.0
  %2700 = vmatpush1.msra.mxu0 0.0
  %2701 = vmatprep.subr.mxu0 0.0
  %2702 = vmatpush1.msra.mxu0 0.0
  %2703 = vmatprep.subr.mxu0 0.0
  %2704 = vmatpush1.msra.mxu0 0.0
  %2705 = vmatprep.subr.mxu0 0.0
  %2706 = vmatpush1.msra.mxu0 0.0
  %2707 = vmatprep.subr.mxu0 0.0
  %2708 = vmatpush1.msra.mxu0 0.0
  %2709 = vmatprep.subr.mxu0 0.0
  %2710 = vmatpush1.msra.mxu0 0.0
  %2711 = vmatprep.subr.mxu0 0.0
  %2712 = vmatpush1.msra.mxu0 0.0
  %2713 = vmatprep.subr.mxu0 0.0
  %2714 = vmatpush1.msra.mxu0 0.0
  %2715 = vmatprep.subr.mxu0 0.0
  %2716 = vmatpush1.msra.mxu0 0.0
  %2717 = vmatprep.subr.mxu0 0.0
  %2718 = vmatpush1.msra.mxu0 0.0
  %2719 = vmatprep.subr.mxu0 0.0
  %2720 = vmatpush1.msra.mxu0 0.0
  %2721 = vmatprep.subr.mxu0 0.0
  %2722 = vmatpush1.msra.mxu0 0.0
  %2723 = vmatprep.subr.mxu0 0.0
  %2724 = vmatpush1.msra.mxu0 0.0
  %2725 = vmatprep.subr.mxu0 0.0
  %2726 = vmatpush1.msra.mxu0 0.0
  %2727 = vmatprep.subr.mxu0 0.0
  %2728 = vmatpush1.msra.mxu0 0.0
  %2729 = vmatprep.subr.mxu0 0.0
  %2730 = vmatpush1.msra.mxu0 0.0
  %2731 = vmatprep.subr.mxu0 0.0
  %2732 = vmatpush1.msra.mxu0 0.0
  %2733 = vmatprep.subr.mxu0 0.0
  %2734 = vmatpush1.msra.mxu0 0.0
  %2735 = vmatprep.subr.mxu0 0.0
  %2736 = vmatpush1.msra.mxu0 0.0
  %2737 = vmatprep.subr.mxu0 0.0
  %2738 = vmatpush1.msra.mxu0 0.0
  %2739 = vmatprep.subr.mxu0 0.0
  %2740 = vmatpush1.msra.mxu0 0.0
  %2741 = vmatprep.subr.mxu0 0.0
  %2742 = vmatpush1.msra.mxu0 0.0
  %2743 = vmatprep.subr.mxu0 0.0
  %2744 = vmatpush1.msra.mxu0 0.0
  %2745 = vmatprep.subr.mxu0 0.0
  %2746 = vmatpush1.msra.mxu0 0.0
  %2747 = vmatprep.subr.mxu0 0.0
  %2748 = vmatpush1.msra.mxu0 0.0
  %2749 = vmatprep.subr.mxu0 0.0
  %2750 = vmatpush1.msra.mxu0 0.0
  %2751 = vmatprep.subr.mxu0 0.0
  %2752 = vmatpush1.msra.mxu0 0.0
  %2753 = vmatprep.mubr.f32.mxu0 0.0
  %2754 = vmatmul.mubr.f32.gmra.mrb[0].mxu0 %v2533
  %v2755 = vpop.f32.mrb[0].mxu0
  %v2756 = vadd.f32 %v867, %v2755
  %v2757 = vpop.f32.mrb[0].mxu0
  %2758 = vdwg.mxu0
  %v2759 = vmul.f32 %v2681, %v2756
  %v2760 = vadd.f32 %v2531, %v2759
  %v2761 = vtanh.pop %v2760
  %v2762 = vsub.f32 1.0, %v2688
  %v2763 = vmul.f32 %v2762, %v2761
  %v2764 = vmul.f32 %v2688, %v2528
  %v2765 = vadd.f32 %v2763, %v2764
  %v2766 = vld [vmem:[%s7] sm:$0xff]
  %v2767 = vld [vmem:[%s7 + $0x8] sm:$0xff]
  %v2768 = vld [vmem:[%s7 + $0x10] sm:$0xff]
  %v2769 = vld [vmem:[%s7 + $0x18] sm:$0xff]
  %v2770 = vld [vmem:[%s9] sm:$0x1]
  %v2772 = vlaneseq
  %v2773 = vshrl.u32 %v2772, 7
  %v2774 = vsub.s32 0, %v2773
  %v2775 = vrot.slane %v2770, %v2774
  %v2778 = vsel %vm68, %v2765, 0
  %2780 = vmatprep.subr.mxu0 0.0
  %2781 = vmatpush1.msra.mxu0 %v2766
  %2782 = vmatprep.subr.mxu0 0.0
  %2783 = vmatpush1.msra.mxu0 %v2767
  %2784 = vmatprep.subr.mxu0 0.0
  %2785 = vmatpush1.msra.mxu0 %v2768
  %2786 = vmatprep.subr.mxu0 0.0
  %2787 = vmatpush1.msra.mxu0 %v2769
  %2788 = vmatprep.subr.mxu0 0.0
  %2789 = vmatpush1.msra.mxu0 0.0
  %2790 = vmatprep.subr.mxu0 0.0
  %2791 = vmatpush1.msra.mxu0 0.0
  %2792 = vmatprep.subr.mxu0 0.0
  %2793 = vmatpush1.msra.mxu0 0.0
  %2794 = vmatprep.subr.mxu0 0.0
  %2795 = vmatpush1.msra.mxu0 0.0
  %2796 = vmatprep.subr.mxu0 0.0
  %2797 = vmatpush1.msra.mxu0 0.0
  %2798 = vmatprep.subr.mxu0 0.0
  %2799 = vmatpush1.msra.mxu0 0.0
  %2800 = vmatprep.subr.mxu0 0.0
  %2801 = vmatpush1.msra.mxu0 0.0
  %2802 = vmatprep.subr.mxu0 0.0
  %2803 = vmatpush1.msra.mxu0 0.0
  %2804 = vmatprep.subr.mxu0 0.0
  %2805 = vmatpush1.msra.mxu0 0.0
  %2806 = vmatprep.subr.mxu0 0.0
  %2807 = vmatpush1.msra.mxu0 0.0
  %2808 = vmatprep.subr.mxu0 0.0
  %2809 = vmatpush1.msra.mxu0 0.0
  %2810 = vmatprep.subr.mxu0 0.0
  %2811 = vmatpush1.msra.mxu0 0.0
  %2812 = vmatprep.subr.mxu0 0.0
  %2813 = vmatpush1.msra.mxu0 0.0
  %2814 = vmatprep.subr.mxu0 0.0
  %2815 = vmatpush1.msra.mxu0 0.0
  %2816 = vmatprep.subr.mxu0 0.0
  %2817 = vmatpush1.msra.mxu0 0.0
  %2818 = vmatprep.subr.mxu0 0.0
  %2819 = vmatpush1.msra.mxu0 0.0
  %2820 = vmatprep.subr.mxu0 0.0
  %2821 = vmatpush1.msra.mxu0 0.0
  %2822 = vmatprep.subr.mxu0 0.0
  %2823 = vmatpush1.msra.mxu0 0.0
  %2824 = vmatprep.subr.mxu0 0.0
  %2825 = vmatpush1.msra.mxu0 0.0
  %2826 = vmatprep.subr.mxu0 0.0
  %2827 = vmatpush1.msra.mxu0 0.0
  %2828 = vmatprep.subr.mxu0 0.0
  %2829 = vmatpush1.msra.mxu0 0.0
  %2830 = vmatprep.subr.mxu0 0.0
  %2831 = vmatpush1.msra.mxu0 0.0
  %2832 = vmatprep.subr.mxu0 0.0
  %2833 = vmatpush1.msra.mxu0 0.0
  %2834 = vmatprep.subr.mxu0 0.0
  %2835 = vmatpush1.msra.mxu0 0.0
  %2836 = vmatprep.subr.mxu0 0.0
  %2837 = vmatpush1.msra.mxu0 0.0
  %2838 = vmatprep.subr.mxu0 0.0
  %2839 = vmatpush1.msra.mxu0 0.0
  %2840 = vmatprep.subr.mxu0 0.0
  %2841 = vmatpush1.msra.mxu0 0.0
  %2842 = vmatprep.subr.mxu0 0.0
  %2843 = vmatpush1.msra.mxu0 0.0
  %2844 = vmatprep.mubr.f32.mxu0 0.0
  %2845 = vmatmul.mubr.f32.gmra.mrb[0].mxu0 %v2778
  %v2846 = vpop.f32.mrb[0].mxu0
  %v2847 = vadd.f32 %v2775, %v2846
  %v2848 = vpop.f32.mrb[0].mxu0
  %2849 = vdwg.mxu0
  %s2850 = scalar_lea.vmem %s7, 32
  %v2851 = vld [vmem:[%s2850] sm:$0xff]
  %v2852 = vld [vmem:[%s2850 + $0x8] sm:$0xff]
  %v2853 = vld [vmem:[%s2850 + $0x10] sm:$0xff]
  %v2854 = vld [vmem:[%s2850 + $0x18] sm:$0xff]
  %s2855 = scalar_lea.vmem %s9, 1
  %v2856 = vld [vmem:[%s2855] sm:$0x1]
  %v2858 = vlaneseq
  %v2859 = vshrl.u32 %v2858, 7
  %v2860 = vsub.s32 0, %v2859
  %v2861 = vrot.slane %v2856, %v2860
  %2863 = vmatprep.subr.mxu0 0.0
  %2864 = vmatpush1.msra.mxu0 %v2851
  %2865 = vmatprep.subr.mxu0 0.0
  %2866 = vmatpush1.msra.mxu0 %v2852
  %2867 = vmatprep.subr.mxu0 0.0
  %2868 = vmatpush1.msra.mxu0 %v2853
  %2869 = vmatprep.subr.mxu0 0.0
  %2870 = vmatpush1.msra.mxu0 %v2854
  %2871 = vmatprep.subr.mxu0 0.0
  %2872 = vmatpush1.msra.mxu0 0.0
  %2873 = vmatprep.subr.mxu0 0.0
  %2874 = vmatpush1.msra.mxu0 0.0
  %2875 = vmatprep.subr.mxu0 0.0
  %2876 = vmatpush1.msra.mxu0 0.0
  %2877 = vmatprep.subr.mxu0 0.0
  %2878 = vmatpush1.msra.mxu0 0.0
  %2879 = vmatprep.subr.mxu0 0.0
  %2880 = vmatpush1.msra.mxu0 0.0
  %2881 = vmatprep.subr.mxu0 0.0
  %2882 = vmatpush1.msra.mxu0 0.0
  %2883 = vmatprep.subr.mxu0 0.0
  %2884 = vmatpush1.msra.mxu0 0.0
  %2885 = vmatprep.subr.mxu0 0.0
  %2886 = vmatpush1.msra.mxu0 0.0
  %2887 = vmatprep.subr.mxu0 0.0
  %2888 = vmatpush1.msra.mxu0 0.0
  %2889 = vmatprep.subr.mxu0 0.0
  %2890 = vmatpush1.msra.mxu0 0.0
  %2891 = vmatprep.subr.mxu0 0.0
  %2892 = vmatpush1.msra.mxu0 0.0
  %2893 = vmatprep.subr.mxu0 0.0
  %2894 = vmatpush1.msra.mxu0 0.0
  %2895 = vmatprep.subr.mxu0 0.0
  %2896 = vmatpush1.msra.mxu0 0.0
  %2897 = vmatprep.subr.mxu0 0.0
  %2898 = vmatpush1.msra.mxu0 0.0
  %2899 = vmatprep.subr.mxu0 0.0
  %2900 = vmatpush1.msra.mxu0 0.0
  %2901 = vmatprep.subr.mxu0 0.0
  %2902 = vmatpush1.msra.mxu0 0.0
  %2903 = vmatprep.subr.mxu0 0.0
  %2904 = vmatpush1.msra.mxu0 0.0
  %2905 = vmatprep.subr.mxu0 0.0
  %2906 = vmatpush1.msra.mxu0 0.0
  %2907 = vmatprep.subr.mxu0 0.0
  %2908 = vmatpush1.msra.mxu0 0.0
  %2909 = vmatprep.subr.mxu0 0.0
  %2910 = vmatpush1.msra.mxu0 0.0
  %2911 = vmatprep.subr.mxu0 0.0
  %2912 = vmatpush1.msra.mxu0 0.0
  %2913 = vmatprep.subr.mxu0 0.0
  %2914 = vmatpush1.msra.mxu0 0.0
  %2915 = vmatprep.subr.mxu0 0.0
  %2916 = vmatpush1.msra.mxu0 0.0
  %2917 = vmatprep.subr.mxu0 0.0
  %2918 = vmatpush1.msra.mxu0 0.0
  %2919 = vmatprep.subr.mxu0 0.0
  %2920 = vmatpush1.msra.mxu0 0.0
  %2921 = vmatprep.subr.mxu0 0.0
  %2922 = vmatpush1.msra.mxu0 0.0
  %2923 = vmatprep.subr.mxu0 0.0
  %2924 = vmatpush1.msra.mxu0 0.0
  %2925 = vmatprep.subr.mxu0 0.0
  %2926 = vmatpush1.msra.mxu0 0.0
  %2927 = vmatprep.mubr.f32.mxu0 0.0
  %2928 = vmatmul.mubr.f32.gmra.mrb[0].mxu0 %v2778
  %v2929 = vpop.f32.mrb[0].mxu0
  %v2930 = vadd.f32 %v2861, %v2929
  %v2931 = vpop.f32.mrb[0].mxu0
  %2932 = vdwg.mxu0
  %s2933 = scalar_lea.vmem %s7, 64
  %v2934 = vld [vmem:[%s2933] sm:$0xff]
  %v2935 = vld [vmem:[%s2933 + $0x8] sm:$0xff]
  %v2936 = vld [vmem:[%s2933 + $0x10] sm:$0xff]
  %v2937 = vld [vmem:[%s2933 + $0x18] sm:$0xff]
  %s2938 = scalar_lea.vmem %s9, 2
  %v2939 = vld [vmem:[%s2938] sm:$0x1]
  %v2941 = vlaneseq
  %v2942 = vshrl.u32 %v2941, 7
  %v2943 = vsub.s32 0, %v2942
  %v2944 = vrot.slane %v2939, %v2943
  %2946 = vmatprep.subr.mxu0 0.0
  %2947 = vmatpush1.msra.mxu0 %v2934
  %2948 = vmatprep.subr.mxu0 0.0
  %2949 = vmatpush1.msra.mxu0 %v2935
  %2950 = vmatprep.subr.mxu0 0.0
  %2951 = vmatpush1.msra.mxu0 %v2936
  %2952 = vmatprep.subr.mxu0 0.0
  %2953 = vmatpush1.msra.mxu0 %v2937
  %2954 = vmatprep.subr.mxu0 0.0
  %2955 = vmatpush1.msra.mxu0 0.0
  %2956 = vmatprep.subr.mxu0 0.0
  %2957 = vmatpush1.msra.mxu0 0.0
  %2958 = vmatprep.subr.mxu0 0.0
  %2959 = vmatpush1.msra.mxu0 0.0
  %2960 = vmatprep.subr.mxu0 0.0
  %2961 = vmatpush1.msra.mxu0 0.0
  %2962 = vmatprep.subr.mxu0 0.0
  %2963 = vmatpush1.msra.mxu0 0.0
  %2964 = vmatprep.subr.mxu0 0.0
  %2965 = vmatpush1.msra.mxu0 0.0
  %2966 = vmatprep.subr.mxu0 0.0
  %2967 = vmatpush1.msra.mxu0 0.0
  %2968 = vmatprep.subr.mxu0 0.0
  %2969 = vmatpush1.msra.mxu0 0.0
  %2970 = vmatprep.subr.mxu0 0.0
  %2971 = vmatpush1.msra.mxu0 0.0
  %2972 = vmatprep.subr.mxu0 0.0
  %2973 = vmatpush1.msra.mxu0 0.0
  %2974 = vmatprep.subr.mxu0 0.0
  %2975 = vmatpush1.msra.mxu0 0.0
  %2976 = vmatprep.subr.mxu0 0.0
  %2977 = vmatpush1.msra.mxu0 0.0
  %2978 = vmatprep.subr.mxu0 0.0
  %2979 = vmatpush1.msra.mxu0 0.0
  %2980 = vmatprep.subr.mxu0 0.0
  %2981 = vmatpush1.msra.mxu0 0.0
  %2982 = vmatprep.subr.mxu0 0.0
  %2983 = vmatpush1.msra.mxu0 0.0
  %2984 = vmatprep.subr.mxu0 0.0
  %2985 = vmatpush1.msra.mxu0 0.0
  %2986 = vmatprep.subr.mxu0 0.0
  %2987 = vmatpush1.msra.mxu0 0.0
  %2988 = vmatprep.subr.mxu0 0.0
  %2989 = vmatpush1.msra.mxu0 0.0
  %2990 = vmatprep.subr.mxu0 0.0
  %2991 = vmatpush1.msra.mxu0 0.0
  %2992 = vmatprep.subr.mxu0 0.0
  %2993 = vmatpush1.msra.mxu0 0.0
  %2994 = vmatprep.subr.mxu0 0.0
  %2995 = vmatpush1.msra.mxu0 0.0
  %2996 = vmatprep.subr.mxu0 0.0
  %2997 = vmatpush1.msra.mxu0 0.0
  %2998 = vmatprep.subr.mxu0 0.0
  %2999 = vmatpush1.msra.mxu0 0.0
  %3000 = vmatprep.subr.mxu0 0.0
  %3001 = vmatpush1.msra.mxu0 0.0
  %3002 = vmatprep.subr.mxu0 0.0
  %3003 = vmatpush1.msra.mxu0 0.0
  %3004 = vmatprep.subr.mxu0 0.0
  %3005 = vmatpush1.msra.mxu0 0.0
  %3006 = vmatprep.subr.mxu0 0.0
  %3007 = vmatpush1.msra.mxu0 0.0
  %3008 = vmatprep.subr.mxu0 0.0
  %3009 = vmatpush1.msra.mxu0 0.0
  %3010 = vmatprep.mubr.f32.mxu0 0.0
  %3011 = vmatmul.mubr.f32.gmra.mrb[0].mxu0 %v2778
  %v3012 = vpop.f32.mrb[0].mxu0
  %v3013 = vadd.f32 %v2944, %v3012
  %v3014 = vpop.f32.mrb[0].mxu0
  %3015 = vdwg.mxu0
  %v3016 = vld [vmem:[%s8] sm:$0xff]
  %v3017 = vld [vmem:[%s8 + $0x8] sm:$0xff]
  %v3018 = vld [vmem:[%s8 + $0x10] sm:$0xff]
  %v3019 = vld [vmem:[%s8 + $0x18] sm:$0xff]
  %s3020 = scalar_lea.vmem %s8, 32
  %v3021 = vld [vmem:[%s3020] sm:$0xff]
  %v3022 = vld [vmem:[%s3020 + $0x8] sm:$0xff]
  %v3023 = vld [vmem:[%s3020 + $0x10] sm:$0xff]
  %v3024 = vld [vmem:[%s3020 + $0x18] sm:$0xff]
  %s3025 = scalar_lea.vmem %s8, 64
  %v3026 = vld [vmem:[%s3025] sm:$0xff]
  %v3027 = vld [vmem:[%s3025 + $0x8] sm:$0xff]
  %v3028 = vld [vmem:[%s3025 + $0x10] sm:$0xff]
  %v3029 = vld [vmem:[%s3025 + $0x18] sm:$0xff]
  %s3030 = scalar_lea.vmem %s9, 3
  %v3031 = vld [vmem:[%s3030] sm:$0x1]
  %v3033 = vlaneseq
  %v3034 = vshrl.u32 %v3033, 7
  %v3035 = vsub.s32 0, %v3034
  %v3036 = vrot.slane %v3031, %v3035
  %v3038 = vld [vmem:[#allocation3] sm:$0xff]
  %v3039 = vadd.f32 %v3038, %v2847
  %v3040 = vld [vmem:[%s719] sm:$0xff]
  %v3041 = vadd.f32 %v3040, %v2930
  %v3042 = vld [vmem:[%s838] sm:$0xff]
  %v3043 = vadd.f32 %v3042, %v3013
  %3044 = vmatprep.subr.mxu0 0.0
  %3045 = vmatpush1.msra.mxu0 %v3016
  %3046 = vmatprep.subr.mxu0 0.0
  %3047 = vmatpush1.msra.mxu0 %v3017
  %3048 = vmatprep.subr.mxu0 0.0
  %3049 = vmatpush1.msra.mxu0 %v3018
  %3050 = vmatprep.subr.mxu0 0.0
  %3051 = vmatpush1.msra.mxu0 %v3019
  %3052 = vmatprep.subr.mxu0 0.0
  %3053 = vmatpush1.msra.mxu0 0.0
  %3054 = vmatprep.subr.mxu0 0.0
  %3055 = vmatpush1.msra.mxu0 0.0
  %3056 = vmatprep.subr.mxu0 0.0
  %3057 = vmatpush1.msra.mxu0 0.0
  %3058 = vmatprep.subr.mxu0 0.0
  %3059 = vmatpush1.msra.mxu0 0.0
  %3060 = vmatprep.subr.mxu0 0.0
  %3061 = vmatpush1.msra.mxu0 0.0
  %3062 = vmatprep.subr.mxu0 0.0
  %3063 = vmatpush1.msra.mxu0 0.0
  %3064 = vmatprep.subr.mxu0 0.0
  %3065 = vmatpush1.msra.mxu0 0.0
  %3066 = vmatprep.subr.mxu0 0.0
  %3067 = vmatpush1.msra.mxu0 0.0
  %3068 = vmatprep.subr.mxu0 0.0
  %3069 = vmatpush1.msra.mxu0 0.0
  %3070 = vmatprep.subr.mxu0 0.0
  %3071 = vmatpush1.msra.mxu0 0.0
  %3072 = vmatprep.subr.mxu0 0.0
  %3073 = vmatpush1.msra.mxu0 0.0
  %3074 = vmatprep.subr.mxu0 0.0
  %3075 = vmatpush1.msra.mxu0 0.0
  %3076 = vmatprep.subr.mxu0 0.0
  %3077 = vmatpush1.msra.mxu0 0.0
  %3078 = vmatprep.subr.mxu0 0.0
  %3079 = vmatpush1.msra.mxu0 0.0
  %3080 = vmatprep.subr.mxu0 0.0
  %3081 = vmatpush1.msra.mxu0 0.0
  %3082 = vmatprep.subr.mxu0 0.0
  %3083 = vmatpush1.msra.mxu0 0.0
  %3084 = vmatprep.subr.mxu0 0.0
  %3085 = vmatpush1.msra.mxu0 0.0
  %3086 = vmatprep.subr.mxu0 0.0
  %3087 = vmatpush1.msra.mxu0 0.0
  %3088 = vmatprep.subr.mxu0 0.0
  %3089 = vmatpush1.msra.mxu0 0.0
  %3090 = vmatprep.subr.mxu0 0.0
  %3091 = vmatpush1.msra.mxu0 0.0
  %3092 = vmatprep.subr.mxu0 0.0
  %3093 = vmatpush1.msra.mxu0 0.0
  %3094 = vmatprep.subr.mxu0 0.0
  %3095 = vmatpush1.msra.mxu0 0.0
  %3096 = vmatprep.subr.mxu0 0.0
  %3097 = vmatpush1.msra.mxu0 0.0
  %3098 = vmatprep.subr.mxu0 0.0
  %3099 = vmatpush1.msra.mxu0 0.0
  %3100 = vmatprep.subr.mxu0 0.0
  %3101 = vmatpush1.msra.mxu0 0.0
  %3102 = vmatprep.subr.mxu0 0.0
  %3103 = vmatpush1.msra.mxu0 0.0
  %3104 = vmatprep.subr.mxu0 0.0
  %3105 = vmatpush1.msra.mxu0 0.0
  %3106 = vmatprep.subr.mxu0 0.0
  %3107 = vmatpush1.msra.mxu0 0.0
  %3108 = vmatprep.mubr.f32.mxu0 0.0
  %3109 = vmatmul.mubr.f32.gmra.mrb[0].mxu0 %v874
  %v3110 = vpop.f32.mrb[0].mxu0
  %v3111 = vadd.f32 0.0, %v3110
  %v3112 = vpop.f32.mrb[0].mxu0
  %3113 = vdwg.mxu0
  %3114 = vmatprep.subr.mxu0 0.0
  %3115 = vmatpush1.msra.mxu0 %v3021
  %3116 = vmatprep.subr.mxu0 0.0
  %3117 = vmatpush1.msra.mxu0 %v3022
  %3118 = vmatprep.subr.mxu0 0.0
  %3119 = vmatpush1.msra.mxu0 %v3023
  %3120 = vmatprep.subr.mxu0 0.0
  %3121 = vmatpush1.msra.mxu0 %v3024
  %3122 = vmatprep.subr.mxu0 0.0
  %3123 = vmatpush1.msra.mxu0 0.0
  %3124 = vmatprep.subr.mxu0 0.0
  %3125 = vmatpush1.msra.mxu0 0.0
  %3126 = vmatprep.subr.mxu0 0.0
  %3127 = vmatpush1.msra.mxu0 0.0
  %3128 = vmatprep.subr.mxu0 0.0
  %3129 = vmatpush1.msra.mxu0 0.0
  %3130 = vmatprep.subr.mxu0 0.0
  %3131 = vmatpush1.msra.mxu0 0.0
  %3132 = vmatprep.subr.mxu0 0.0
  %3133 = vmatpush1.msra.mxu0 0.0
  %3134 = vmatprep.subr.mxu0 0.0
  %3135 = vmatpush1.msra.mxu0 0.0
  %3136 = vmatprep.subr.mxu0 0.0
  %3137 = vmatpush1.msra.mxu0 0.0
  %3138 = vmatprep.subr.mxu0 0.0
  %3139 = vmatpush1.msra.mxu0 0.0
  %3140 = vmatprep.subr.mxu0 0.0
  %3141 = vmatpush1.msra.mxu0 0.0
  %3142 = vmatprep.subr.mxu0 0.0
  %3143 = vmatpush1.msra.mxu0 0.0
  %3144 = vmatprep.subr.mxu0 0.0
  %3145 = vmatpush1.msra.mxu0 0.0
  %3146 = vmatprep.subr.mxu0 0.0
  %3147 = vmatpush1.msra.mxu0 0.0
  %3148 = vmatprep.subr.mxu0 0.0
  %3149 = vmatpush1.msra.mxu0 0.0
  %3150 = vmatprep.subr.mxu0 0.0
  %3151 = vmatpush1.msra.mxu0 0.0
  %3152 = vmatprep.subr.mxu0 0.0
  %3153 = vmatpush1.msra.mxu0 0.0
  %3154 = vmatprep.subr.mxu0 0.0
  %3155 = vmatpush1.msra.mxu0 0.0
  %3156 = vmatprep.subr.mxu0 0.0
  %3157 = vmatpush1.msra.mxu0 0.0
  %3158 = vmatprep.subr.mxu0 0.0
  %3159 = vmatpush1.msra.mxu0 0.0
  %3160 = vmatprep.subr.mxu0 0.0
  %3161 = vmatpush1.msra.mxu0 0.0
  %3162 = vmatprep.subr.mxu0 0.0
  %3163 = vmatpush1.msra.mxu0 0.0
  %3164 = vmatprep.subr.mxu0 0.0
  %3165 = vmatpush1.msra.mxu0 0.0
  %3166 = vmatprep.subr.mxu0 0.0
  %3167 = vmatpush1.msra.mxu0 0.0
  %3168 = vmatprep.subr.mxu0 0.0
  %3169 = vmatpush1.msra.mxu0 0.0
  %3170 = vmatprep.subr.mxu0 0.0
  %3171 = vmatpush1.msra.mxu0 0.0
  %3172 = vmatprep.subr.mxu0 0.0
  %3173 = vmatpush1.msra.mxu0 0.0
  %3174 = vmatprep.subr.mxu0 0.0
  %3175 = vmatpush1.msra.mxu0 0.0
  %3176 = vmatprep.subr.mxu0 0.0
  %3177 = vmatpush1.msra.mxu0 0.0
  %3178 = vmatprep.mubr.f32.mxu0 0.0
  %3179 = vmatmul.mubr.f32.gmra.mrb[0].mxu0 %v874
  %v3180 = vpop.f32.mrb[0].mxu0
  %v3181 = vadd.f32 0.0, %v3180
  %v3182 = vpop.f32.mrb[0].mxu0
  %3183 = vdwg.mxu0
  %v3184 = vadd.f32 %v3039, %v3111
  %v3185 = vxor.u32 %v3184, 2147483648
  %v3186 = vmul.f32 %v3185, 1.442695
  %v3187 = vpow.pop %v3186
  %v3188 = vadd.f32 %v3187, 1.0
  %v3189 = vrcp.pop %v3188
  %v3190 = vmul.f32 1.0, %v3189
  %v3191 = vadd.f32 %v3041, %v3181
  %v3192 = vxor.u32 %v3191, 2147483648
  %v3193 = vmul.f32 %v3192, 1.442695
  %v3194 = vpow.pop %v3193
  %v3195 = vadd.f32 %v3194, 1.0
  %v3196 = vrcp.pop %v3195
  %v3197 = vmul.f32 1.0, %v3196
  %3198 = vmatprep.subr.mxu0 0.0
  %3199 = vmatpush1.msra.mxu0 %v3026
  %3200 = vmatprep.subr.mxu0 0.0
  %3201 = vmatpush1.msra.mxu0 %v3027
  %3202 = vmatprep.subr.mxu0 0.0
  %3203 = vmatpush1.msra.mxu0 %v3028
  %3204 = vmatprep.subr.mxu0 0.0
  %3205 = vmatpush1.msra.mxu0 %v3029
  %3206 = vmatprep.subr.mxu0 0.0
  %3207 = vmatpush1.msra.mxu0 0.0
  %3208 = vmatprep.subr.mxu0 0.0
  %3209 = vmatpush1.msra.mxu0 0.0
  %3210 = vmatprep.subr.mxu0 0.0
  %3211 = vmatpush1.msra.mxu0 0.0
  %3212 = vmatprep.subr.mxu0 0.0
  %3213 = vmatpush1.msra.mxu0 0.0
  %3214 = vmatprep.subr.mxu0 0.0
  %3215 = vmatpush1.msra.mxu0 0.0
  %3216 = vmatprep.subr.mxu0 0.0
  %3217 = vmatpush1.msra.mxu0 0.0
  %3218 = vmatprep.subr.mxu0 0.0
  %3219 = vmatpush1.msra.mxu0 0.0
  %3220 = vmatprep.subr.mxu0 0.0
  %3221 = vmatpush1.msra.mxu0 0.0
  %3222 = vmatprep.subr.mxu0 0.0
  %3223 = vmatpush1.msra.mxu0 0.0
  %3224 = vmatprep.subr.mxu0 0.0
  %3225 = vmatpush1.msra.mxu0 0.0
  %3226 = vmatprep.subr.mxu0 0.0
  %3227 = vmatpush1.msra.mxu0 0.0
  %3228 = vmatprep.subr.mxu0 0.0
  %3229 = vmatpush1.msra.mxu0 0.0
  %3230 = vmatprep.subr.mxu0 0.0
  %3231 = vmatpush1.msra.mxu0 0.0
  %3232 = vmatprep.subr.mxu0 0.0
  %3233 = vmatpush1.msra.mxu0 0.0
  %3234 = vmatprep.subr.mxu0 0.0
  %3235 = vmatpush1.msra.mxu0 0.0
  %3236 = vmatprep.subr.mxu0 0.0
  %3237 = vmatpush1.msra.mxu0 0.0
  %3238 = vmatprep.subr.mxu0 0.0
  %3239 = vmatpush1.msra.mxu0 0.0
  %3240 = vmatprep.subr.mxu0 0.0
  %3241 = vmatpush1.msra.mxu0 0.0
  %3242 = vmatprep.subr.mxu0 0.0
  %3243 = vmatpush1.msra.mxu0 0.0
  %3244 = vmatprep.subr.mxu0 0.0
  %3245 = vmatpush1.msra.mxu0 0.0
  %3246 = vmatprep.subr.mxu0 0.0
  %3247 = vmatpush1.msra.mxu0 0.0
  %3248 = vmatprep.subr.mxu0 0.0
  %3249 = vmatpush1.msra.mxu0 0.0
  %3250 = vmatprep.subr.mxu0 0.0
  %3251 = vmatpush1.msra.mxu0 0.0
  %3252 = vmatprep.subr.mxu0 0.0
  %3253 = vmatpush1.msra.mxu0 0.0
  %3254 = vmatprep.subr.mxu0 0.0
  %3255 = vmatpush1.msra.mxu0 0.0
  %3256 = vmatprep.subr.mxu0 0.0
  %3257 = vmatpush1.msra.mxu0 0.0
  %3258 = vmatprep.subr.mxu0 0.0
  %3259 = vmatpush1.msra.mxu0 0.0
  %3260 = vmatprep.subr.mxu0 0.0
  %3261 = vmatpush1.msra.mxu0 0.0
  %3262 = vmatprep.mubr.f32.mxu0 0.0
  %3263 = vmatmul.mubr.f32.gmra.mrb[0].mxu0 %v874
  %v3264 = vpop.f32.mrb[0].mxu0
  %v3265 = vadd.f32 %v3036, %v3264
  %v3266 = vpop.f32.mrb[0].mxu0
  %3267 = vdwg.mxu0
  %v3268 = vmul.f32 %v3190, %v3265
  %v3269 = vadd.f32 %v3043, %v3268
  %v3270 = vtanh.pop %v3269
  %v3271 = vsub.f32 1.0, %v3197
  %v3272 = vmul.f32 %v3271, %v3270
  %v3273 = vmul.f32 %v3197, %v869
  %v3274 = vadd.f32 %v3272, %v3273
  %v3275 = vld [vmem:[#allocation3 + $0x8] sm:$0xff]
  %v3276 = vadd.f32 %v3275, %v2847
  %v3277 = vld [vmem:[%s719 + $0x8] sm:$0xff]
  %v3278 = vadd.f32 %v3277, %v2930
  %v3279 = vld [vmem:[%s838 + $0x8] sm:$0xff]
  %v3280 = vadd.f32 %v3279, %v3013
  %v3282 = vsel %vm68, %v3274, 0
  %3284 = vmatprep.subr.mxu0 0.0
  %3285 = vmatpush1.msra.mxu0 %v3016
  %3286 = vmatprep.subr.mxu0 0.0
  %3287 = vmatpush1.msra.mxu0 %v3017
  %3288 = vmatprep.subr.mxu0 0.0
  %3289 = vmatpush1.msra.mxu0 %v3018
  %3290 = vmatprep.subr.mxu0 0.0
  %3291 = vmatpush1.msra.mxu0 %v3019
  %3292 = vmatprep.subr.mxu0 0.0
  %3293 = vmatpush1.msra.mxu0 0.0
  %3294 = vmatprep.subr.mxu0 0.0
  %3295 = vmatpush1.msra.mxu0 0.0
  %3296 = vmatprep.subr.mxu0 0.0
  %3297 = vmatpush1.msra.mxu0 0.0
  %3298 = vmatprep.subr.mxu0 0.0
  %3299 = vmatpush1.msra.mxu0 0.0
  %3300 = vmatprep.subr.mxu0 0.0
  %3301 = vmatpush1.msra.mxu0 0.0
  %3302 = vmatprep.subr.mxu0 0.0
  %3303 = vmatpush1.msra.mxu0 0.0
  %3304 = vmatprep.subr.mxu0 0.0
  %3305 = vmatpush1.msra.mxu0 0.0
  %3306 = vmatprep.subr.mxu0 0.0
  %3307 = vmatpush1.msra.mxu0 0.0
  %3308 = vmatprep.subr.mxu0 0.0
  %3309 = vmatpush1.msra.mxu0 0.0
  %3310 = vmatprep.subr.mxu0 0.0
  %3311 = vmatpush1.msra.mxu0 0.0
  %3312 = vmatprep.subr.mxu0 0.0
  %3313 = vmatpush1.msra.mxu0 0.0
  %3314 = vmatprep.subr.mxu0 0.0
  %3315 = vmatpush1.msra.mxu0 0.0
  %3316 = vmatprep.subr.mxu0 0.0
  %3317 = vmatpush1.msra.mxu0 0.0
  %3318 = vmatprep.subr.mxu0 0.0
  %3319 = vmatpush1.msra.mxu0 0.0
  %3320 = vmatprep.subr.mxu0 0.0
  %3321 = vmatpush1.msra.mxu0 0.0
  %3322 = vmatprep.subr.mxu0 0.0
  %3323 = vmatpush1.msra.mxu0 0.0
  %3324 = vmatprep.subr.mxu0 0.0
  %3325 = vmatpush1.msra.mxu0 0.0
  %3326 = vmatprep.subr.mxu0 0.0
  %3327 = vmatpush1.msra.mxu0 0.0
  %3328 = vmatprep.subr.mxu0 0.0
  %3329 = vmatpush1.msra.mxu0 0.0
  %3330 = vmatprep.subr.mxu0 0.0
  %3331 = vmatpush1.msra.mxu0 0.0
  %3332 = vmatprep.subr.mxu0 0.0
  %3333 = vmatpush1.msra.mxu0 0.0
  %3334 = vmatprep.subr.mxu0 0.0
  %3335 = vmatpush1.msra.mxu0 0.0
  %3336 = vmatprep.subr.mxu0 0.0
  %3337 = vmatpush1.msra.mxu0 0.0
  %3338 = vmatprep.subr.mxu0 0.0
  %3339 = vmatpush1.msra.mxu0 0.0
  %3340 = vmatprep.subr.mxu0 0.0
  %3341 = vmatpush1.msra.mxu0 0.0
  %3342 = vmatprep.subr.mxu0 0.0
  %3343 = vmatpush1.msra.mxu0 0.0
  %3344 = vmatprep.subr.mxu0 0.0
  %3345 = vmatpush1.msra.mxu0 0.0
  %3346 = vmatprep.subr.mxu0 0.0
  %3347 = vmatpush1.msra.mxu0 0.0
  %3348 = vmatprep.mubr.f32.mxu0 0.0
  %3349 = vmatmul.mubr.f32.gmra.mrb[0].mxu0 %v3282
  %v3350 = vpop.f32.mrb[0].mxu0
  %v3351 = vadd.f32 0.0, %v3350
  %v3352 = vpop.f32.mrb[0].mxu0
  %3353 = vdwg.mxu0
  %3354 = vmatprep.subr.mxu0 0.0
  %3355 = vmatpush1.msra.mxu0 %v3021
  %3356 = vmatprep.subr.mxu0 0.0
  %3357 = vmatpush1.msra.mxu0 %v3022
  %3358 = vmatprep.subr.mxu0 0.0
  %3359 = vmatpush1.msra.mxu0 %v3023
  %3360 = vmatprep.subr.mxu0 0.0
  %3361 = vmatpush1.msra.mxu0 %v3024
  %3362 = vmatprep.subr.mxu0 0.0
  %3363 = vmatpush1.msra.mxu0 0.0
  %3364 = vmatprep.subr.mxu0 0.0
  %3365 = vmatpush1.msra.mxu0 0.0
  %3366 = vmatprep.subr.mxu0 0.0
  %3367 = vmatpush1.msra.mxu0 0.0
  %3368 = vmatprep.subr.mxu0 0.0
  %3369 = vmatpush1.msra.mxu0 0.0
  %3370 = vmatprep.subr.mxu0 0.0
  %3371 = vmatpush1.msra.mxu0 0.0
  %3372 = vmatprep.subr.mxu0 0.0
  %3373 = vmatpush1.msra.mxu0 0.0
  %3374 = vmatprep.subr.mxu0 0.0
  %3375 = vmatpush1.msra.mxu0 0.0
  %3376 = vmatprep.subr.mxu0 0.0
  %3377 = vmatpush1.msra.mxu0 0.0
  %3378 = vmatprep.subr.mxu0 0.0
  %3379 = vmatpush1.msra.mxu0 0.0
  %3380 = vmatprep.subr.mxu0 0.0
  %3381 = vmatpush1.msra.mxu0 0.0
  %3382 = vmatprep.subr.mxu0 0.0
  %3383 = vmatpush1.msra.mxu0 0.0
  %3384 = vmatprep.subr.mxu0 0.0
  %3385 = vmatpush1.msra.mxu0 0.0
  %3386 = vmatprep.subr.mxu0 0.0
  %3387 = vmatpush1.msra.mxu0 0.0
  %3388 = vmatprep.subr.mxu0 0.0
  %3389 = vmatpush1.msra.mxu0 0.0
  %3390 = vmatprep.subr.mxu0 0.0
  %3391 = vmatpush1.msra.mxu0 0.0
  %3392 = vmatprep.subr.mxu0 0.0
  %3393 = vmatpush1.msra.mxu0 0.0
  %3394 = vmatprep.subr.mxu0 0.0
  %3395 = vmatpush1.msra.mxu0 0.0
  %3396 = vmatprep.subr.mxu0 0.0
  %3397 = vmatpush1.msra.mxu0 0.0
  %3398 = vmatprep.subr.mxu0 0.0
  %3399 = vmatpush1.msra.mxu0 0.0
  %3400 = vmatprep.subr.mxu0 0.0
  %3401 = vmatpush1.msra.mxu0 0.0
  %3402 = vmatprep.subr.mxu0 0.0
  %3403 = vmatpush1.msra.mxu0 0.0
  %3404 = vmatprep.subr.mxu0 0.0
  %3405 = vmatpush1.msra.mxu0 0.0
  %3406 = vmatprep.subr.mxu0 0.0
  %3407 = vmatpush1.msra.mxu0 0.0
  %3408 = vmatprep.subr.mxu0 0.0
  %3409 = vmatpush1.msra.mxu0 0.0
  %3410 = vmatprep.subr.mxu0 0.0
  %3411 = vmatpush1.msra.mxu0 0.0
  %3412 = vmatprep.subr.mxu0 0.0
  %3413 = vmatpush1.msra.mxu0 0.0
  %3414 = vmatprep.subr.mxu0 0.0
  %3415 = vmatpush1.msra.mxu0 0.0
  %3416 = vmatprep.subr.mxu0 0.0
  %3417 = vmatpush1.msra.mxu0 0.0
  %3418 = vmatprep.mubr.f32.mxu0 0.0
  %3419 = vmatmul.mubr.f32.gmra.mrb[0].mxu0 %v3282
  %v3420 = vpop.f32.mrb[0].mxu0
  %v3421 = vadd.f32 0.0, %v3420
  %v3422 = vpop.f32.mrb[0].mxu0
  %3423 = vdwg.mxu0
  %v3424 = vadd.f32 %v3276, %v3351
  %v3425 = vxor.u32 %v3424, 2147483648
  %v3426 = vmul.f32 %v3425, 1.442695
  %v3427 = vpow.pop %v3426
  %v3428 = vadd.f32 %v3427, 1.0
  %v3429 = vrcp.pop %v3428
  %v3430 = vmul.f32 1.0, %v3429
  %v3431 = vadd.f32 %v3278, %v3421
  %v3432 = vxor.u32 %v3431, 2147483648
  %v3433 = vmul.f32 %v3432, 1.442695
  %v3434 = vpow.pop %v3433
  %v3435 = vadd.f32 %v3434, 1.0
  %v3436 = vrcp.pop %v3435
  %v3437 = vmul.f32 1.0, %v3436
  %3438 = vmatprep.subr.mxu0 0.0
  %3439 = vmatpush1.msra.mxu0 %v3026
  %3440 = vmatprep.subr.mxu0 0.0
  %3441 = vmatpush1.msra.mxu0 %v3027
  %3442 = vmatprep.subr.mxu0 0.0
  %3443 = vmatpush1.msra.mxu0 %v3028
  %3444 = vmatprep.subr.mxu0 0.0
  %3445 = vmatpush1.msra.mxu0 %v3029
  %3446 = vmatprep.subr.mxu0 0.0
  %3447 = vmatpush1.msra.mxu0 0.0
  %3448 = vmatprep.subr.mxu0 0.0
  %3449 = vmatpush1.msra.mxu0 0.0
  %3450 = vmatprep.subr.mxu0 0.0
  %3451 = vmatpush1.msra.mxu0 0.0
  %3452 = vmatprep.subr.mxu0 0.0
  %3453 = vmatpush1.msra.mxu0 0.0
  %3454 = vmatprep.subr.mxu0 0.0
  %3455 = vmatpush1.msra.mxu0 0.0
  %3456 = vmatprep.subr.mxu0 0.0
  %3457 = vmatpush1.msra.mxu0 0.0
  %3458 = vmatprep.subr.mxu0 0.0
  %3459 = vmatpush1.msra.mxu0 0.0
  %3460 = vmatprep.subr.mxu0 0.0
  %3461 = vmatpush1.msra.mxu0 0.0
  %3462 = vmatprep.subr.mxu0 0.0
  %3463 = vmatpush1.msra.mxu0 0.0
  %3464 = vmatprep.subr.mxu0 0.0
  %3465 = vmatpush1.msra.mxu0 0.0
  %3466 = vmatprep.subr.mxu0 0.0
  %3467 = vmatpush1.msra.mxu0 0.0
  %3468 = vmatprep.subr.mxu0 0.0
  %3469 = vmatpush1.msra.mxu0 0.0
  %3470 = vmatprep.subr.mxu0 0.0
  %3471 = vmatpush1.msra.mxu0 0.0
  %3472 = vmatprep.subr.mxu0 0.0
  %3473 = vmatpush1.msra.mxu0 0.0
  %3474 = vmatprep.subr.mxu0 0.0
  %3475 = vmatpush1.msra.mxu0 0.0
  %3476 = vmatprep.subr.mxu0 0.0
  %3477 = vmatpush1.msra.mxu0 0.0
  %3478 = vmatprep.subr.mxu0 0.0
  %3479 = vmatpush1.msra.mxu0 0.0
  %3480 = vmatprep.subr.mxu0 0.0
  %3481 = vmatpush1.msra.mxu0 0.0
  %3482 = vmatprep.subr.mxu0 0.0
  %3483 = vmatpush1.msra.mxu0 0.0
  %3484 = vmatprep.subr.mxu0 0.0
  %3485 = vmatpush1.msra.mxu0 0.0
  %3486 = vmatprep.subr.mxu0 0.0
  %3487 = vmatpush1.msra.mxu0 0.0
  %3488 = vmatprep.subr.mxu0 0.0
  %3489 = vmatpush1.msra.mxu0 0.0
  %3490 = vmatprep.subr.mxu0 0.0
  %3491 = vmatpush1.msra.mxu0 0.0
  %3492 = vmatprep.subr.mxu0 0.0
  %3493 = vmatpush1.msra.mxu0 0.0
  %3494 = vmatprep.subr.mxu0 0.0
  %3495 = vmatpush1.msra.mxu0 0.0
  %3496 = vmatprep.subr.mxu0 0.0
  %3497 = vmatpush1.msra.mxu0 0.0
  %3498 = vmatprep.subr.mxu0 0.0
  %3499 = vmatpush1.msra.mxu0 0.0
  %3500 = vmatprep.subr.mxu0 0.0
  %3501 = vmatpush1.msra.mxu0 0.0
  %3502 = vmatprep.mubr.f32.mxu0 0.0
  %3503 = vmatmul.mubr.f32.gmra.mrb[0].mxu0 %v3282
  %v3504 = vpop.f32.mrb[0].mxu0
  %v3505 = vadd.f32 %v3036, %v3504
  %v3506 = vpop.f32.mrb[0].mxu0
  %3507 = vdwg.mxu0
  %v3508 = vmul.f32 %v3430, %v3505
  %v3509 = vadd.f32 %v3280, %v3508
  %v3510 = vtanh.pop %v3509
  %v3511 = vsub.f32 1.0, %v3437
  %v3512 = vmul.f32 %v3511, %v3510
  %v3513 = vmul.f32 %v3437, %v3274
  %v3514 = vadd.f32 %v3512, %v3513
  %v3515 = vld [vmem:[#allocation3 + $0x10] sm:$0xff]
  %v3516 = vadd.f32 %v3515, %v2847
  %v3517 = vld [vmem:[%s719 + $0x10] sm:$0xff]
  %v3518 = vadd.f32 %v3517, %v2930
  %v3519 = vld [vmem:[%s838 + $0x10] sm:$0xff]
  %v3520 = vadd.f32 %v3519, %v3013
  %v3522 = vsel %vm68, %v3514, 0
  %3524 = vmatprep.subr.mxu0 0.0
  %3525 = vmatpush1.msra.mxu0 %v3016
  %3526 = vmatprep.subr.mxu0 0.0
  %3527 = vmatpush1.msra.mxu0 %v3017
  %3528 = vmatprep.subr.mxu0 0.0
  %3529 = vmatpush1.msra.mxu0 %v3018
  %3530 = vmatprep.subr.mxu0 0.0
  %3531 = vmatpush1.msra.mxu0 %v3019
  %3532 = vmatprep.subr.mxu0 0.0
  %3533 = vmatpush1.msra.mxu0 0.0
  %3534 = vmatprep.subr.mxu0 0.0
  %3535 = vmatpush1.msra.mxu0 0.0
  %3536 = vmatprep.subr.mxu0 0.0
  %3537 = vmatpush1.msra.mxu0 0.0
  %3538 = vmatprep.subr.mxu0 0.0
  %3539 = vmatpush1.msra.mxu0 0.0
  %3540 = vmatprep.subr.mxu0 0.0
  %3541 = vmatpush1.msra.mxu0 0.0
  %3542 = vmatprep.subr.mxu0 0.0
  %3543 = vmatpush1.msra.mxu0 0.0
  %3544 = vmatprep.subr.mxu0 0.0
  %3545 = vmatpush1.msra.mxu0 0.0
  %3546 = vmatprep.subr.mxu0 0.0
  %3547 = vmatpush1.msra.mxu0 0.0
  %3548 = vmatprep.subr.mxu0 0.0
  %3549 = vmatpush1.msra.mxu0 0.0
  %3550 = vmatprep.subr.mxu0 0.0
  %3551 = vmatpush1.msra.mxu0 0.0
  %3552 = vmatprep.subr.mxu0 0.0
  %3553 = vmatpush1.msra.mxu0 0.0
  %3554 = vmatprep.subr.mxu0 0.0
  %3555 = vmatpush1.msra.mxu0 0.0
  %3556 = vmatprep.subr.mxu0 0.0
  %3557 = vmatpush1.msra.mxu0 0.0
  %3558 = vmatprep.subr.mxu0 0.0
  %3559 = vmatpush1.msra.mxu0 0.0
  %3560 = vmatprep.subr.mxu0 0.0
  %3561 = vmatpush1.msra.mxu0 0.0
  %3562 = vmatprep.subr.mxu0 0.0
  %3563 = vmatpush1.msra.mxu0 0.0
  %3564 = vmatprep.subr.mxu0 0.0
  %3565 = vmatpush1.msra.mxu0 0.0
  %3566 = vmatprep.subr.mxu0 0.0
  %3567 = vmatpush1.msra.mxu0 0.0
  %3568 = vmatprep.subr.mxu0 0.0
  %3569 = vmatpush1.msra.mxu0 0.0
  %3570 = vmatprep.subr.mxu0 0.0
  %3571 = vmatpush1.msra.mxu0 0.0
  %3572 = vmatprep.subr.mxu0 0.0
  %3573 = vmatpush1.msra.mxu0 0.0
  %3574 = vmatprep.subr.mxu0 0.0
  %3575 = vmatpush1.msra.mxu0 0.0
  %3576 = vmatprep.subr.mxu0 0.0
  %3577 = vmatpush1.msra.mxu0 0.0
  %3578 = vmatprep.subr.mxu0 0.0
  %3579 = vmatpush1.msra.mxu0 0.0
  %3580 = vmatprep.subr.mxu0 0.0
  %3581 = vmatpush1.msra.mxu0 0.0
  %3582 = vmatprep.subr.mxu0 0.0
  %3583 = vmatpush1.msra.mxu0 0.0
  %3584 = vmatprep.subr.mxu0 0.0
  %3585 = vmatpush1.msra.mxu0 0.0
  %3586 = vmatprep.subr.mxu0 0.0
  %3587 = vmatpush1.msra.mxu0 0.0
  %3588 = vmatprep.mubr.f32.mxu0 0.0
  %3589 = vmatmul.mubr.f32.gmra.mrb[0].mxu0 %v3522
  %v3590 = vpop.f32.mrb[0].mxu0
  %v3591 = vadd.f32 0.0, %v3590
  %v3592 = vpop.f32.mrb[0].mxu0
  %3593 = vdwg.mxu0
  %3594 = vmatprep.subr.mxu0 0.0
  %3595 = vmatpush1.msra.mxu0 %v3021
  %3596 = vmatprep.subr.mxu0 0.0
  %3597 = vmatpush1.msra.mxu0 %v3022
  %3598 = vmatprep.subr.mxu0 0.0
  %3599 = vmatpush1.msra.mxu0 %v3023
  %3600 = vmatprep.subr.mxu0 0.0
  %3601 = vmatpush1.msra.mxu0 %v3024
  %3602 = vmatprep.subr.mxu0 0.0
  %3603 = vmatpush1.msra.mxu0 0.0
  %3604 = vmatprep.subr.mxu0 0.0
  %3605 = vmatpush1.msra.mxu0 0.0
  %3606 = vmatprep.subr.mxu0 0.0
  %3607 = vmatpush1.msra.mxu0 0.0
  %3608 = vmatprep.subr.mxu0 0.0
  %3609 = vmatpush1.msra.mxu0 0.0
  %3610 = vmatprep.subr.mxu0 0.0
  %3611 = vmatpush1.msra.mxu0 0.0
  %3612 = vmatprep.subr.mxu0 0.0
  %3613 = vmatpush1.msra.mxu0 0.0
  %3614 = vmatprep.subr.mxu0 0.0
  %3615 = vmatpush1.msra.mxu0 0.0
  %3616 = vmatprep.subr.mxu0 0.0
  %3617 = vmatpush1.msra.mxu0 0.0
  %3618 = vmatprep.subr.mxu0 0.0
  %3619 = vmatpush1.msra.mxu0 0.0
  %3620 = vmatprep.subr.mxu0 0.0
  %3621 = vmatpush1.msra.mxu0 0.0
  %3622 = vmatprep.subr.mxu0 0.0
  %3623 = vmatpush1.msra.mxu0 0.0
  %3624 = vmatprep.subr.mxu0 0.0
  %3625 = vmatpush1.msra.mxu0 0.0
  %3626 = vmatprep.subr.mxu0 0.0
  %3627 = vmatpush1.msra.mxu0 0.0
  %3628 = vmatprep.subr.mxu0 0.0
  %3629 = vmatpush1.msra.mxu0 0.0
  %3630 = vmatprep.subr.mxu0 0.0
  %3631 = vmatpush1.msra.mxu0 0.0
  %3632 = vmatprep.subr.mxu0 0.0
  %3633 = vmatpush1.msra.mxu0 0.0
  %3634 = vmatprep.subr.mxu0 0.0
  %3635 = vmatpush1.msra.mxu0 0.0
  %3636 = vmatprep.subr.mxu0 0.0
  %3637 = vmatpush1.msra.mxu0 0.0
  %3638 = vmatprep.subr.mxu0 0.0
  %3639 = vmatpush1.msra.mxu0 0.0
  %3640 = vmatprep.subr.mxu0 0.0
  %3641 = vmatpush1.msra.mxu0 0.0
  %3642 = vmatprep.subr.mxu0 0.0
  %3643 = vmatpush1.msra.mxu0 0.0
  %3644 = vmatprep.subr.mxu0 0.0
  %3645 = vmatpush1.msra.mxu0 0.0
  %3646 = vmatprep.subr.mxu0 0.0
  %3647 = vmatpush1.msra.mxu0 0.0
  %3648 = vmatprep.subr.mxu0 0.0
  %3649 = vmatpush1.msra.mxu0 0.0
  %3650 = vmatprep.subr.mxu0 0.0
  %3651 = vmatpush1.msra.mxu0 0.0
  %3652 = vmatprep.subr.mxu0 0.0
  %3653 = vmatpush1.msra.mxu0 0.0
  %3654 = vmatprep.subr.mxu0 0.0
  %3655 = vmatpush1.msra.mxu0 0.0
  %3656 = vmatprep.subr.mxu0 0.0
  %3657 = vmatpush1.msra.mxu0 0.0
  %3658 = vmatprep.mubr.f32.mxu0 0.0
  %3659 = vmatmul.mubr.f32.gmra.mrb[0].mxu0 %v3522
  %v3660 = vpop.f32.mrb[0].mxu0
  %v3661 = vadd.f32 0.0, %v3660
  %v3662 = vpop.f32.mrb[0].mxu0
  %3663 = vdwg.mxu0
  %v3664 = vadd.f32 %v3516, %v3591
  %v3665 = vxor.u32 %v3664, 2147483648
  %v3666 = vmul.f32 %v3665, 1.442695
  %v3667 = vpow.pop %v3666
  %v3668 = vadd.f32 %v3667, 1.0
  %v3669 = vrcp.pop %v3668
  %v3670 = vmul.f32 1.0, %v3669
  %v3671 = vadd.f32 %v3518, %v3661
  %v3672 = vxor.u32 %v3671, 2147483648
  %v3673 = vmul.f32 %v3672, 1.442695
  %v3674 = vpow.pop %v3673
  %v3675 = vadd.f32 %v3674, 1.0
  %v3676 = vrcp.pop %v3675
  %v3677 = vmul.f32 1.0, %v3676
  %3678 = vmatprep.subr.mxu0 0.0
  %3679 = vmatpush1.msra.mxu0 %v3026
  %3680 = vmatprep.subr.mxu0 0.0
  %3681 = vmatpush1.msra.mxu0 %v3027
  %3682 = vmatprep.subr.mxu0 0.0
  %3683 = vmatpush1.msra.mxu0 %v3028
  %3684 = vmatprep.subr.mxu0 0.0
  %3685 = vmatpush1.msra.mxu0 %v3029
  %3686 = vmatprep.subr.mxu0 0.0
  %3687 = vmatpush1.msra.mxu0 0.0
  %3688 = vmatprep.subr.mxu0 0.0
  %3689 = vmatpush1.msra.mxu0 0.0
  %3690 = vmatprep.subr.mxu0 0.0
  %3691 = vmatpush1.msra.mxu0 0.0
  %3692 = vmatprep.subr.mxu0 0.0
  %3693 = vmatpush1.msra.mxu0 0.0
  %3694 = vmatprep.subr.mxu0 0.0
  %3695 = vmatpush1.msra.mxu0 0.0
  %3696 = vmatprep.subr.mxu0 0.0
  %3697 = vmatpush1.msra.mxu0 0.0
  %3698 = vmatprep.subr.mxu0 0.0
  %3699 = vmatpush1.msra.mxu0 0.0
  %3700 = vmatprep.subr.mxu0 0.0
  %3701 = vmatpush1.msra.mxu0 0.0
  %3702 = vmatprep.subr.mxu0 0.0
  %3703 = vmatpush1.msra.mxu0 0.0
  %3704 = vmatprep.subr.mxu0 0.0
  %3705 = vmatpush1.msra.mxu0 0.0
  %3706 = vmatprep.subr.mxu0 0.0
  %3707 = vmatpush1.msra.mxu0 0.0
  %3708 = vmatprep.subr.mxu0 0.0
  %3709 = vmatpush1.msra.mxu0 0.0
  %3710 = vmatprep.subr.mxu0 0.0
  %3711 = vmatpush1.msra.mxu0 0.0
  %3712 = vmatprep.subr.mxu0 0.0
  %3713 = vmatpush1.msra.mxu0 0.0
  %3714 = vmatprep.subr.mxu0 0.0
  %3715 = vmatpush1.msra.mxu0 0.0
  %3716 = vmatprep.subr.mxu0 0.0
  %3717 = vmatpush1.msra.mxu0 0.0
  %3718 = vmatprep.subr.mxu0 0.0
  %3719 = vmatpush1.msra.mxu0 0.0
  %3720 = vmatprep.subr.mxu0 0.0
  %3721 = vmatpush1.msra.mxu0 0.0
  %3722 = vmatprep.subr.mxu0 0.0
  %3723 = vmatpush1.msra.mxu0 0.0
  %3724 = vmatprep.subr.mxu0 0.0
  %3725 = vmatpush1.msra.mxu0 0.0
  %3726 = vmatprep.subr.mxu0 0.0
  %3727 = vmatpush1.msra.mxu0 0.0
  %3728 = vmatprep.subr.mxu0 0.0
  %3729 = vmatpush1.msra.mxu0 0.0
  %3730 = vmatprep.subr.mxu0 0.0
  %3731 = vmatpush1.msra.mxu0 0.0
  %3732 = vmatprep.subr.mxu0 0.0
  %3733 = vmatpush1.msra.mxu0 0.0
  %3734 = vmatprep.subr.mxu0 0.0
  %3735 = vmatpush1.msra.mxu0 0.0
  %3736 = vmatprep.subr.mxu0 0.0
  %3737 = vmatpush1.msra.mxu0 0.0
  %3738 = vmatprep.subr.mxu0 0.0
  %3739 = vmatpush1.msra.mxu0 0.0
  %3740 = vmatprep.subr.mxu0 0.0
  %3741 = vmatpush1.msra.mxu0 0.0
  %3742 = vmatprep.mubr.f32.mxu0 0.0
  %3743 = vmatmul.mubr.f32.gmra.mrb[0].mxu0 %v3522
  %v3744 = vpop.f32.mrb[0].mxu0
  %v3745 = vadd.f32 %v3036, %v3744
  %v3746 = vpop.f32.mrb[0].mxu0
  %3747 = vdwg.mxu0
  %v3748 = vmul.f32 %v3670, %v3745
  %v3749 = vadd.f32 %v3520, %v3748
  %v3750 = vtanh.pop %v3749
  %v3751 = vsub.f32 1.0, %v3677
  %v3752 = vmul.f32 %v3751, %v3750
  %v3753 = vmul.f32 %v3677, %v3514
  %v3754 = vadd.f32 %v3752, %v3753
  %v3755 = vld [vmem:[#allocation3 + $0x18] sm:$0xff]
  %v3756 = vadd.f32 %v3755, %v2847
  %v3757 = vld [vmem:[%s719 + $0x18] sm:$0xff]
  %v3758 = vadd.f32 %v3757, %v2930
  %v3759 = vld [vmem:[%s838 + $0x18] sm:$0xff]
  %v3760 = vadd.f32 %v3759, %v3013
  %v3762 = vsel %vm68, %v3754, 0
  %3764 = vmatprep.subr.mxu0 0.0
  %3765 = vmatpush1.msra.mxu0 %v3016
  %3766 = vmatprep.subr.mxu0 0.0
  %3767 = vmatpush1.msra.mxu0 %v3017
  %3768 = vmatprep.subr.mxu0 0.0
  %3769 = vmatpush1.msra.mxu0 %v3018
  %3770 = vmatprep.subr.mxu0 0.0
  %3771 = vmatpush1.msra.mxu0 %v3019
  %3772 = vmatprep.subr.mxu0 0.0
  %3773 = vmatpush1.msra.mxu0 0.0
  %3774 = vmatprep.subr.mxu0 0.0
  %3775 = vmatpush1.msra.mxu0 0.0
  %3776 = vmatprep.subr.mxu0 0.0
  %3777 = vmatpush1.msra.mxu0 0.0
  %3778 = vmatprep.subr.mxu0 0.0
  %3779 = vmatpush1.msra.mxu0 0.0
  %3780 = vmatprep.subr.mxu0 0.0
  %3781 = vmatpush1.msra.mxu0 0.0
  %3782 = vmatprep.subr.mxu0 0.0
  %3783 = vmatpush1.msra.mxu0 0.0
  %3784 = vmatprep.subr.mxu0 0.0
  %3785 = vmatpush1.msra.mxu0 0.0
  %3786 = vmatprep.subr.mxu0 0.0
  %3787 = vmatpush1.msra.mxu0 0.0
  %3788 = vmatprep.subr.mxu0 0.0
  %3789 = vmatpush1.msra.mxu0 0.0
  %3790 = vmatprep.subr.mxu0 0.0
  %3791 = vmatpush1.msra.mxu0 0.0
  %3792 = vmatprep.subr.mxu0 0.0
  %3793 = vmatpush1.msra.mxu0 0.0
  %3794 = vmatprep.subr.mxu0 0.0
  %3795 = vmatpush1.msra.mxu0 0.0
  %3796 = vmatprep.subr.mxu0 0.0
  %3797 = vmatpush1.msra.mxu0 0.0
  %3798 = vmatprep.subr.mxu0 0.0
  %3799 = vmatpush1.msra.mxu0 0.0
  %3800 = vmatprep.subr.mxu0 0.0
  %3801 = vmatpush1.msra.mxu0 0.0
  %3802 = vmatprep.subr.mxu0 0.0
  %3803 = vmatpush1.msra.mxu0 0.0
  %3804 = vmatprep.subr.mxu0 0.0
  %3805 = vmatpush1.msra.mxu0 0.0
  %3806 = vmatprep.subr.mxu0 0.0
  %3807 = vmatpush1.msra.mxu0 0.0
  %3808 = vmatprep.subr.mxu0 0.0
  %3809 = vmatpush1.msra.mxu0 0.0
  %3810 = vmatprep.subr.mxu0 0.0
  %3811 = vmatpush1.msra.mxu0 0.0
  %3812 = vmatprep.subr.mxu0 0.0
  %3813 = vmatpush1.msra.mxu0 0.0
  %3814 = vmatprep.subr.mxu0 0.0
  %3815 = vmatpush1.msra.mxu0 0.0
  %3816 = vmatprep.subr.mxu0 0.0
  %3817 = vmatpush1.msra.mxu0 0.0
  %3818 = vmatprep.subr.mxu0 0.0
  %3819 = vmatpush1.msra.mxu0 0.0
  %3820 = vmatprep.subr.mxu0 0.0
  %3821 = vmatpush1.msra.mxu0 0.0
  %3822 = vmatprep.subr.mxu0 0.0
  %3823 = vmatpush1.msra.mxu0 0.0
  %3824 = vmatprep.subr.mxu0 0.0
  %3825 = vmatpush1.msra.mxu0 0.0
  %3826 = vmatprep.subr.mxu0 0.0
  %3827 = vmatpush1.msra.mxu0 0.0
  %3828 = vmatprep.mubr.f32.mxu0 0.0
  %3829 = vmatmul.mubr.f32.gmra.mrb[0].mxu0 %v3762
  %v3830 = vpop.f32.mrb[0].mxu0
  %v3831 = vadd.f32 0.0, %v3830
  %v3832 = vpop.f32.mrb[0].mxu0
  %3833 = vdwg.mxu0
  %3834 = vmatprep.subr.mxu0 0.0
  %3835 = vmatpush1.msra.mxu0 %v3021
  %3836 = vmatprep.subr.mxu0 0.0
  %3837 = vmatpush1.msra.mxu0 %v3022
  %3838 = vmatprep.subr.mxu0 0.0
  %3839 = vmatpush1.msra.mxu0 %v3023
  %3840 = vmatprep.subr.mxu0 0.0
  %3841 = vmatpush1.msra.mxu0 %v3024
  %3842 = vmatprep.subr.mxu0 0.0
  %3843 = vmatpush1.msra.mxu0 0.0
  %3844 = vmatprep.subr.mxu0 0.0
  %3845 = vmatpush1.msra.mxu0 0.0
  %3846 = vmatprep.subr.mxu0 0.0
  %3847 = vmatpush1.msra.mxu0 0.0
  %3848 = vmatprep.subr.mxu0 0.0
  %3849 = vmatpush1.msra.mxu0 0.0
  %3850 = vmatprep.subr.mxu0 0.0
  %3851 = vmatpush1.msra.mxu0 0.0
  %3852 = vmatprep.subr.mxu0 0.0
  %3853 = vmatpush1.msra.mxu0 0.0
  %3854 = vmatprep.subr.mxu0 0.0
  %3855 = vmatpush1.msra.mxu0 0.0
  %3856 = vmatprep.subr.mxu0 0.0
  %3857 = vmatpush1.msra.mxu0 0.0
  %3858 = vmatprep.subr.mxu0 0.0
  %3859 = vmatpush1.msra.mxu0 0.0
  %3860 = vmatprep.subr.mxu0 0.0
  %3861 = vmatpush1.msra.mxu0 0.0
  %3862 = vmatprep.subr.mxu0 0.0
  %3863 = vmatpush1.msra.mxu0 0.0
  %3864 = vmatprep.subr.mxu0 0.0
  %3865 = vmatpush1.msra.mxu0 0.0
  %3866 = vmatprep.subr.mxu0 0.0
  %3867 = vmatpush1.msra.mxu0 0.0
  %3868 = vmatprep.subr.mxu0 0.0
  %3869 = vmatpush1.msra.mxu0 0.0
  %3870 = vmatprep.subr.mxu0 0.0
  %3871 = vmatpush1.msra.mxu0 0.0
  %3872 = vmatprep.subr.mxu0 0.0
  %3873 = vmatpush1.msra.mxu0 0.0
  %3874 = vmatprep.subr.mxu0 0.0
  %3875 = vmatpush1.msra.mxu0 0.0
  %3876 = vmatprep.subr.mxu0 0.0
  %3877 = vmatpush1.msra.mxu0 0.0
  %3878 = vmatprep.subr.mxu0 0.0
  %3879 = vmatpush1.msra.mxu0 0.0
  %3880 = vmatprep.subr.mxu0 0.0
  %3881 = vmatpush1.msra.mxu0 0.0
  %3882 = vmatprep.subr.mxu0 0.0
  %3883 = vmatpush1.msra.mxu0 0.0
  %3884 = vmatprep.subr.mxu0 0.0
  %3885 = vmatpush1.msra.mxu0 0.0
  %3886 = vmatprep.subr.mxu0 0.0
  %3887 = vmatpush1.msra.mxu0 0.0
  %3888 = vmatprep.subr.mxu0 0.0
  %3889 = vmatpush1.msra.mxu0 0.0
  %3890 = vmatprep.subr.mxu0 0.0
  %3891 = vmatpush1.msra.mxu0 0.0
  %3892 = vmatprep.subr.mxu0 0.0
  %3893 = vmatpush1.msra.mxu0 0.0
  %3894 = vmatprep.subr.mxu0 0.0
  %3895 = vmatpush1.msra.mxu0 0.0
  %3896 = vmatprep.subr.mxu0 0.0
  %3897 = vmatpush1.msra.mxu0 0.0
  %3898 = vmatprep.mubr.f32.mxu0 0.0
  %3899 = vmatmul.mubr.f32.gmra.mrb[0].mxu0 %v3762
  %v3900 = vpop.f32.mrb[0].mxu0
  %v3901 = vadd.f32 0.0, %v3900
  %v3902 = vpop.f32.mrb[0].mxu0
  %3903 = vdwg.mxu0
  %v3904 = vadd.f32 %v3756, %v3831
  %v3905 = vxor.u32 %v3904, 2147483648
  %v3906 = vmul.f32 %v3905, 1.442695
  %v3907 = vpow.pop %v3906
  %v3908 = vadd.f32 %v3907, 1.0
  %v3909 = vrcp.pop %v3908
  %v3910 = vmul.f32 1.0, %v3909
  %v3911 = vadd.f32 %v3758, %v3901
  %v3912 = vxor.u32 %v3911, 2147483648
  %v3913 = vmul.f32 %v3912, 1.442695
  %v3914 = vpow.pop %v3913
  %v3915 = vadd.f32 %v3914, 1.0
  %v3916 = vrcp.pop %v3915
  %v3917 = vmul.f32 1.0, %v3916
  %3918 = vmatprep.subr.mxu0 0.0
  %3919 = vmatpush1.msra.mxu0 %v3026
  %3920 = vmatprep.subr.mxu0 0.0
  %3921 = vmatpush1.msra.mxu0 %v3027
  %3922 = vmatprep.subr.mxu0 0.0
  %3923 = vmatpush1.msra.mxu0 %v3028
  %3924 = vmatprep.subr.mxu0 0.0
  %3925 = vmatpush1.msra.mxu0 %v3029
  %3926 = vmatprep.subr.mxu0 0.0
  %3927 = vmatpush1.msra.mxu0 0.0
  %3928 = vmatprep.subr.mxu0 0.0
  %3929 = vmatpush1.msra.mxu0 0.0
  %3930 = vmatprep.subr.mxu0 0.0
  %3931 = vmatpush1.msra.mxu0 0.0
  %3932 = vmatprep.subr.mxu0 0.0
  %3933 = vmatpush1.msra.mxu0 0.0
  %3934 = vmatprep.subr.mxu0 0.0
  %3935 = vmatpush1.msra.mxu0 0.0
  %3936 = vmatprep.subr.mxu0 0.0
  %3937 = vmatpush1.msra.mxu0 0.0
  %3938 = vmatprep.subr.mxu0 0.0
  %3939 = vmatpush1.msra.mxu0 0.0
  %3940 = vmatprep.subr.mxu0 0.0
  %3941 = vmatpush1.msra.mxu0 0.0
  %3942 = vmatprep.subr.mxu0 0.0
  %3943 = vmatpush1.msra.mxu0 0.0
  %3944 = vmatprep.subr.mxu0 0.0
  %3945 = vmatpush1.msra.mxu0 0.0
  %3946 = vmatprep.subr.mxu0 0.0
  %3947 = vmatpush1.msra.mxu0 0.0
  %3948 = vmatprep.subr.mxu0 0.0
  %3949 = vmatpush1.msra.mxu0 0.0
  %3950 = vmatprep.subr.mxu0 0.0
  %3951 = vmatpush1.msra.mxu0 0.0
  %3952 = vmatprep.subr.mxu0 0.0
  %3953 = vmatpush1.msra.mxu0 0.0
  %3954 = vmatprep.subr.mxu0 0.0
  %3955 = vmatpush1.msra.mxu0 0.0
  %3956 = vmatprep.subr.mxu0 0.0
  %3957 = vmatpush1.msra.mxu0 0.0
  %3958 = vmatprep.subr.mxu0 0.0
  %3959 = vmatpush1.msra.mxu0 0.0
  %3960 = vmatprep.subr.mxu0 0.0
  %3961 = vmatpush1.msra.mxu0 0.0
  %3962 = vmatprep.subr.mxu0 0.0
  %3963 = vmatpush1.msra.mxu0 0.0
  %3964 = vmatprep.subr.mxu0 0.0
  %3965 = vmatpush1.msra.mxu0 0.0
  %3966 = vmatprep.subr.mxu0 0.0
  %3967 = vmatpush1.msra.mxu0 0.0
  %3968 = vmatprep.subr.mxu0 0.0
  %3969 = vmatpush1.msra.mxu0 0.0
  %3970 = vmatprep.subr.mxu0 0.0
  %3971 = vmatpush1.msra.mxu0 0.0
  %3972 = vmatprep.subr.mxu0 0.0
  %3973 = vmatpush1.msra.mxu0 0.0
  %3974 = vmatprep.subr.mxu0 0.0
  %3975 = vmatpush1.msra.mxu0 0.0
  %3976 = vmatprep.subr.mxu0 0.0
  %3977 = vmatpush1.msra.mxu0 0.0
  %3978 = vmatprep.subr.mxu0 0.0
  %3979 = vmatpush1.msra.mxu0 0.0
  %3980 = vmatprep.subr.mxu0 0.0
  %3981 = vmatpush1.msra.mxu0 0.0
  %3982 = vmatprep.mubr.f32.mxu0 0.0
  %3983 = vmatmul.mubr.f32.gmra.mrb[0].mxu0 %v3762
  %v3984 = vpop.f32.mrb[0].mxu0
  %v3985 = vadd.f32 %v3036, %v3984
  %v3986 = vpop.f32.mrb[0].mxu0
  %3987 = vdwg.mxu0
  %v3988 = vmul.f32 %v3910, %v3985
  %v3989 = vadd.f32 %v3760, %v3988
  %v3990 = vtanh.pop %v3989
  %v3991 = vsub.f32 1.0, %v3917
  %v3992 = vmul.f32 %v3991, %v3990
  %v3993 = vmul.f32 %v3917, %v3754
  %v3994 = vadd.f32 %v3992, %v3993
  %v3995 = vld [vmem:[#allocation3 + $0x20] sm:$0xff]
  %v3996 = vadd.f32 %v3995, %v2847
  %v3997 = vld [vmem:[%s719 + $0x20] sm:$0xff]
  %v3998 = vadd.f32 %v3997, %v2930
  %v3999 = vld [vmem:[%s838 + $0x20] sm:$0xff]
  %v4000 = vadd.f32 %v3999, %v3013
  %v4002 = vsel %vm68, %v3994, 0
  %4004 = vmatprep.subr.mxu0 0.0
  %4005 = vmatpush1.msra.mxu0 %v3016
  %4006 = vmatprep.subr.mxu0 0.0
  %4007 = vmatpush1.msra.mxu0 %v3017
  %4008 = vmatprep.subr.mxu0 0.0
  %4009 = vmatpush1.msra.mxu0 %v3018
  %4010 = vmatprep.subr.mxu0 0.0
  %4011 = vmatpush1.msra.mxu0 %v3019
  %4012 = vmatprep.subr.mxu0 0.0
  %4013 = vmatpush1.msra.mxu0 0.0
  %4014 = vmatprep.subr.mxu0 0.0
  %4015 = vmatpush1.msra.mxu0 0.0
  %4016 = vmatprep.subr.mxu0 0.0
  %4017 = vmatpush1.msra.mxu0 0.0
  %4018 = vmatprep.subr.mxu0 0.0
  %4019 = vmatpush1.msra.mxu0 0.0
  %4020 = vmatprep.subr.mxu0 0.0
  %4021 = vmatpush1.msra.mxu0 0.0
  %4022 = vmatprep.subr.mxu0 0.0
  %4023 = vmatpush1.msra.mxu0 0.0
  %4024 = vmatprep.subr.mxu0 0.0
  %4025 = vmatpush1.msra.mxu0 0.0
  %4026 = vmatprep.subr.mxu0 0.0
  %4027 = vmatpush1.msra.mxu0 0.0
  %4028 = vmatprep.subr.mxu0 0.0
  %4029 = vmatpush1.msra.mxu0 0.0
  %4030 = vmatprep.subr.mxu0 0.0
  %4031 = vmatpush1.msra.mxu0 0.0
  %4032 = vmatprep.subr.mxu0 0.0
  %4033 = vmatpush1.msra.mxu0 0.0
  %4034 = vmatprep.subr.mxu0 0.0
  %4035 = vmatpush1.msra.mxu0 0.0
  %4036 = vmatprep.subr.mxu0 0.0
  %4037 = vmatpush1.msra.mxu0 0.0
  %4038 = vmatprep.subr.mxu0 0.0
  %4039 = vmatpush1.msra.mxu0 0.0
  %4040 = vmatprep.subr.mxu0 0.0
  %4041 = vmatpush1.msra.mxu0 0.0
  %4042 = vmatprep.subr.mxu0 0.0
  %4043 = vmatpush1.msra.mxu0 0.0
  %4044 = vmatprep.subr.mxu0 0.0
  %4045 = vmatpush1.msra.mxu0 0.0
  %4046 = vmatprep.subr.mxu0 0.0
  %4047 = vmatpush1.msra.mxu0 0.0
  %4048 = vmatprep.subr.mxu0 0.0
  %4049 = vmatpush1.msra.mxu0 0.0
  %4050 = vmatprep.subr.mxu0 0.0
  %4051 = vmatpush1.msra.mxu0 0.0
  %4052 = vmatprep.subr.mxu0 0.0
  %4053 = vmatpush1.msra.mxu0 0.0
  %4054 = vmatprep.subr.mxu0 0.0
  %4055 = vmatpush1.msra.mxu0 0.0
  %4056 = vmatprep.subr.mxu0 0.0
  %4057 = vmatpush1.msra.mxu0 0.0
  %4058 = vmatprep.subr.mxu0 0.0
  %4059 = vmatpush1.msra.mxu0 0.0
  %4060 = vmatprep.subr.mxu0 0.0
  %4061 = vmatpush1.msra.mxu0 0.0
  %4062 = vmatprep.subr.mxu0 0.0
  %4063 = vmatpush1.msra.mxu0 0.0
  %4064 = vmatprep.subr.mxu0 0.0
  %4065 = vmatpush1.msra.mxu0 0.0
  %4066 = vmatprep.subr.mxu0 0.0
  %4067 = vmatpush1.msra.mxu0 0.0
  %4068 = vmatprep.mubr.f32.mxu0 0.0
  %4069 = vmatmul.mubr.f32.gmra.mrb[0].mxu0 %v4002
  %v4070 = vpop.f32.mrb[0].mxu0
  %v4071 = vadd.f32 0.0, %v4070
  %v4072 = vpop.f32.mrb[0].mxu0
  %4073 = vdwg.mxu0
  %4074 = vmatprep.subr.mxu0 0.0
  %4075 = vmatpush1.msra.mxu0 %v3021
  %4076 = vmatprep.subr.mxu0 0.0
  %4077 = vmatpush1.msra.mxu0 %v3022
  %4078 = vmatprep.subr.mxu0 0.0
  %4079 = vmatpush1.msra.mxu0 %v3023
  %4080 = vmatprep.subr.mxu0 0.0
  %4081 = vmatpush1.msra.mxu0 %v3024
  %4082 = vmatprep.subr.mxu0 0.0
  %4083 = vmatpush1.msra.mxu0 0.0
  %4084 = vmatprep.subr.mxu0 0.0
  %4085 = vmatpush1.msra.mxu0 0.0
  %4086 = vmatprep.subr.mxu0 0.0
  %4087 = vmatpush1.msra.mxu0 0.0
  %4088 = vmatprep.subr.mxu0 0.0
  %4089 = vmatpush1.msra.mxu0 0.0
  %4090 = vmatprep.subr.mxu0 0.0
  %4091 = vmatpush1.msra.mxu0 0.0
  %4092 = vmatprep.subr.mxu0 0.0
  %4093 = vmatpush1.msra.mxu0 0.0
  %4094 = vmatprep.subr.mxu0 0.0
  %4095 = vmatpush1.msra.mxu0 0.0
  %4096 = vmatprep.subr.mxu0 0.0
  %4097 = vmatpush1.msra.mxu0 0.0
  %4098 = vmatprep.subr.mxu0 0.0
  %4099 = vmatpush1.msra.mxu0 0.0
  %4100 = vmatprep.subr.mxu0 0.0
  %4101 = vmatpush1.msra.mxu0 0.0
  %4102 = vmatprep.subr.mxu0 0.0
  %4103 = vmatpush1.msra.mxu0 0.0
  %4104 = vmatprep.subr.mxu0 0.0
  %4105 = vmatpush1.msra.mxu0 0.0
  %4106 = vmatprep.subr.mxu0 0.0
  %4107 = vmatpush1.msra.mxu0 0.0
  %4108 = vmatprep.subr.mxu0 0.0
  %4109 = vmatpush1.msra.mxu0 0.0
  %4110 = vmatprep.subr.mxu0 0.0
  %4111 = vmatpush1.msra.mxu0 0.0
  %4112 = vmatprep.subr.mxu0 0.0
  %4113 = vmatpush1.msra.mxu0 0.0
  %4114 = vmatprep.subr.mxu0 0.0
  %4115 = vmatpush1.msra.mxu0 0.0
  %4116 = vmatprep.subr.mxu0 0.0
  %4117 = vmatpush1.msra.mxu0 0.0
  %4118 = vmatprep.subr.mxu0 0.0
  %4119 = vmatpush1.msra.mxu0 0.0
  %4120 = vmatprep.subr.mxu0 0.0
  %4121 = vmatpush1.msra.mxu0 0.0
  %4122 = vmatprep.subr.mxu0 0.0
  %4123 = vmatpush1.msra.mxu0 0.0
  %4124 = vmatprep.subr.mxu0 0.0
  %4125 = vmatpush1.msra.mxu0 0.0
  %4126 = vmatprep.subr.mxu0 0.0
  %4127 = vmatpush1.msra.mxu0 0.0
  %4128 = vmatprep.subr.mxu0 0.0
  %4129 = vmatpush1.msra.mxu0 0.0
  %4130 = vmatprep.subr.mxu0 0.0
  %4131 = vmatpush1.msra.mxu0 0.0
  %4132 = vmatprep.subr.mxu0 0.0
  %4133 = vmatpush1.msra.mxu0 0.0
  %4134 = vmatprep.subr.mxu0 0.0
  %4135 = vmatpush1.msra.mxu0 0.0
  %4136 = vmatprep.subr.mxu0 0.0
  %4137 = vmatpush1.msra.mxu0 0.0
  %4138 = vmatprep.mubr.f32.mxu0 0.0
  %4139 = vmatmul.mubr.f32.gmra.mrb[0].mxu0 %v4002
  %v4140 = vpop.f32.mrb[0].mxu0
  %v4141 = vadd.f32 0.0, %v4140
  %v4142 = vpop.f32.mrb[0].mxu0
  %4143 = vdwg.mxu0
  %v4144 = vadd.f32 %v3996, %v4071
  %v4145 = vxor.u32 %v4144, 2147483648
  %v4146 = vmul.f32 %v4145, 1.442695
  %v4147 = vpow.pop %v4146
  %v4148 = vadd.f32 %v4147, 1.0
  %v4149 = vrcp.pop %v4148
  %v4150 = vmul.f32 1.0, %v4149
  %v4151 = vadd.f32 %v3998, %v4141
  %v4152 = vxor.u32 %v4151, 2147483648
  %v4153 = vmul.f32 %v4152, 1.442695
  %v4154 = vpow.pop %v4153
  %v4155 = vadd.f32 %v4154, 1.0
  %v4156 = vrcp.pop %v4155
  %v4157 = vmul.f32 1.0, %v4156
  %4158 = vmatprep.subr.mxu0 0.0
  %4159 = vmatpush1.msra.mxu0 %v3026
  %4160 = vmatprep.subr.mxu0 0.0
  %4161 = vmatpush1.msra.mxu0 %v3027
  %4162 = vmatprep.subr.mxu0 0.0
  %4163 = vmatpush1.msra.mxu0 %v3028
  %4164 = vmatprep.subr.mxu0 0.0
  %4165 = vmatpush1.msra.mxu0 %v3029
  %4166 = vmatprep.subr.mxu0 0.0
  %4167 = vmatpush1.msra.mxu0 0.0
  %4168 = vmatprep.subr.mxu0 0.0
  %4169 = vmatpush1.msra.mxu0 0.0
  %4170 = vmatprep.subr.mxu0 0.0
  %4171 = vmatpush1.msra.mxu0 0.0
  %4172 = vmatprep.subr.mxu0 0.0
  %4173 = vmatpush1.msra.mxu0 0.0
  %4174 = vmatprep.subr.mxu0 0.0
  %4175 = vmatpush1.msra.mxu0 0.0
  %4176 = vmatprep.subr.mxu0 0.0
  %4177 = vmatpush1.msra.mxu0 0.0
  %4178 = vmatprep.subr.mxu0 0.0
  %4179 = vmatpush1.msra.mxu0 0.0
  %4180 = vmatprep.subr.mxu0 0.0
  %4181 = vmatpush1.msra.mxu0 0.0
  %4182 = vmatprep.subr.mxu0 0.0
  %4183 = vmatpush1.msra.mxu0 0.0
  %4184 = vmatprep.subr.mxu0 0.0
  %4185 = vmatpush1.msra.mxu0 0.0
  %4186 = vmatprep.subr.mxu0 0.0
  %4187 = vmatpush1.msra.mxu0 0.0
  %4188 = vmatprep.subr.mxu0 0.0
  %4189 = vmatpush1.msra.mxu0 0.0
  %4190 = vmatprep.subr.mxu0 0.0
  %4191 = vmatpush1.msra.mxu0 0.0
  %4192 = vmatprep.subr.mxu0 0.0
  %4193 = vmatpush1.msra.mxu0 0.0
  %4194 = vmatprep.subr.mxu0 0.0
  %4195 = vmatpush1.msra.mxu0 0.0
  %4196 = vmatprep.subr.mxu0 0.0
  %4197 = vmatpush1.msra.mxu0 0.0
  %4198 = vmatprep.subr.mxu0 0.0
  %4199 = vmatpush1.msra.mxu0 0.0
  %4200 = vmatprep.subr.mxu0 0.0
  %4201 = vmatpush1.msra.mxu0 0.0
  %4202 = vmatprep.subr.mxu0 0.0
  %4203 = vmatpush1.msra.mxu0 0.0
  %4204 = vmatprep.subr.mxu0 0.0
  %4205 = vmatpush1.msra.mxu0 0.0
  %4206 = vmatprep.subr.mxu0 0.0
  %4207 = vmatpush1.msra.mxu0 0.0
  %4208 = vmatprep.subr.mxu0 0.0
  %4209 = vmatpush1.msra.mxu0 0.0
  %4210 = vmatprep.subr.mxu0 0.0
  %4211 = vmatpush1.msra.mxu0 0.0
  %4212 = vmatprep.subr.mxu0 0.0
  %4213 = vmatpush1.msra.mxu0 0.0
  %4214 = vmatprep.subr.mxu0 0.0
  %4215 = vmatpush1.msra.mxu0 0.0
  %4216 = vmatprep.subr.mxu0 0.0
  %4217 = vmatpush1.msra.mxu0 0.0
  %4218 = vmatprep.subr.mxu0 0.0
  %4219 = vmatpush1.msra.mxu0 0.0
  %4220 = vmatprep.subr.mxu0 0.0
  %4221 = vmatpush1.msra.mxu0 0.0
  %4222 = vmatprep.mubr.f32.mxu0 0.0
  %4223 = vmatmul.mubr.f32.gmra.mrb[0].mxu0 %v4002
  %v4224 = vpop.f32.mrb[0].mxu0
  %v4225 = vadd.f32 %v3036, %v4224
  %v4226 = vpop.f32.mrb[0].mxu0
  %4227 = vdwg.mxu0
  %v4228 = vmul.f32 %v4150, %v4225
  %v4229 = vadd.f32 %v4000, %v4228
  %v4230 = vtanh.pop %v4229
  %v4231 = vsub.f32 1.0, %v4157
  %v4232 = vmul.f32 %v4231, %v4230
  %v4233 = vmul.f32 %v4157, %v3994
  %v4234 = vadd.f32 %v4232, %v4233
  %v4235 = vld [vmem:[#allocation3 + $0x28] sm:$0xff]
  %v4236 = vadd.f32 %v4235, %v2847
  %v4237 = vld [vmem:[%s719 + $0x28] sm:$0xff]
  %v4238 = vadd.f32 %v4237, %v2930
  %v4239 = vld [vmem:[%s838 + $0x28] sm:$0xff]
  %v4240 = vadd.f32 %v4239, %v3013
  %v4242 = vsel %vm68, %v4234, 0
  %4244 = vmatprep.subr.mxu0 0.0
  %4245 = vmatpush1.msra.mxu0 %v3016
  %4246 = vmatprep.subr.mxu0 0.0
  %4247 = vmatpush1.msra.mxu0 %v3017
  %4248 = vmatprep.subr.mxu0 0.0
  %4249 = vmatpush1.msra.mxu0 %v3018
  %4250 = vmatprep.subr.mxu0 0.0
  %4251 = vmatpush1.msra.mxu0 %v3019
  %4252 = vmatprep.subr.mxu0 0.0
  %4253 = vmatpush1.msra.mxu0 0.0
  %4254 = vmatprep.subr.mxu0 0.0
  %4255 = vmatpush1.msra.mxu0 0.0
  %4256 = vmatprep.subr.mxu0 0.0
  %4257 = vmatpush1.msra.mxu0 0.0
  %4258 = vmatprep.subr.mxu0 0.0
  %4259 = vmatpush1.msra.mxu0 0.0
  %4260 = vmatprep.subr.mxu0 0.0
  %4261 = vmatpush1.msra.mxu0 0.0
  %4262 = vmatprep.subr.mxu0 0.0
  %4263 = vmatpush1.msra.mxu0 0.0
  %4264 = vmatprep.subr.mxu0 0.0
  %4265 = vmatpush1.msra.mxu0 0.0
  %4266 = vmatprep.subr.mxu0 0.0
  %4267 = vmatpush1.msra.mxu0 0.0
  %4268 = vmatprep.subr.mxu0 0.0
  %4269 = vmatpush1.msra.mxu0 0.0
  %4270 = vmatprep.subr.mxu0 0.0
  %4271 = vmatpush1.msra.mxu0 0.0
  %4272 = vmatprep.subr.mxu0 0.0
  %4273 = vmatpush1.msra.mxu0 0.0
  %4274 = vmatprep.subr.mxu0 0.0
  %4275 = vmatpush1.msra.mxu0 0.0
  %4276 = vmatprep.subr.mxu0 0.0
  %4277 = vmatpush1.msra.mxu0 0.0
  %4278 = vmatprep.subr.mxu0 0.0
  %4279 = vmatpush1.msra.mxu0 0.0
  %4280 = vmatprep.subr.mxu0 0.0
  %4281 = vmatpush1.msra.mxu0 0.0
  %4282 = vmatprep.subr.mxu0 0.0
  %4283 = vmatpush1.msra.mxu0 0.0
  %4284 = vmatprep.subr.mxu0 0.0
  %4285 = vmatpush1.msra.mxu0 0.0
  %4286 = vmatprep.subr.mxu0 0.0
  %4287 = vmatpush1.msra.mxu0 0.0
  %4288 = vmatprep.subr.mxu0 0.0
  %4289 = vmatpush1.msra.mxu0 0.0
  %4290 = vmatprep.subr.mxu0 0.0
  %4291 = vmatpush1.msra.mxu0 0.0
  %4292 = vmatprep.subr.mxu0 0.0
  %4293 = vmatpush1.msra.mxu0 0.0
  %4294 = vmatprep.subr.mxu0 0.0
  %4295 = vmatpush1.msra.mxu0 0.0
  %4296 = vmatprep.subr.mxu0 0.0
  %4297 = vmatpush1.msra.mxu0 0.0
  %4298 = vmatprep.subr.mxu0 0.0
  %4299 = vmatpush1.msra.mxu0 0.0
  %4300 = vmatprep.subr.mxu0 0.0
  %4301 = vmatpush1.msra.mxu0 0.0
  %4302 = vmatprep.subr.mxu0 0.0
  %4303 = vmatpush1.msra.mxu0 0.0
  %4304 = vmatprep.subr.mxu0 0.0
  %4305 = vmatpush1.msra.mxu0 0.0
  %4306 = vmatprep.subr.mxu0 0.0
  %4307 = vmatpush1.msra.mxu0 0.0
  %4308 = vmatprep.mubr.f32.mxu0 0.0
  %4309 = vmatmul.mubr.f32.gmra.mrb[0].mxu0 %v4242
  %v4310 = vpop.f32.mrb[0].mxu0
  %v4311 = vadd.f32 0.0, %v4310
  %v4312 = vpop.f32.mrb[0].mxu0
  %4313 = vdwg.mxu0
  %4314 = vmatprep.subr.mxu0 0.0
  %4315 = vmatpush1.msra.mxu0 %v3021
  %4316 = vmatprep.subr.mxu0 0.0
  %4317 = vmatpush1.msra.mxu0 %v3022
  %4318 = vmatprep.subr.mxu0 0.0
  %4319 = vmatpush1.msra.mxu0 %v3023
  %4320 = vmatprep.subr.mxu0 0.0
  %4321 = vmatpush1.msra.mxu0 %v3024
  %4322 = vmatprep.subr.mxu0 0.0
  %4323 = vmatpush1.msra.mxu0 0.0
  %4324 = vmatprep.subr.mxu0 0.0
  %4325 = vmatpush1.msra.mxu0 0.0
  %4326 = vmatprep.subr.mxu0 0.0
  %4327 = vmatpush1.msra.mxu0 0.0
  %4328 = vmatprep.subr.mxu0 0.0
  %4329 = vmatpush1.msra.mxu0 0.0
  %4330 = vmatprep.subr.mxu0 0.0
  %4331 = vmatpush1.msra.mxu0 0.0
  %4332 = vmatprep.subr.mxu0 0.0
  %4333 = vmatpush1.msra.mxu0 0.0
  %4334 = vmatprep.subr.mxu0 0.0
  %4335 = vmatpush1.msra.mxu0 0.0
  %4336 = vmatprep.subr.mxu0 0.0
  %4337 = vmatpush1.msra.mxu0 0.0
  %4338 = vmatprep.subr.mxu0 0.0
  %4339 = vmatpush1.msra.mxu0 0.0
  %4340 = vmatprep.subr.mxu0 0.0
  %4341 = vmatpush1.msra.mxu0 0.0
  %4342 = vmatprep.subr.mxu0 0.0
  %4343 = vmatpush1.msra.mxu0 0.0
  %4344 = vmatprep.subr.mxu0 0.0
  %4345 = vmatpush1.msra.mxu0 0.0
  %4346 = vmatprep.subr.mxu0 0.0
  %4347 = vmatpush1.msra.mxu0 0.0
  %4348 = vmatprep.subr.mxu0 0.0
  %4349 = vmatpush1.msra.mxu0 0.0
  %4350 = vmatprep.subr.mxu0 0.0
  %4351 = vmatpush1.msra.mxu0 0.0
  %4352 = vmatprep.subr.mxu0 0.0
  %4353 = vmatpush1.msra.mxu0 0.0
  %4354 = vmatprep.subr.mxu0 0.0
  %4355 = vmatpush1.msra.mxu0 0.0
  %4356 = vmatprep.subr.mxu0 0.0
  %4357 = vmatpush1.msra.mxu0 0.0
  %4358 = vmatprep.subr.mxu0 0.0
  %4359 = vmatpush1.msra.mxu0 0.0
  %4360 = vmatprep.subr.mxu0 0.0
  %4361 = vmatpush1.msra.mxu0 0.0
  %4362 = vmatprep.subr.mxu0 0.0
  %4363 = vmatpush1.msra.mxu0 0.0
  %4364 = vmatprep.subr.mxu0 0.0
  %4365 = vmatpush1.msra.mxu0 0.0
  %4366 = vmatprep.subr.mxu0 0.0
  %4367 = vmatpush1.msra.mxu0 0.0
  %4368 = vmatprep.subr.mxu0 0.0
  %4369 = vmatpush1.msra.mxu0 0.0
  %4370 = vmatprep.subr.mxu0 0.0
  %4371 = vmatpush1.msra.mxu0 0.0
  %4372 = vmatprep.subr.mxu0 0.0
  %4373 = vmatpush1.msra.mxu0 0.0
  %4374 = vmatprep.subr.mxu0 0.0
  %4375 = vmatpush1.msra.mxu0 0.0
  %4376 = vmatprep.subr.mxu0 0.0
  %4377 = vmatpush1.msra.mxu0 0.0
  %4378 = vmatprep.mubr.f32.mxu0 0.0
  %4379 = vmatmul.mubr.f32.gmra.mrb[0].mxu0 %v4242
  %v4380 = vpop.f32.mrb[0].mxu0
  %v4381 = vadd.f32 0.0, %v4380
  %v4382 = vpop.f32.mrb[0].mxu0
  %4383 = vdwg.mxu0
  %v4384 = vadd.f32 %v4236, %v4311
  %v4385 = vxor.u32 %v4384, 2147483648
  %v4386 = vmul.f32 %v4385, 1.442695
  %v4387 = vpow.pop %v4386
  %v4388 = vadd.f32 %v4387, 1.0
  %v4389 = vrcp.pop %v4388
  %v4390 = vmul.f32 1.0, %v4389
  %v4391 = vadd.f32 %v4238, %v4381
  %v4392 = vxor.u32 %v4391, 2147483648
  %v4393 = vmul.f32 %v4392, 1.442695
  %v4394 = vpow.pop %v4393
  %v4395 = vadd.f32 %v4394, 1.0
  %v4396 = vrcp.pop %v4395
  %v4397 = vmul.f32 1.0, %v4396
  %4398 = vmatprep.subr.mxu0 0.0
  %4399 = vmatpush1.msra.mxu0 %v3026
  %4400 = vmatprep.subr.mxu0 0.0
  %4401 = vmatpush1.msra.mxu0 %v3027
  %4402 = vmatprep.subr.mxu0 0.0
  %4403 = vmatpush1.msra.mxu0 %v3028
  %4404 = vmatprep.subr.mxu0 0.0
  %4405 = vmatpush1.msra.mxu0 %v3029
  %4406 = vmatprep.subr.mxu0 0.0
  %4407 = vmatpush1.msra.mxu0 0.0
  %4408 = vmatprep.subr.mxu0 0.0
  %4409 = vmatpush1.msra.mxu0 0.0
  %4410 = vmatprep.subr.mxu0 0.0
  %4411 = vmatpush1.msra.mxu0 0.0
  %4412 = vmatprep.subr.mxu0 0.0
  %4413 = vmatpush1.msra.mxu0 0.0
  %4414 = vmatprep.subr.mxu0 0.0
  %4415 = vmatpush1.msra.mxu0 0.0
  %4416 = vmatprep.subr.mxu0 0.0
  %4417 = vmatpush1.msra.mxu0 0.0
  %4418 = vmatprep.subr.mxu0 0.0
  %4419 = vmatpush1.msra.mxu0 0.0
  %4420 = vmatprep.subr.mxu0 0.0
  %4421 = vmatpush1.msra.mxu0 0.0
  %4422 = vmatprep.subr.mxu0 0.0
  %4423 = vmatpush1.msra.mxu0 0.0
  %4424 = vmatprep.subr.mxu0 0.0
  %4425 = vmatpush1.msra.mxu0 0.0
  %4426 = vmatprep.subr.mxu0 0.0
  %4427 = vmatpush1.msra.mxu0 0.0
  %4428 = vmatprep.subr.mxu0 0.0
  %4429 = vmatpush1.msra.mxu0 0.0
  %4430 = vmatprep.subr.mxu0 0.0
  %4431 = vmatpush1.msra.mxu0 0.0
  %4432 = vmatprep.subr.mxu0 0.0
  %4433 = vmatpush1.msra.mxu0 0.0
  %4434 = vmatprep.subr.mxu0 0.0
  %4435 = vmatpush1.msra.mxu0 0.0
  %4436 = vmatprep.subr.mxu0 0.0
  %4437 = vmatpush1.msra.mxu0 0.0
  %4438 = vmatprep.subr.mxu0 0.0
  %4439 = vmatpush1.msra.mxu0 0.0
  %4440 = vmatprep.subr.mxu0 0.0
  %4441 = vmatpush1.msra.mxu0 0.0
  %4442 = vmatprep.subr.mxu0 0.0
  %4443 = vmatpush1.msra.mxu0 0.0
  %4444 = vmatprep.subr.mxu0 0.0
  %4445 = vmatpush1.msra.mxu0 0.0
  %4446 = vmatprep.subr.mxu0 0.0
  %4447 = vmatpush1.msra.mxu0 0.0
  %4448 = vmatprep.subr.mxu0 0.0
  %4449 = vmatpush1.msra.mxu0 0.0
  %4450 = vmatprep.subr.mxu0 0.0
  %4451 = vmatpush1.msra.mxu0 0.0
  %4452 = vmatprep.subr.mxu0 0.0
  %4453 = vmatpush1.msra.mxu0 0.0
  %4454 = vmatprep.subr.mxu0 0.0
  %4455 = vmatpush1.msra.mxu0 0.0
  %4456 = vmatprep.subr.mxu0 0.0
  %4457 = vmatpush1.msra.mxu0 0.0
  %4458 = vmatprep.subr.mxu0 0.0
  %4459 = vmatpush1.msra.mxu0 0.0
  %4460 = vmatprep.subr.mxu0 0.0
  %4461 = vmatpush1.msra.mxu0 0.0
  %4462 = vmatprep.mubr.f32.mxu0 0.0
  %4463 = vmatmul.mubr.f32.gmra.mrb[0].mxu0 %v4242
  %v4464 = vpop.f32.mrb[0].mxu0
  %v4465 = vadd.f32 %v3036, %v4464
  %v4466 = vpop.f32.mrb[0].mxu0
  %4467 = vdwg.mxu0
  %v4468 = vmul.f32 %v4390, %v4465
  %v4469 = vadd.f32 %v4240, %v4468
  %v4470 = vtanh.pop %v4469
  %v4471 = vsub.f32 1.0, %v4397
  %v4472 = vmul.f32 %v4471, %v4470
  %v4473 = vmul.f32 %v4397, %v4234
  %v4474 = vadd.f32 %v4472, %v4473
  %v4475 = vld [vmem:[#allocation3 + $0x30] sm:$0xff]
  %v4476 = vadd.f32 %v4475, %v2847
  %v4477 = vld [vmem:[%s719 + $0x30] sm:$0xff]
  %v4478 = vadd.f32 %v4477, %v2930
  %v4479 = vld [vmem:[%s838 + $0x30] sm:$0xff]
  %v4480 = vadd.f32 %v4479, %v3013
  %v4482 = vsel %vm68, %v4474, 0
  %4484 = vmatprep.subr.mxu0 0.0
  %4485 = vmatpush1.msra.mxu0 %v3016
  %4486 = vmatprep.subr.mxu0 0.0
  %4487 = vmatpush1.msra.mxu0 %v3017
  %4488 = vmatprep.subr.mxu0 0.0
  %4489 = vmatpush1.msra.mxu0 %v3018
  %4490 = vmatprep.subr.mxu0 0.0
  %4491 = vmatpush1.msra.mxu0 %v3019
  %4492 = vmatprep.subr.mxu0 0.0
  %4493 = vmatpush1.msra.mxu0 0.0
  %4494 = vmatprep.subr.mxu0 0.0
  %4495 = vmatpush1.msra.mxu0 0.0
  %4496 = vmatprep.subr.mxu0 0.0
  %4497 = vmatpush1.msra.mxu0 0.0
  %4498 = vmatprep.subr.mxu0 0.0
  %4499 = vmatpush1.msra.mxu0 0.0
  %4500 = vmatprep.subr.mxu0 0.0
  %4501 = vmatpush1.msra.mxu0 0.0
  %4502 = vmatprep.subr.mxu0 0.0
  %4503 = vmatpush1.msra.mxu0 0.0
  %4504 = vmatprep.subr.mxu0 0.0
  %4505 = vmatpush1.msra.mxu0 0.0
  %4506 = vmatprep.subr.mxu0 0.0
  %4507 = vmatpush1.msra.mxu0 0.0
  %4508 = vmatprep.subr.mxu0 0.0
  %4509 = vmatpush1.msra.mxu0 0.0
  %4510 = vmatprep.subr.mxu0 0.0
  %4511 = vmatpush1.msra.mxu0 0.0
  %4512 = vmatprep.subr.mxu0 0.0
  %4513 = vmatpush1.msra.mxu0 0.0
  %4514 = vmatprep.subr.mxu0 0.0
  %4515 = vmatpush1.msra.mxu0 0.0
  %4516 = vmatprep.subr.mxu0 0.0
  %4517 = vmatpush1.msra.mxu0 0.0
  %4518 = vmatprep.subr.mxu0 0.0
  %4519 = vmatpush1.msra.mxu0 0.0
  %4520 = vmatprep.subr.mxu0 0.0
  %4521 = vmatpush1.msra.mxu0 0.0
  %4522 = vmatprep.subr.mxu0 0.0
  %4523 = vmatpush1.msra.mxu0 0.0
  %4524 = vmatprep.subr.mxu0 0.0
  %4525 = vmatpush1.msra.mxu0 0.0
  %4526 = vmatprep.subr.mxu0 0.0
  %4527 = vmatpush1.msra.mxu0 0.0
  %4528 = vmatprep.subr.mxu0 0.0
  %4529 = vmatpush1.msra.mxu0 0.0
  %4530 = vmatprep.subr.mxu0 0.0
  %4531 = vmatpush1.msra.mxu0 0.0
  %4532 = vmatprep.subr.mxu0 0.0
  %4533 = vmatpush1.msra.mxu0 0.0
  %4534 = vmatprep.subr.mxu0 0.0
  %4535 = vmatpush1.msra.mxu0 0.0
  %4536 = vmatprep.subr.mxu0 0.0
  %4537 = vmatpush1.msra.mxu0 0.0
  %4538 = vmatprep.subr.mxu0 0.0
  %4539 = vmatpush1.msra.mxu0 0.0
  %4540 = vmatprep.subr.mxu0 0.0
  %4541 = vmatpush1.msra.mxu0 0.0
  %4542 = vmatprep.subr.mxu0 0.0
  %4543 = vmatpush1.msra.mxu0 0.0
  %4544 = vmatprep.subr.mxu0 0.0
  %4545 = vmatpush1.msra.mxu0 0.0
  %4546 = vmatprep.subr.mxu0 0.0
  %4547 = vmatpush1.msra.mxu0 0.0
  %4548 = vmatprep.mubr.f32.mxu0 0.0
  %4549 = vmatmul.mubr.f32.gmra.mrb[0].mxu0 %v4482
  %v4550 = vpop.f32.mrb[0].mxu0
  %v4551 = vadd.f32 0.0, %v4550
  %v4552 = vpop.f32.mrb[0].mxu0
  %4553 = vdwg.mxu0
  %4554 = vmatprep.subr.mxu0 0.0
  %4555 = vmatpush1.msra.mxu0 %v3021
  %4556 = vmatprep.subr.mxu0 0.0
  %4557 = vmatpush1.msra.mxu0 %v3022
  %4558 = vmatprep.subr.mxu0 0.0
  %4559 = vmatpush1.msra.mxu0 %v3023
  %4560 = vmatprep.subr.mxu0 0.0
  %4561 = vmatpush1.msra.mxu0 %v3024
  %4562 = vmatprep.subr.mxu0 0.0
  %4563 = vmatpush1.msra.mxu0 0.0
  %4564 = vmatprep.subr.mxu0 0.0
  %4565 = vmatpush1.msra.mxu0 0.0
  %4566 = vmatprep.subr.mxu0 0.0
  %4567 = vmatpush1.msra.mxu0 0.0
  %4568 = vmatprep.subr.mxu0 0.0
  %4569 = vmatpush1.msra.mxu0 0.0
  %4570 = vmatprep.subr.mxu0 0.0
  %4571 = vmatpush1.msra.mxu0 0.0
  %4572 = vmatprep.subr.mxu0 0.0
  %4573 = vmatpush1.msra.mxu0 0.0
  %4574 = vmatprep.subr.mxu0 0.0
  %4575 = vmatpush1.msra.mxu0 0.0
  %4576 = vmatprep.subr.mxu0 0.0
  %4577 = vmatpush1.msra.mxu0 0.0
  %4578 = vmatprep.subr.mxu0 0.0
  %4579 = vmatpush1.msra.mxu0 0.0
  %4580 = vmatprep.subr.mxu0 0.0
  %4581 = vmatpush1.msra.mxu0 0.0
  %4582 = vmatprep.subr.mxu0 0.0
  %4583 = vmatpush1.msra.mxu0 0.0
  %4584 = vmatprep.subr.mxu0 0.0
  %4585 = vmatpush1.msra.mxu0 0.0
  %4586 = vmatprep.subr.mxu0 0.0
  %4587 = vmatpush1.msra.mxu0 0.0
  %4588 = vmatprep.subr.mxu0 0.0
  %4589 = vmatpush1.msra.mxu0 0.0
  %4590 = vmatprep.subr.mxu0 0.0
  %4591 = vmatpush1.msra.mxu0 0.0
  %4592 = vmatprep.subr.mxu0 0.0
  %4593 = vmatpush1.msra.mxu0 0.0
  %4594 = vmatprep.subr.mxu0 0.0
  %4595 = vmatpush1.msra.mxu0 0.0
  %4596 = vmatprep.subr.mxu0 0.0
  %4597 = vmatpush1.msra.mxu0 0.0
  %4598 = vmatprep.subr.mxu0 0.0
  %4599 = vmatpush1.msra.mxu0 0.0
  %4600 = vmatprep.subr.mxu0 0.0
  %4601 = vmatpush1.msra.mxu0 0.0
  %4602 = vmatprep.subr.mxu0 0.0
  %4603 = vmatpush1.msra.mxu0 0.0
  %4604 = vmatprep.subr.mxu0 0.0
  %4605 = vmatpush1.msra.mxu0 0.0
  %4606 = vmatprep.subr.mxu0 0.0
  %4607 = vmatpush1.msra.mxu0 0.0
  %4608 = vmatprep.subr.mxu0 0.0
  %4609 = vmatpush1.msra.mxu0 0.0
  %4610 = vmatprep.subr.mxu0 0.0
  %4611 = vmatpush1.msra.mxu0 0.0
  %4612 = vmatprep.subr.mxu0 0.0
  %4613 = vmatpush1.msra.mxu0 0.0
  %4614 = vmatprep.subr.mxu0 0.0
  %4615 = vmatpush1.msra.mxu0 0.0
  %4616 = vmatprep.subr.mxu0 0.0
  %4617 = vmatpush1.msra.mxu0 0.0
  %4618 = vmatprep.mubr.f32.mxu0 0.0
  %4619 = vmatmul.mubr.f32.gmra.mrb[0].mxu0 %v4482
  %v4620 = vpop.f32.mrb[0].mxu0
  %v4621 = vadd.f32 0.0, %v4620
  %v4622 = vpop.f32.mrb[0].mxu0
  %4623 = vdwg.mxu0
  %v4624 = vadd.f32 %v4476, %v4551
  %v4625 = vxor.u32 %v4624, 2147483648
  %v4626 = vmul.f32 %v4625, 1.442695
  %v4627 = vpow.pop %v4626
  %v4628 = vadd.f32 %v4627, 1.0
  %v4629 = vrcp.pop %v4628
  %v4630 = vmul.f32 1.0, %v4629
  %v4631 = vadd.f32 %v4478, %v4621
  %v4632 = vxor.u32 %v4631, 2147483648
  %v4633 = vmul.f32 %v4632, 1.442695
  %v4634 = vpow.pop %v4633
  %v4635 = vadd.f32 %v4634, 1.0
  %v4636 = vrcp.pop %v4635
  %v4637 = vmul.f32 1.0, %v4636
  %4638 = vmatprep.subr.mxu0 0.0
  %4639 = vmatpush1.msra.mxu0 %v3026
  %4640 = vmatprep.subr.mxu0 0.0
  %4641 = vmatpush1.msra.mxu0 %v3027
  %4642 = vmatprep.subr.mxu0 0.0
  %4643 = vmatpush1.msra.mxu0 %v3028
  %4644 = vmatprep.subr.mxu0 0.0
  %4645 = vmatpush1.msra.mxu0 %v3029
  %4646 = vmatprep.subr.mxu0 0.0
  %4647 = vmatpush1.msra.mxu0 0.0
  %4648 = vmatprep.subr.mxu0 0.0
  %4649 = vmatpush1.msra.mxu0 0.0
  %4650 = vmatprep.subr.mxu0 0.0
  %4651 = vmatpush1.msra.mxu0 0.0
  %4652 = vmatprep.subr.mxu0 0.0
  %4653 = vmatpush1.msra.mxu0 0.0
  %4654 = vmatprep.subr.mxu0 0.0
  %4655 = vmatpush1.msra.mxu0 0.0
  %4656 = vmatprep.subr.mxu0 0.0
  %4657 = vmatpush1.msra.mxu0 0.0
  %4658 = vmatprep.subr.mxu0 0.0
  %4659 = vmatpush1.msra.mxu0 0.0
  %4660 = vmatprep.subr.mxu0 0.0
  %4661 = vmatpush1.msra.mxu0 0.0
  %4662 = vmatprep.subr.mxu0 0.0
  %4663 = vmatpush1.msra.mxu0 0.0
  %4664 = vmatprep.subr.mxu0 0.0
  %4665 = vmatpush1.msra.mxu0 0.0
  %4666 = vmatprep.subr.mxu0 0.0
  %4667 = vmatpush1.msra.mxu0 0.0
  %4668 = vmatprep.subr.mxu0 0.0
  %4669 = vmatpush1.msra.mxu0 0.0
  %4670 = vmatprep.subr.mxu0 0.0
  %4671 = vmatpush1.msra.mxu0 0.0
  %4672 = vmatprep.subr.mxu0 0.0
  %4673 = vmatpush1.msra.mxu0 0.0
  %4674 = vmatprep.subr.mxu0 0.0
  %4675 = vmatpush1.msra.mxu0 0.0
  %4676 = vmatprep.subr.mxu0 0.0
  %4677 = vmatpush1.msra.mxu0 0.0
  %4678 = vmatprep.subr.mxu0 0.0
  %4679 = vmatpush1.msra.mxu0 0.0
  %4680 = vmatprep.subr.mxu0 0.0
  %4681 = vmatpush1.msra.mxu0 0.0
  %4682 = vmatprep.subr.mxu0 0.0
  %4683 = vmatpush1.msra.mxu0 0.0
  %4684 = vmatprep.subr.mxu0 0.0
  %4685 = vmatpush1.msra.mxu0 0.0
  %4686 = vmatprep.subr.mxu0 0.0
  %4687 = vmatpush1.msra.mxu0 0.0
  %4688 = vmatprep.subr.mxu0 0.0
  %4689 = vmatpush1.msra.mxu0 0.0
  %4690 = vmatprep.subr.mxu0 0.0
  %4691 = vmatpush1.msra.mxu0 0.0
  %4692 = vmatprep.subr.mxu0 0.0
  %4693 = vmatpush1.msra.mxu0 0.0
  %4694 = vmatprep.subr.mxu0 0.0
  %4695 = vmatpush1.msra.mxu0 0.0
  %4696 = vmatprep.subr.mxu0 0.0
  %4697 = vmatpush1.msra.mxu0 0.0
  %4698 = vmatprep.subr.mxu0 0.0
  %4699 = vmatpush1.msra.mxu0 0.0
  %4700 = vmatprep.subr.mxu0 0.0
  %4701 = vmatpush1.msra.mxu0 0.0
  %4702 = vmatprep.mubr.f32.mxu0 0.0
  %4703 = vmatmul.mubr.f32.gmra.mrb[0].mxu0 %v4482
  %v4704 = vpop.f32.mrb[0].mxu0
  %v4705 = vadd.f32 %v3036, %v4704
  %v4706 = vpop.f32.mrb[0].mxu0
  %4707 = vdwg.mxu0
  %v4708 = vmul.f32 %v4630, %v4705
  %v4709 = vadd.f32 %v4480, %v4708
  %v4710 = vtanh.pop %v4709
  %v4711 = vsub.f32 1.0, %v4637
  %v4712 = vmul.f32 %v4711, %v4710
  %v4713 = vmul.f32 %v4637, %v4474
  %v4714 = vadd.f32 %v4712, %v4713
  %v4715 = vld [vmem:[#allocation3 + $0x38] sm:$0xff]
  %v4716 = vadd.f32 %v4715, %v2847
  %v4717 = vld [vmem:[%s719 + $0x38] sm:$0xff]
  %v4718 = vadd.f32 %v4717, %v2930
  %v4719 = vld [vmem:[%s838 + $0x38] sm:$0xff]
  %v4720 = vadd.f32 %v4719, %v3013
  %v4722 = vsel %vm68, %v4714, 0
  %4724 = vmatprep.subr.mxu0 0.0
  %4725 = vmatpush1.msra.mxu0 %v3016
  %4726 = vmatprep.subr.mxu0 0.0
  %4727 = vmatpush1.msra.mxu0 %v3017
  %4728 = vmatprep.subr.mxu0 0.0
  %4729 = vmatpush1.msra.mxu0 %v3018
  %4730 = vmatprep.subr.mxu0 0.0
  %4731 = vmatpush1.msra.mxu0 %v3019
  %4732 = vmatprep.subr.mxu0 0.0
  %4733 = vmatpush1.msra.mxu0 0.0
  %4734 = vmatprep.subr.mxu0 0.0
  %4735 = vmatpush1.msra.mxu0 0.0
  %4736 = vmatprep.subr.mxu0 0.0
  %4737 = vmatpush1.msra.mxu0 0.0
  %4738 = vmatprep.subr.mxu0 0.0
  %4739 = vmatpush1.msra.mxu0 0.0
  %4740 = vmatprep.subr.mxu0 0.0
  %4741 = vmatpush1.msra.mxu0 0.0
  %4742 = vmatprep.subr.mxu0 0.0
  %4743 = vmatpush1.msra.mxu0 0.0
  %4744 = vmatprep.subr.mxu0 0.0
  %4745 = vmatpush1.msra.mxu0 0.0
  %4746 = vmatprep.subr.mxu0 0.0
  %4747 = vmatpush1.msra.mxu0 0.0
  %4748 = vmatprep.subr.mxu0 0.0
  %4749 = vmatpush1.msra.mxu0 0.0
  %4750 = vmatprep.subr.mxu0 0.0
  %4751 = vmatpush1.msra.mxu0 0.0
  %4752 = vmatprep.subr.mxu0 0.0
  %4753 = vmatpush1.msra.mxu0 0.0
  %4754 = vmatprep.subr.mxu0 0.0
  %4755 = vmatpush1.msra.mxu0 0.0
  %4756 = vmatprep.subr.mxu0 0.0
  %4757 = vmatpush1.msra.mxu0 0.0
  %4758 = vmatprep.subr.mxu0 0.0
  %4759 = vmatpush1.msra.mxu0 0.0
  %4760 = vmatprep.subr.mxu0 0.0
  %4761 = vmatpush1.msra.mxu0 0.0
  %4762 = vmatprep.subr.mxu0 0.0
  %4763 = vmatpush1.msra.mxu0 0.0
  %4764 = vmatprep.subr.mxu0 0.0
  %4765 = vmatpush1.msra.mxu0 0.0
  %4766 = vmatprep.subr.mxu0 0.0
  %4767 = vmatpush1.msra.mxu0 0.0
  %4768 = vmatprep.subr.mxu0 0.0
  %4769 = vmatpush1.msra.mxu0 0.0
  %4770 = vmatprep.subr.mxu0 0.0
  %4771 = vmatpush1.msra.mxu0 0.0
  %4772 = vmatprep.subr.mxu0 0.0
  %4773 = vmatpush1.msra.mxu0 0.0
  %4774 = vmatprep.subr.mxu0 0.0
  %4775 = vmatpush1.msra.mxu0 0.0
  %4776 = vmatprep.subr.mxu0 0.0
  %4777 = vmatpush1.msra.mxu0 0.0
  %4778 = vmatprep.subr.mxu0 0.0
  %4779 = vmatpush1.msra.mxu0 0.0
  %4780 = vmatprep.subr.mxu0 0.0
  %4781 = vmatpush1.msra.mxu0 0.0
  %4782 = vmatprep.subr.mxu0 0.0
  %4783 = vmatpush1.msra.mxu0 0.0
  %4784 = vmatprep.subr.mxu0 0.0
  %4785 = vmatpush1.msra.mxu0 0.0
  %4786 = vmatprep.subr.mxu0 0.0
  %4787 = vmatpush1.msra.mxu0 0.0
  %4788 = vmatprep.mubr.f32.mxu0 0.0
  %4789 = vmatmul.mubr.f32.gmra.mrb[0].mxu0 %v4722
  %v4790 = vpop.f32.mrb[0].mxu0
  %v4791 = vadd.f32 0.0, %v4790
  %v4792 = vpop.f32.mrb[0].mxu0
  %4793 = vdwg.mxu0
  %4794 = vmatprep.subr.mxu0 0.0
  %4795 = vmatpush1.msra.mxu0 %v3021
  %4796 = vmatprep.subr.mxu0 0.0
  %4797 = vmatpush1.msra.mxu0 %v3022
  %4798 = vmatprep.subr.mxu0 0.0
  %4799 = vmatpush1.msra.mxu0 %v3023
  %4800 = vmatprep.subr.mxu0 0.0
  %4801 = vmatpush1.msra.mxu0 %v3024
  %4802 = vmatprep.subr.mxu0 0.0
  %4803 = vmatpush1.msra.mxu0 0.0
  %4804 = vmatprep.subr.mxu0 0.0
  %4805 = vmatpush1.msra.mxu0 0.0
  %4806 = vmatprep.subr.mxu0 0.0
  %4807 = vmatpush1.msra.mxu0 0.0
  %4808 = vmatprep.subr.mxu0 0.0
  %4809 = vmatpush1.msra.mxu0 0.0
  %4810 = vmatprep.subr.mxu0 0.0
  %4811 = vmatpush1.msra.mxu0 0.0
  %4812 = vmatprep.subr.mxu0 0.0
  %4813 = vmatpush1.msra.mxu0 0.0
  %4814 = vmatprep.subr.mxu0 0.0
  %4815 = vmatpush1.msra.mxu0 0.0
  %4816 = vmatprep.subr.mxu0 0.0
  %4817 = vmatpush1.msra.mxu0 0.0
  %4818 = vmatprep.subr.mxu0 0.0
  %4819 = vmatpush1.msra.mxu0 0.0
  %4820 = vmatprep.subr.mxu0 0.0
  %4821 = vmatpush1.msra.mxu0 0.0
  %4822 = vmatprep.subr.mxu0 0.0
  %4823 = vmatpush1.msra.mxu0 0.0
  %4824 = vmatprep.subr.mxu0 0.0
  %4825 = vmatpush1.msra.mxu0 0.0
  %4826 = vmatprep.subr.mxu0 0.0
  %4827 = vmatpush1.msra.mxu0 0.0
  %4828 = vmatprep.subr.mxu0 0.0
  %4829 = vmatpush1.msra.mxu0 0.0
  %4830 = vmatprep.subr.mxu0 0.0
  %4831 = vmatpush1.msra.mxu0 0.0
  %4832 = vmatprep.subr.mxu0 0.0
  %4833 = vmatpush1.msra.mxu0 0.0
  %4834 = vmatprep.subr.mxu0 0.0
  %4835 = vmatpush1.msra.mxu0 0.0
  %4836 = vmatprep.subr.mxu0 0.0
  %4837 = vmatpush1.msra.mxu0 0.0
  %4838 = vmatprep.subr.mxu0 0.0
  %4839 = vmatpush1.msra.mxu0 0.0
  %4840 = vmatprep.subr.mxu0 0.0
  %4841 = vmatpush1.msra.mxu0 0.0
  %4842 = vmatprep.subr.mxu0 0.0
  %4843 = vmatpush1.msra.mxu0 0.0
  %4844 = vmatprep.subr.mxu0 0.0
  %4845 = vmatpush1.msra.mxu0 0.0
  %4846 = vmatprep.subr.mxu0 0.0
  %4847 = vmatpush1.msra.mxu0 0.0
  %4848 = vmatprep.subr.mxu0 0.0
  %4849 = vmatpush1.msra.mxu0 0.0
  %4850 = vmatprep.subr.mxu0 0.0
  %4851 = vmatpush1.msra.mxu0 0.0
  %4852 = vmatprep.subr.mxu0 0.0
  %4853 = vmatpush1.msra.mxu0 0.0
  %4854 = vmatprep.subr.mxu0 0.0
  %4855 = vmatpush1.msra.mxu0 0.0
  %4856 = vmatprep.subr.mxu0 0.0
  %4857 = vmatpush1.msra.mxu0 0.0
  %4858 = vmatprep.mubr.f32.mxu0 0.0
  %4859 = vmatmul.mubr.f32.gmra.mrb[0].mxu0 %v4722
  %v4860 = vpop.f32.mrb[0].mxu0
  %v4861 = vadd.f32 0.0, %v4860
  %v4862 = vpop.f32.mrb[0].mxu0
  %4863 = vdwg.mxu0
  %v4864 = vadd.f32 %v4716, %v4791
  %v4865 = vxor.u32 %v4864, 2147483648
  %v4866 = vmul.f32 %v4865, 1.442695
  %v4867 = vpow.pop %v4866
  %v4868 = vadd.f32 %v4867, 1.0
  %v4869 = vrcp.pop %v4868
  %v4870 = vmul.f32 1.0, %v4869
  %v4871 = vadd.f32 %v4718, %v4861
  %v4872 = vxor.u32 %v4871, 2147483648
  %v4873 = vmul.f32 %v4872, 1.442695
  %v4874 = vpow.pop %v4873
  %v4875 = vadd.f32 %v4874, 1.0
  %v4876 = vrcp.pop %v4875
  %v4877 = vmul.f32 1.0, %v4876
  %4878 = vmatprep.subr.mxu0 0.0
  %4879 = vmatpush1.msra.mxu0 %v3026
  %4880 = vmatprep.subr.mxu0 0.0
  %4881 = vmatpush1.msra.mxu0 %v3027
  %4882 = vmatprep.subr.mxu0 0.0
  %4883 = vmatpush1.msra.mxu0 %v3028
  %4884 = vmatprep.subr.mxu0 0.0
  %4885 = vmatpush1.msra.mxu0 %v3029
  %4886 = vmatprep.subr.mxu0 0.0
  %4887 = vmatpush1.msra.mxu0 0.0
  %4888 = vmatprep.subr.mxu0 0.0
  %4889 = vmatpush1.msra.mxu0 0.0
  %4890 = vmatprep.subr.mxu0 0.0
  %4891 = vmatpush1.msra.mxu0 0.0
  %4892 = vmatprep.subr.mxu0 0.0
  %4893 = vmatpush1.msra.mxu0 0.0
  %4894 = vmatprep.subr.mxu0 0.0
  %4895 = vmatpush1.msra.mxu0 0.0
  %4896 = vmatprep.subr.mxu0 0.0
  %4897 = vmatpush1.msra.mxu0 0.0
  %4898 = vmatprep.subr.mxu0 0.0
  %4899 = vmatpush1.msra.mxu0 0.0
  %4900 = vmatprep.subr.mxu0 0.0
  %4901 = vmatpush1.msra.mxu0 0.0
  %4902 = vmatprep.subr.mxu0 0.0
  %4903 = vmatpush1.msra.mxu0 0.0
  %4904 = vmatprep.subr.mxu0 0.0
  %4905 = vmatpush1.msra.mxu0 0.0
  %4906 = vmatprep.subr.mxu0 0.0
  %4907 = vmatpush1.msra.mxu0 0.0
  %4908 = vmatprep.subr.mxu0 0.0
  %4909 = vmatpush1.msra.mxu0 0.0
  %4910 = vmatprep.subr.mxu0 0.0
  %4911 = vmatpush1.msra.mxu0 0.0
  %4912 = vmatprep.subr.mxu0 0.0
  %4913 = vmatpush1.msra.mxu0 0.0
  %4914 = vmatprep.subr.mxu0 0.0
  %4915 = vmatpush1.msra.mxu0 0.0
  %4916 = vmatprep.subr.mxu0 0.0
  %4917 = vmatpush1.msra.mxu0 0.0
  %4918 = vmatprep.subr.mxu0 0.0
  %4919 = vmatpush1.msra.mxu0 0.0
  %4920 = vmatprep.subr.mxu0 0.0
  %4921 = vmatpush1.msra.mxu0 0.0
  %4922 = vmatprep.subr.mxu0 0.0
  %4923 = vmatpush1.msra.mxu0 0.0
  %4924 = vmatprep.subr.mxu0 0.0
  %4925 = vmatpush1.msra.mxu0 0.0
  %4926 = vmatprep.subr.mxu0 0.0
  %4927 = vmatpush1.msra.mxu0 0.0
  %4928 = vmatprep.subr.mxu0 0.0
  %4929 = vmatpush1.msra.mxu0 0.0
  %4930 = vmatprep.subr.mxu0 0.0
  %4931 = vmatpush1.msra.mxu0 0.0
  %4932 = vmatprep.subr.mxu0 0.0
  %4933 = vmatpush1.msra.mxu0 0.0
  %4934 = vmatprep.subr.mxu0 0.0
  %4935 = vmatpush1.msra.mxu0 0.0
  %4936 = vmatprep.subr.mxu0 0.0
  %4937 = vmatpush1.msra.mxu0 0.0
  %4938 = vmatprep.subr.mxu0 0.0
  %4939 = vmatpush1.msra.mxu0 0.0
  %4940 = vmatprep.subr.mxu0 0.0
  %4941 = vmatpush1.msra.mxu0 0.0
  %4942 = vmatprep.mubr.f32.mxu0 0.0
  %4943 = vmatmul.mubr.f32.gmra.mrb[0].mxu0 %v4722
  %v4944 = vpop.f32.mrb[0].mxu0
  %v4945 = vadd.f32 %v3036, %v4944
  %v4946 = vpop.f32.mrb[0].mxu0
  %4947 = vdwg.mxu0
  %v4948 = vmul.f32 %v4870, %v4945
  %v4949 = vadd.f32 %v4720, %v4948
  %v4950 = vtanh.pop %v4949
  %v4951 = vsub.f32 1.0, %v4877
  %v4952 = vmul.f32 %v4951, %v4950
  %v4953 = vmul.f32 %v4877, %v4714
  %v4954 = vadd.f32 %v4952, %v4953
  %v4955 = vld [vmem:[%s10] sm:$0xff]
  %v4956 = vld [vmem:[%s10 + $0x8] sm:$0xff]
  %v4957 = vld [vmem:[%s10 + $0x10] sm:$0xff]
  %v4958 = vld [vmem:[%s10 + $0x18] sm:$0xff]
  %v4959 = vld [vmem:[%s11] sm:$0x1]
  %v4961 = vlaneseq
  %v4962 = vshrl.u32 %v4961, 7
  %v4963 = vsub.s32 0, %v4962
  %v4964 = vrot.slane %v4959, %v4963
  %v4967 = vsel %vm68, %v4954, 0
  %4969 = vmatprep.subr.mxu0 0.0
  %4970 = vmatpush1.msra.mxu0 %v4955
  %4971 = vmatprep.subr.mxu0 0.0
  %4972 = vmatpush1.msra.mxu0 %v4956
  %4973 = vmatprep.subr.mxu0 0.0
  %4974 = vmatpush1.msra.mxu0 %v4957
  %4975 = vmatprep.subr.mxu0 0.0
  %4976 = vmatpush1.msra.mxu0 %v4958
  %4977 = vmatprep.subr.mxu0 0.0
  %4978 = vmatpush1.msra.mxu0 0.0
  %4979 = vmatprep.subr.mxu0 0.0
  %4980 = vmatpush1.msra.mxu0 0.0
  %4981 = vmatprep.subr.mxu0 0.0
  %4982 = vmatpush1.msra.mxu0 0.0
  %4983 = vmatprep.subr.mxu0 0.0
  %4984 = vmatpush1.msra.mxu0 0.0
  %4985 = vmatprep.subr.mxu0 0.0
  %4986 = vmatpush1.msra.mxu0 0.0
  %4987 = vmatprep.subr.mxu0 0.0
  %4988 = vmatpush1.msra.mxu0 0.0
  %4989 = vmatprep.subr.mxu0 0.0
  %4990 = vmatpush1.msra.mxu0 0.0
  %4991 = vmatprep.subr.mxu0 0.0
  %4992 = vmatpush1.msra.mxu0 0.0
  %4993 = vmatprep.subr.mxu0 0.0
  %4994 = vmatpush1.msra.mxu0 0.0
  %4995 = vmatprep.subr.mxu0 0.0
  %4996 = vmatpush1.msra.mxu0 0.0
  %4997 = vmatprep.subr.mxu0 0.0
  %4998 = vmatpush1.msra.mxu0 0.0
  %4999 = vmatprep.subr.mxu0 0.0
  %5000 = vmatpush1.msra.mxu0 0.0
  %5001 = vmatprep.subr.mxu0 0.0
  %5002 = vmatpush1.msra.mxu0 0.0
  %5003 = vmatprep.subr.mxu0 0.0
  %5004 = vmatpush1.msra.mxu0 0.0
  %5005 = vmatprep.subr.mxu0 0.0
  %5006 = vmatpush1.msra.mxu0 0.0
  %5007 = vmatprep.subr.mxu0 0.0
  %5008 = vmatpush1.msra.mxu0 0.0
  %5009 = vmatprep.subr.mxu0 0.0
  %5010 = vmatpush1.msra.mxu0 0.0
  %5011 = vmatprep.subr.mxu0 0.0
  %5012 = vmatpush1.msra.mxu0 0.0
  %5013 = vmatprep.subr.mxu0 0.0
  %5014 = vmatpush1.msra.mxu0 0.0
  %5015 = vmatprep.subr.mxu0 0.0
  %5016 = vmatpush1.msra.mxu0 0.0
  %5017 = vmatprep.subr.mxu0 0.0
  %5018 = vmatpush1.msra.mxu0 0.0
  %5019 = vmatprep.subr.mxu0 0.0
  %5020 = vmatpush1.msra.mxu0 0.0
  %5021 = vmatprep.subr.mxu0 0.0
  %5022 = vmatpush1.msra.mxu0 0.0
  %5023 = vmatprep.subr.mxu0 0.0
  %5024 = vmatpush1.msra.mxu0 0.0
  %5025 = vmatprep.subr.mxu0 0.0
  %5026 = vmatpush1.msra.mxu0 0.0
  %5027 = vmatprep.subr.mxu0 0.0
  %5028 = vmatpush1.msra.mxu0 0.0
  %5029 = vmatprep.subr.mxu0 0.0
  %5030 = vmatpush1.msra.mxu0 0.0
  %5031 = vmatprep.subr.mxu0 0.0
  %5032 = vmatpush1.msra.mxu0 0.0
  %5033 = vmatprep.mubr.f32.mxu0 0.0
  %5034 = vmatmul.mubr.f32.gmra.mrb[0].mxu0 %v4967
  %v5035 = vpop.f32.mrb[0].mxu0
  %v5036 = vadd.f32 %v4964, %v5035
  %v5037 = vpop.f32.mrb[0].mxu0
  %5038 = vdwg.mxu0
  %v5039 = vld [vmem:[%s12] sm:$0x1]
  %v5041 = vlaneseq
  %v5042 = vshrl.u32 %v5041, 7
  %v5043 = vsub.s32 0, %v5042
  %v5044 = vrot.slane %v5039, %v5043
  %v5046 = vmul.f32 %v5036, %v5044
  %vm5047 = vcmask 130048
  %v5048 = vsel %vm5047, %v5046, 0.0
  %5049 = vadd.xlane.f32.xlu0 %v5048
  %v5050 = vpop.xlane.xlu0 %5049
  %v5051 = vld [vmem:[#allocation4] sm:$0x1]
  %v5053 = vlaneseq
  %v5054 = vshrl.u32 %v5053, 7
  %v5055 = vsub.s32 0, %v5054
  %v5056 = vrot.slane %v5051, %v5055
  %v5058 = vadd.f32 %v5050, %v5056
  %vm5059 = vcmask 7168
  %5060 = vst.msk [vmem:[%s14] sm:$0xff] %vm5059, %v5058
  // Predicated region
  $region58: #{discriminator_forward.1} parent=0 // pred_check
    _
  $region59: #{discriminator_forward.1} parent=0 // pred_check_branch
    %5062 = sbr.rel (0) target = $region61
  $region60: #{discriminator_forward.1} parent=0 // pred_region
    _
  $region61: #{discriminator_forward.1} parent=0 // pred_fallthru
    _
  // Predicated region
  $region62: #{discriminator_forward.1} parent=0 // pred_check
    _
  $region63: #{discriminator_forward.1} parent=0 // pred_check_branch
    %5064 = sbr.rel (0) target = $region65
  $region64: #{discriminator_forward.1} parent=0 // pred_region
    _
  $region65: #{discriminator_forward.1} parent=0 // pred_fallthru
    _

</llo_original>
